<compile_context>
chip_gen: v7x
topology: tpu7x:2x2x1
jax: 0.10.0
libtpu: 0.0.40
codegen_flags: <defaults>
</compile_context>

<pallas_src>
import jax
import jax.numpy as jnp
from jax.experimental import pallas as pl
from jax.experimental.pallas import tpu as pltpu


# ---------------------------------------------------------------------------
# shared math helpers (used both inside the kernel and in the pure-JAX ref)
# ---------------------------------------------------------------------------
def _layernorm(x, g, b, eps=1e-5):
    mu = jnp.mean(x, axis=-1, keepdims=True)
    var = jnp.mean((x - mu) ** 2, axis=-1, keepdims=True)
    return (x - mu) * jax.lax.rsqrt(var + eps) * g + b


# ---------------------------------------------------------------------------
# Pallas kernel: one full decoder layer for one batch element per grid step
# ---------------------------------------------------------------------------
def make_decoder_layer_kernel(num_heads, head_dim):
    H, hd = num_heads, head_dim
    D = H * hd

    def kernel(dec_in_ref, enc_out_ref, dec_mask_ref, cross_mask_ref,
               s_wqkv, s_bqkv, s_wo, s_bo,
               c_wq, c_bq, c_wkv, c_bkv, c_wo, c_bo,
               g1, bb1, g2, bb2, g3, bb3,
               f_w1, f_b1, f_w2, f_b2,
               out_ref):
        x = dec_in_ref[0]                        # (Lq, D)
        enc = enc_out_ref[0]                     # (Lk, D)
        self_mask = dec_mask_ref[0] != 0         # (Lq, Lq) bool, True = masked
        cross_mask = cross_mask_ref[0] != 0      # (Lq, Lk) bool

        def split_heads(t):                      # (L, D) -> (H, L, hd)
            return jnp.stack([t[:, h * hd:(h + 1) * hd] for h in range(H)],
                             axis=0)

        def attend(q, k, v, mask, wo, bo):
            # q: (Lq, D)  (scale already folded into W_Q); k, v: (Lk, D)
            qh, kh, vh = split_heads(q), split_heads(k), split_heads(v)
            # scores: single head-batched matmul -> (H, Lq, Lk)
            s = jnp.einsum('hqe,hke->hqk', qh, kh,
                           preferred_element_type=jnp.float32)
            s = jnp.where(mask[None], -10000.0, s)
            s = s - jnp.max(s, axis=-1, keepdims=True)
            p = jnp.exp(s)
            p = p * pl.reciprocal(jnp.sum(p, axis=-1, keepdims=True),
                                  approx=True)
            # P @ V: single head-batched matmul -> (H, Lq, hd)
            o = jnp.einsum('hqk,hke->hqe', p, vh,
                           preferred_element_type=jnp.float32)
            ctx = jnp.concatenate([o[h] for h in range(H)], axis=-1)  # (Lq, D)
            return jnp.dot(ctx, wo[...],
                           preferred_element_type=jnp.float32) + bo[...]

        # --- masked self attention (fused QKV projection) + norm1 ---
        qkv = jnp.dot(x, s_wqkv[...],
                      preferred_element_type=jnp.float32) + s_bqkv[...]
        ctx = attend(qkv[:, :D], qkv[:, D:2 * D], qkv[:, 2 * D:],
                     self_mask, s_wo, s_bo)
        x1 = _layernorm(x + ctx, g1[...], bb1[...])

        # --- encoder-decoder attention (fused KV projection) + norm2 ---
        q2 = jnp.dot(x1, c_wq[...],
                     preferred_element_type=jnp.float32) + c_bq[...]
        kv = jnp.dot(enc, c_wkv[...],
                     preferred_element_type=jnp.float32) + c_bkv[...]
        ctx2 = attend(q2, kv[:, :D], kv[:, D:], cross_mask, c_wo, c_bo)
        x2 = _layernorm(x1 + ctx2, g2[...], bb2[...])

        # --- position-wise FFN (1x1 conv == per-token linear) + norm3 ---
        hdn = jnp.maximum(
            jnp.dot(x2, f_w1[...],
                    preferred_element_type=jnp.float32) + f_b1[...], 0.0)
        ffn = jnp.dot(hdn, f_w2[...],
                      preferred_element_type=jnp.float32) + f_b2[...]
        out_ref[0] = _layernorm(x2 + ffn, g3[...], bb3[...])

    return kernel


# ---------------------------------------------------------------------------
# wrapper: host-side weight fusion + pallas_call
# ---------------------------------------------------------------------------
def decoder_layer(dec_in, enc_out, dec_mask, dec_enc_mask, weights, num_heads):
    (s_wq, s_wk, s_wv, s_bq, s_bk, s_bv, s_wo, s_bo,
     c_wq, c_wk, c_wv, c_bq, c_bk, c_bv, c_wo, c_bo,
     g1, bb1, g2, bb2, g3, bb3,
     f_w1, f_b1, f_w2, f_b2) = weights
    N, Lq, D = dec_in.shape
    Lk = enc_out.shape[1]
    head_dim = D // num_heads
    scale = 1.0 / (head_dim ** 0.5)

    # Fuse projections and fold the 1/sqrt(d_k) scale into W_Q / b_Q.
    s_wqkv = jnp.concatenate([s_wq * scale, s_wk, s_wv], axis=1)   # (D, 3D)
    s_bqkv = jnp.concatenate([s_bq * scale, s_bk, s_bv], axis=1)   # (1, 3D)
    c_wkv = jnp.concatenate([c_wk, c_wv], axis=1)                  # (D, 2D)
    c_bkv = jnp.concatenate([c_bk, c_bv], axis=1)                  # (1, 2D)
    c_wq_s = c_wq * scale
    c_bq_s = c_bq * scale

    fused_weights = (s_wqkv, s_bqkv, s_wo, s_bo,
                     c_wq_s, c_bq_s, c_wkv, c_bkv, c_wo, c_bo,
                     g1, bb1, g2, bb2, g3, bb3,
                     f_w1, f_b1, f_w2, f_b2)

    kernel = make_decoder_layer_kernel(num_heads, head_dim)

    def batched_spec(shape):
        nd = len(shape)
        return pl.BlockSpec((1,) + tuple(shape[1:]),
                            lambda b, _nd=nd: (b,) + (0,) * (_nd - 1))

    def whole_spec(arr):
        nd = arr.ndim
        return pl.BlockSpec(arr.shape, lambda b, _nd=nd: (0,) * _nd)

    in_specs = ([batched_spec(dec_in.shape),
                 batched_spec(enc_out.shape),
                 batched_spec(dec_mask.shape),
                 batched_spec(dec_enc_mask.shape)]
                + [whole_spec(w) for w in fused_weights])

    return pl.pallas_call(
        kernel,
        out_shape=jax.ShapeDtypeStruct((N, Lq, D), jnp.float32),
        grid_spec=pltpu.PrefetchScalarGridSpec(
            num_scalar_prefetch=0,
            grid=(N,),
            in_specs=in_specs,
            out_specs=pl.BlockSpec((1, Lq, D), lambda b: (b, 0, 0)),
        ),
        compiler_params=pltpu.CompilerParams(
            dimension_semantics=("parallel",)),
    )(dec_in, enc_out, dec_mask, dec_enc_mask, *fused_weights)


# ---------------------------------------------------------------------------
# pure-JAX reference (mirrors the PyTorch module, for correctness cross-check)
# ---------------------------------------------------------------------------
def decoder_layer_ref(dec_in, enc_out, dec_mask, dec_enc_mask, weights,
                      num_heads):
    (s_wq, s_wk, s_wv, s_bq, s_bk, s_bv, s_wo, s_bo,
     c_wq, c_wk, c_wv, c_bq, c_bk, c_bv, c_wo, c_bo,
     g1, bb1, g2, bb2, g3, bb3,
     f_w1, f_b1, f_w2, f_b2) = weights
    N, Lq, D = dec_in.shape
    hd = D // num_heads

    def mha(q_in, kv_in, mask, wq, wk, wv, bq, bk, bv, wo, bo):
        Lq_, Lk_ = q_in.shape[1], kv_in.shape[1]
        q = (q_in @ wq + bq).reshape(N, Lq_, num_heads, hd).transpose(0, 2, 1, 3)
        k = (kv_in @ wk + bk).reshape(N, Lk_, num_heads, hd).transpose(0, 2, 1, 3)
        v = (kv_in @ wv + bv).reshape(N, Lk_, num_heads, hd).transpose(0, 2, 1, 3)
        s = jnp.einsum("nhqd,nhkd->nhqk", q, k) / (hd ** 0.5)
        s = jnp.where(mask[:, None] != 0, -10000.0, s)
        a = jax.nn.softmax(s, axis=-1)
        o = jnp.einsum("nhqk,nhkd->nhqd", a, v).transpose(0, 2, 1, 3)
        o = o.reshape(N, Lq_, D)
        return o @ wo + bo

    ctx = mha(dec_in, dec_in, dec_mask, s_wq, s_wk, s_wv, s_bq, s_bk, s_bv,
              s_wo, s_bo)
    x1 = _layernorm(dec_in + ctx, g1, bb1)
    ctx2 = mha(x1, enc_out, dec_enc_mask, c_wq, c_wk, c_wv, c_bq, c_bk, c_bv,
               c_wo, c_bo)
    x2 = _layernorm(x1 + ctx2, g2, bb2)
    ffn = jnp.maximum(x2 @ f_w1 + f_b1, 0.0) @ f_w2 + f_b2
    return _layernorm(x2 + ffn, g3, bb3)


# ---------------------------------------------------------------------------
# main
# ---------------------------------------------------------------------------
if __name__ == "__main__":
    N, Lq, Lk = 2, 8, 8
    D, H, DFF = 32, 4, 64
    HD = D // H

    key = jax.random.PRNGKey(0)
    ks = list(jax.random.split(key, 24))

    std_attn = (2.0 / (D + HD)) ** 0.5
    bias_bound = 1.0 / (D ** 0.5)

    def lin_w(k, shape, std):
        return (std * jax.random.normal(k, shape)).astype(jnp.float32)

    def lin_b(k, n, bound):
        return jax.random.uniform(k, (1, n), minval=-bound,
                                  maxval=bound).astype(jnp.float32)

    # self-attention params (stored as (in, out))
    s_wq = lin_w(ks[0], (D, D), std_attn); s_bq = lin_b(ks[1], D, bias_bound)
    s_wk = lin_w(ks[2], (D, D), std_attn); s_bk = lin_b(ks[3], D, bias_bound)
    s_wv = lin_w(ks[4], (D, D), std_attn); s_bv = lin_b(ks[5], D, bias_bound)
    s_wo = lin_w(ks[6], (D, D), std_attn); s_bo = lin_b(ks[7], D, bias_bound)
    # cross-attention params
    c_wq = lin_w(ks[8], (D, D), std_attn);  c_bq = lin_b(ks[9], D, bias_bound)
    c_wk = lin_w(ks[10], (D, D), std_attn); c_bk = lin_b(ks[11], D, bias_bound)
    c_wv = lin_w(ks[12], (D, D), std_attn); c_bv = lin_b(ks[13], D, bias_bound)
    c_wo = lin_w(ks[14], (D, D), std_attn); c_bo = lin_b(ks[15], D, bias_bound)
    # layer norms
    g1 = jnp.ones((1, D), jnp.float32);  bb1 = jnp.zeros((1, D), jnp.float32)
    g2 = jnp.ones((1, D), jnp.float32);  bb2 = jnp.zeros((1, D), jnp.float32)
    g3 = jnp.ones((1, D), jnp.float32);  bb3 = jnp.zeros((1, D), jnp.float32)
    # position-wise FFN (Conv1d k=1 -> (in, out) matrices)
    f_w1 = lin_w(ks[16], (D, DFF), (2.0 / D) ** 0.5)
    f_b1 = lin_b(ks[17], DFF, 1.0 / (D ** 0.5))
    f_w2 = lin_w(ks[18], (DFF, D), (2.0 / DFF) ** 0.5)
    f_b2 = lin_b(ks[19], D, 1.0 / (DFF ** 0.5))

    weights = (s_wq, s_wk, s_wv, s_bq, s_bk, s_bv, s_wo, s_bo,
               c_wq, c_wk, c_wv, c_bq, c_bk, c_bv, c_wo, c_bo,
               g1, bb1, g2, bb2, g3, bb3,
               f_w1, f_b1, f_w2, f_b2)

    # inputs
    dec_in = jax.random.normal(ks[20], (N, Lq, D), jnp.float32)
    enc_out = jax.random.normal(ks[21], (N, Lk, D), jnp.float32)
    # causal self-attention mask (True/1 = masked), no cross mask
    causal = jnp.triu(jnp.ones((Lq, Lq), jnp.int32), k=1)
    dec_mask = jnp.broadcast_to(causal, (N, Lq, Lq)).astype(jnp.int32)
    dec_enc_mask = jnp.zeros((N, Lq, Lk), jnp.int32)

    out = decoder_layer(dec_in, enc_out, dec_mask, dec_enc_mask, weights, H)
    out = jax.block_until_ready(out)

    ref = decoder_layer_ref(dec_in, enc_out, dec_mask, dec_enc_mask, weights, H)
    ref = jax.block_until_ready(ref)

    max_err = float(jnp.max(jnp.abs(out - ref)))
    assert out.shape == (N, Lq, D)
    # Tolerance accounts for the approximate EUP reciprocal in the softmax
    # (pl.reciprocal(approx=True)) and host-side scale folding.
    assert max_err < 1e-2, f"mismatch vs reference: {max_err}"
    print("KERNEL_OK")
</pallas_src>

<mosaic_0001>
module attributes {stable_mosaic.version = 11 : i64} {
  func.func @kernel(%arg0: i32, %arg1: memref<1x8x32xf32, #tpu.memory_space<vmem>>, %arg2: memref<1x8x32xf32, #tpu.memory_space<vmem>>, %arg3: memref<1x8x8xi32, #tpu.memory_space<vmem>>, %arg4: memref<1x8x8xi32, #tpu.memory_space<vmem>>, %arg5: memref<32x96xf32, #tpu.memory_space<vmem>>, %arg6: memref<1x96xf32, #tpu.memory_space<vmem>>, %arg7: memref<32x32xf32, #tpu.memory_space<vmem>>, %arg8: memref<1x32xf32, #tpu.memory_space<vmem>>, %arg9: memref<32x32xf32, #tpu.memory_space<vmem>>, %arg10: memref<1x32xf32, #tpu.memory_space<vmem>>, %arg11: memref<32x64xf32, #tpu.memory_space<vmem>>, %arg12: memref<1x64xf32, #tpu.memory_space<vmem>>, %arg13: memref<32x32xf32, #tpu.memory_space<vmem>>, %arg14: memref<1x32xf32, #tpu.memory_space<vmem>>, %arg15: memref<1x32xf32, #tpu.memory_space<vmem>>, %arg16: memref<1x32xf32, #tpu.memory_space<vmem>>, %arg17: memref<1x32xf32, #tpu.memory_space<vmem>>, %arg18: memref<1x32xf32, #tpu.memory_space<vmem>>, %arg19: memref<1x32xf32, #tpu.memory_space<vmem>>, %arg20: memref<1x32xf32, #tpu.memory_space<vmem>>, %arg21: memref<32x64xf32, #tpu.memory_space<vmem>>, %arg22: memref<1x64xf32, #tpu.memory_space<vmem>>, %arg23: memref<64x32xf32, #tpu.memory_space<vmem>>, %arg24: memref<1x32xf32, #tpu.memory_space<vmem>>, %arg25: memref<1x8x32xf32, #tpu.memory_space<vmem>>) attributes {dimension_semantics = [#tpu.dimension_semantics<parallel>], iteration_bounds = array<i64: 2>, scalar_prefetch = 0 : i64, scratch_operands = 0 : i64, tpu.core_type = #tpu.core_type<tc>, window_params = [{transform_indices = @transform_0, window_bounds = array<i64: 1, 8, 32>}, {transform_indices = @transform_1, window_bounds = array<i64: 1, 8, 32>}, {transform_indices = @transform_2, window_bounds = array<i64: 1, 8, 8>}, {transform_indices = @transform_3, window_bounds = array<i64: 1, 8, 8>}, {pipeline_mode = #tpu.pipeline_mode<synchronous>, transform_indices = @transform_4, window_bounds = array<i64: 32, 96>}, {pipeline_mode = #tpu.pipeline_mode<synchronous>, transform_indices = @transform_5, window_bounds = array<i64: 1, 96>}, {pipeline_mode = #tpu.pipeline_mode<synchronous>, transform_indices = @transform_6, window_bounds = array<i64: 32, 32>}, {pipeline_mode = #tpu.pipeline_mode<synchronous>, transform_indices = @transform_7, window_bounds = array<i64: 1, 32>}, {pipeline_mode = #tpu.pipeline_mode<synchronous>, transform_indices = @transform_8, window_bounds = array<i64: 32, 32>}, {pipeline_mode = #tpu.pipeline_mode<synchronous>, transform_indices = @transform_9, window_bounds = array<i64: 1, 32>}, {pipeline_mode = #tpu.pipeline_mode<synchronous>, transform_indices = @transform_10, window_bounds = array<i64: 32, 64>}, {pipeline_mode = #tpu.pipeline_mode<synchronous>, transform_indices = @transform_11, window_bounds = array<i64: 1, 64>}, {pipeline_mode = #tpu.pipeline_mode<synchronous>, transform_indices = @transform_12, window_bounds = array<i64: 32, 32>}, {pipeline_mode = #tpu.pipeline_mode<synchronous>, transform_indices = @transform_13, window_bounds = array<i64: 1, 32>}, {pipeline_mode = #tpu.pipeline_mode<synchronous>, transform_indices = @transform_14, window_bounds = array<i64: 1, 32>}, {pipeline_mode = #tpu.pipeline_mode<synchronous>, transform_indices = @transform_15, window_bounds = array<i64: 1, 32>}, {pipeline_mode = #tpu.pipeline_mode<synchronous>, transform_indices = @transform_16, window_bounds = array<i64: 1, 32>}, {pipeline_mode = #tpu.pipeline_mode<synchronous>, transform_indices = @transform_17, window_bounds = array<i64: 1, 32>}, {pipeline_mode = #tpu.pipeline_mode<synchronous>, transform_indices = @transform_18, window_bounds = array<i64: 1, 32>}, {pipeline_mode = #tpu.pipeline_mode<synchronous>, transform_indices = @transform_19, window_bounds = array<i64: 1, 32>}, {pipeline_mode = #tpu.pipeline_mode<synchronous>, transform_indices = @transform_20, window_bounds = array<i64: 32, 64>}, {pipeline_mode = #tpu.pipeline_mode<synchronous>, transform_indices = @transform_21, window_bounds = array<i64: 1, 64>}, {pipeline_mode = #tpu.pipeline_mode<synchronous>, transform_indices = @transform_22, window_bounds = array<i64: 64, 32>}, {pipeline_mode = #tpu.pipeline_mode<synchronous>, transform_indices = @transform_23, window_bounds = array<i64: 1, 32>}, {transform_indices = @transform_24, window_bounds = array<i64: 1, 8, 32>}]} {
    %c0 = arith.constant 0 : index
    %c0_0 = arith.constant 0 : index
    %c0_1 = arith.constant 0 : index
    %0 = vector.load %arg1[%c0, %c0_0, %c0_1] : memref<1x8x32xf32, #tpu.memory_space<vmem>>, vector<1x8x32xf32>
    %1 = vector.shape_cast %0 : vector<1x8x32xf32> to vector<8x32xf32>
    %c0_2 = arith.constant 0 : index
    %c0_3 = arith.constant 0 : index
    %c0_4 = arith.constant 0 : index
    %2 = vector.load %arg2[%c0_2, %c0_3, %c0_4] : memref<1x8x32xf32, #tpu.memory_space<vmem>>, vector<1x8x32xf32>
    %3 = vector.shape_cast %2 : vector<1x8x32xf32> to vector<8x32xf32>
    %c0_5 = arith.constant 0 : index
    %c0_6 = arith.constant 0 : index
    %c0_7 = arith.constant 0 : index
    %4 = vector.load %arg3[%c0_5, %c0_6, %c0_7] : memref<1x8x8xi32, #tpu.memory_space<vmem>>, vector<1x8x8xi32>
    %5 = vector.shape_cast %4 : vector<1x8x8xi32> to vector<8x8xi32>
    %c0_i32 = arith.constant 0 : i32
    %6 = vector.broadcast %c0_i32 : i32 to vector<8x8xi32>
    %7 = arith.cmpi ne, %5, %6 : vector<8x8xi32>
    %c0_8 = arith.constant 0 : index
    %c0_9 = arith.constant 0 : index
    %c0_10 = arith.constant 0 : index
    %8 = vector.load %arg4[%c0_8, %c0_9, %c0_10] : memref<1x8x8xi32, #tpu.memory_space<vmem>>, vector<1x8x8xi32>
    %9 = vector.shape_cast %8 : vector<1x8x8xi32> to vector<8x8xi32>
    %c0_i32_11 = arith.constant 0 : i32
    %10 = vector.broadcast %c0_i32_11 : i32 to vector<8x8xi32>
    %11 = arith.cmpi ne, %9, %10 : vector<8x8xi32>
    %c0_12 = arith.constant 0 : index
    %c0_13 = arith.constant 0 : index
    %12 = vector.load %arg5[%c0_12, %c0_13] : memref<32x96xf32, #tpu.memory_space<vmem>>, vector<32x96xf32>
    %cst = arith.constant dense<0.000000e+00> : vector<8x96xf32>
    %13 = tpu.matmul %1, %12, %cst {dimension_numbers = #tpu.dot_dimension_numbers<[1], [0], [0], [1], [0, 0, 1, 1], [], []>} : vector<8x32xf32>, vector<32x96xf32>, vector<8x96xf32> -> vector<8x96xf32>
    %c0_14 = arith.constant 0 : index
    %c0_15 = arith.constant 0 : index
    %14 = vector.load %arg6[%c0_14, %c0_15] : memref<1x96xf32, #tpu.memory_space<vmem>>, vector<1x96xf32>
    %15 = vector.broadcast %14 : vector<1x96xf32> to vector<8x96xf32>
    %16 = arith.addf %13, %15 : vector<8x96xf32>
    %17 = vector.extract_strided_slice %16 {offsets = [0, 0], sizes = [8, 32], strides = [1, 1]} : vector<8x96xf32> to vector<8x32xf32>
    %18 = vector.extract_strided_slice %16 {offsets = [0, 32], sizes = [8, 32], strides = [1, 1]} : vector<8x96xf32> to vector<8x32xf32>
    %19 = vector.extract_strided_slice %16 {offsets = [0, 64], sizes = [8, 32], strides = [1, 1]} : vector<8x96xf32> to vector<8x32xf32>
    %20 = vector.extract_strided_slice %17 {offsets = [0, 0], sizes = [8, 8], strides = [1, 1]} : vector<8x32xf32> to vector<8x8xf32>
    %21 = vector.extract_strided_slice %17 {offsets = [0, 8], sizes = [8, 8], strides = [1, 1]} : vector<8x32xf32> to vector<8x8xf32>
    %22 = vector.extract_strided_slice %17 {offsets = [0, 16], sizes = [8, 8], strides = [1, 1]} : vector<8x32xf32> to vector<8x8xf32>
    %23 = vector.extract_strided_slice %17 {offsets = [0, 24], sizes = [8, 8], strides = [1, 1]} : vector<8x32xf32> to vector<8x8xf32>
    %24 = vector.shape_cast %20 : vector<8x8xf32> to vector<1x8x8xf32>
    %25 = vector.shape_cast %21 : vector<8x8xf32> to vector<1x8x8xf32>
    %26 = vector.shape_cast %22 : vector<8x8xf32> to vector<1x8x8xf32>
    %27 = vector.shape_cast %23 : vector<8x8xf32> to vector<1x8x8xf32>
    %28 = tpu.concatenate %24, %25, %26, %27 in 0 : vector<1x8x8xf32>, vector<1x8x8xf32>, vector<1x8x8xf32>, vector<1x8x8xf32> -> vector<4x8x8xf32>
    %29 = vector.extract_strided_slice %18 {offsets = [0, 0], sizes = [8, 8], strides = [1, 1]} : vector<8x32xf32> to vector<8x8xf32>
    %30 = vector.extract_strided_slice %18 {offsets = [0, 8], sizes = [8, 8], strides = [1, 1]} : vector<8x32xf32> to vector<8x8xf32>
    %31 = vector.extract_strided_slice %18 {offsets = [0, 16], sizes = [8, 8], strides = [1, 1]} : vector<8x32xf32> to vector<8x8xf32>
    %32 = vector.extract_strided_slice %18 {offsets = [0, 24], sizes = [8, 8], strides = [1, 1]} : vector<8x32xf32> to vector<8x8xf32>
    %33 = vector.shape_cast %29 : vector<8x8xf32> to vector<1x8x8xf32>
    %34 = vector.shape_cast %30 : vector<8x8xf32> to vector<1x8x8xf32>
    %35 = vector.shape_cast %31 : vector<8x8xf32> to vector<1x8x8xf32>
    %36 = vector.shape_cast %32 : vector<8x8xf32> to vector<1x8x8xf32>
    %37 = tpu.concatenate %33, %34, %35, %36 in 0 : vector<1x8x8xf32>, vector<1x8x8xf32>, vector<1x8x8xf32>, vector<1x8x8xf32> -> vector<4x8x8xf32>
    %38 = vector.extract_strided_slice %19 {offsets = [0, 0], sizes = [8, 8], strides = [1, 1]} : vector<8x32xf32> to vector<8x8xf32>
    %39 = vector.extract_strided_slice %19 {offsets = [0, 8], sizes = [8, 8], strides = [1, 1]} : vector<8x32xf32> to vector<8x8xf32>
    %40 = vector.extract_strided_slice %19 {offsets = [0, 16], sizes = [8, 8], strides = [1, 1]} : vector<8x32xf32> to vector<8x8xf32>
    %41 = vector.extract_strided_slice %19 {offsets = [0, 24], sizes = [8, 8], strides = [1, 1]} : vector<8x32xf32> to vector<8x8xf32>
    %42 = vector.shape_cast %38 : vector<8x8xf32> to vector<1x8x8xf32>
    %43 = vector.shape_cast %39 : vector<8x8xf32> to vector<1x8x8xf32>
    %44 = vector.shape_cast %40 : vector<8x8xf32> to vector<1x8x8xf32>
    %45 = vector.shape_cast %41 : vector<8x8xf32> to vector<1x8x8xf32>
    %46 = tpu.concatenate %42, %43, %44, %45 in 0 : vector<1x8x8xf32>, vector<1x8x8xf32>, vector<1x8x8xf32>, vector<1x8x8xf32> -> vector<4x8x8xf32>
    "tpu.trace_start"() <{level = 10 : i32, message = "hqe,hke->hqk"}> : () -> ()
    %cst_16 = arith.constant dense<0.000000e+00> : vector<4x8x8xf32>
    %47 = tpu.matmul %28, %37, %cst_16 {dimension_numbers = #tpu.dot_dimension_numbers<[2], [2], [1], [1], [0, 0, 0, 1, 1, 1], [0], [0]>} : vector<4x8x8xf32>, vector<4x8x8xf32>, vector<4x8x8xf32> -> vector<4x8x8xf32>
    "tpu.trace_stop"() : () -> ()
    %48 = vector.shape_cast %7 : vector<8x8xi1> to vector<1x8x8xi1>
    %cst_17 = arith.constant -1.000000e+04 : f32
    %49 = vector.shape_cast %48 : vector<1x8x8xi1> to vector<1x8x8xi1>
    %50 = vector.broadcast %49 : vector<1x8x8xi1> to vector<4x8x8xi1>
    %51 = vector.broadcast %cst_17 : f32 to vector<4x8x8xf32>
    %52 = arith.select %50, %51, %47 : vector<4x8x8xi1>, vector<4x8x8xf32>
    %cst_18 = arith.constant dense<0xFF800000> : vector<4x8xf32>
    %53 = vector.multi_reduction <maximumf>, %52, %cst_18 [2] : vector<4x8x8xf32> to vector<4x8xf32>
    %54 = vector.shape_cast %53 : vector<4x8xf32> to vector<4x8x1xf32>
    %55 = vector.broadcast %54 : vector<4x8x1xf32> to vector<4x8x8xf32>
    %56 = arith.subf %52, %55 : vector<4x8x8xf32>
    %57 = math.exp %56 : vector<4x8x8xf32>
    %cst_19 = arith.constant dense<0.000000e+00> : vector<4x8xf32>
    %58 = vector.multi_reduction <add>, %57, %cst_19 [2] : vector<4x8x8xf32> to vector<4x8xf32>
    %59 = vector.shape_cast %58 : vector<4x8xf32> to vector<4x8x1xf32>
    %60 = tpu.reciprocal %59 {approx = true} : vector<4x8x1xf32> -> vector<4x8x1xf32>
    %61 = vector.broadcast %60 : vector<4x8x1xf32> to vector<4x8x8xf32>
    %62 = arith.mulf %57, %61 : vector<4x8x8xf32>
    "tpu.trace_start"() <{level = 10 : i32, message = "hqk,hke->hqe"}> : () -> ()
    %cst_20 = arith.constant dense<0.000000e+00> : vector<4x8x8xf32>
    %63 = tpu.matmul %62, %46, %cst_20 {dimension_numbers = #tpu.dot_dimension_numbers<[2], [1], [1], [2], [0, 0, 0, 1, 1, 2], [0], [0]>} : vector<4x8x8xf32>, vector<4x8x8xf32>, vector<4x8x8xf32> -> vector<4x8x8xf32>
    "tpu.trace_stop"() : () -> ()
    %64 = vector.extract_strided_slice %63 {offsets = [0, 0, 0], sizes = [1, 8, 8], strides = [1, 1, 1]} : vector<4x8x8xf32> to vector<1x8x8xf32>
    %65 = vector.shape_cast %64 : vector<1x8x8xf32> to vector<8x8xf32>
    %66 = vector.extract_strided_slice %63 {offsets = [1, 0, 0], sizes = [1, 8, 8], strides = [1, 1, 1]} : vector<4x8x8xf32> to vector<1x8x8xf32>
    %67 = vector.shape_cast %66 : vector<1x8x8xf32> to vector<8x8xf32>
    %68 = vector.extract_strided_slice %63 {offsets = [2, 0, 0], sizes = [1, 8, 8], strides = [1, 1, 1]} : vector<4x8x8xf32> to vector<1x8x8xf32>
    %69 = vector.shape_cast %68 : vector<1x8x8xf32> to vector<8x8xf32>
    %70 = vector.extract_strided_slice %63 {offsets = [3, 0, 0], sizes = [1, 8, 8], strides = [1, 1, 1]} : vector<4x8x8xf32> to vector<1x8x8xf32>
    %71 = vector.shape_cast %70 : vector<1x8x8xf32> to vector<8x8xf32>
    %72 = tpu.concatenate %65, %67, %69, %71 in 1 : vector<8x8xf32>, vector<8x8xf32>, vector<8x8xf32>, vector<8x8xf32> -> vector<8x32xf32>
    %c0_21 = arith.constant 0 : index
    %c0_22 = arith.constant 0 : index
    %73 = vector.load %arg7[%c0_21, %c0_22] : memref<32x32xf32, #tpu.memory_space<vmem>>, vector<32x32xf32>
    %cst_23 = arith.constant dense<0.000000e+00> : vector<8x32xf32>
    %74 = tpu.matmul %72, %73, %cst_23 {dimension_numbers = #tpu.dot_dimension_numbers<[1], [0], [0], [1], [0, 0, 1, 1], [], []>} : vector<8x32xf32>, vector<32x32xf32>, vector<8x32xf32> -> vector<8x32xf32>
    %c0_24 = arith.constant 0 : index
    %c0_25 = arith.constant 0 : index
    %75 = vector.load %arg8[%c0_24, %c0_25] : memref<1x32xf32, #tpu.memory_space<vmem>>, vector<1x32xf32>
    %76 = vector.broadcast %75 : vector<1x32xf32> to vector<8x32xf32>
    %77 = arith.addf %74, %76 : vector<8x32xf32>
    %78 = arith.addf %1, %77 : vector<8x32xf32>
    %c0_26 = arith.constant 0 : index
    %c0_27 = arith.constant 0 : index
    %79 = vector.load %arg15[%c0_26, %c0_27] : memref<1x32xf32, #tpu.memory_space<vmem>>, vector<1x32xf32>
    %c0_28 = arith.constant 0 : index
    %c0_29 = arith.constant 0 : index
    %80 = vector.load %arg16[%c0_28, %c0_29] : memref<1x32xf32, #tpu.memory_space<vmem>>, vector<1x32xf32>
    %cst_30 = arith.constant dense<0.000000e+00> : vector<8xf32>
    %81 = vector.multi_reduction <add>, %78, %cst_30 [1] : vector<8x32xf32> to vector<8xf32>
    %82 = vector.shape_cast %81 : vector<8xf32> to vector<8x1xf32>
    %cst_31 = arith.constant 3.200000e+01 : f32
    %83 = vector.broadcast %cst_31 : f32 to vector<8x1xf32>
    %84 = arith.divf %82, %83 : vector<8x1xf32>
    %85 = vector.broadcast %84 : vector<8x1xf32> to vector<8x32xf32>
    %86 = arith.subf %78, %85 : vector<8x32xf32>
    %87 = arith.mulf %86, %86 : vector<8x32xf32>
    %cst_32 = arith.constant dense<0.000000e+00> : vector<8xf32>
    %88 = vector.multi_reduction <add>, %87, %cst_32 [1] : vector<8x32xf32> to vector<8xf32>
    %89 = vector.shape_cast %88 : vector<8xf32> to vector<8x1xf32>
    %cst_33 = arith.constant 3.200000e+01 : f32
    %90 = vector.broadcast %cst_33 : f32 to vector<8x1xf32>
    %91 = arith.divf %89, %90 : vector<8x1xf32>
    %92 = vector.broadcast %84 : vector<8x1xf32> to vector<8x32xf32>
    %93 = arith.subf %78, %92 : vector<8x32xf32>
    %cst_34 = arith.constant 9.99999974E-6 : f32
    %94 = vector.broadcast %cst_34 : f32 to vector<8x1xf32>
    %95 = arith.addf %91, %94 : vector<8x1xf32>
    %96 = math.rsqrt %95 : vector<8x1xf32>
    %97 = vector.broadcast %96 : vector<8x1xf32> to vector<8x32xf32>
    %98 = arith.mulf %93, %97 : vector<8x32xf32>
    %99 = vector.broadcast %79 : vector<1x32xf32> to vector<8x32xf32>
    %100 = arith.mulf %98, %99 : vector<8x32xf32>
    %101 = vector.broadcast %80 : vector<1x32xf32> to vector<8x32xf32>
    %102 = arith.addf %100, %101 : vector<8x32xf32>
    %c0_35 = arith.constant 0 : index
    %c0_36 = arith.constant 0 : index
    %103 = vector.load %arg9[%c0_35, %c0_36] : memref<32x32xf32, #tpu.memory_space<vmem>>, vector<32x32xf32>
    %cst_37 = arith.constant dense<0.000000e+00> : vector<8x32xf32>
    %104 = tpu.matmul %102, %103, %cst_37 {dimension_numbers = #tpu.dot_dimension_numbers<[1], [0], [0], [1], [0, 0, 1, 1], [], []>} : vector<8x32xf32>, vector<32x32xf32>, vector<8x32xf32> -> vector<8x32xf32>
    %c0_38 = arith.constant 0 : index
    %c0_39 = arith.constant 0 : index
    %105 = vector.load %arg10[%c0_38, %c0_39] : memref<1x32xf32, #tpu.memory_space<vmem>>, vector<1x32xf32>
    %106 = vector.broadcast %105 : vector<1x32xf32> to vector<8x32xf32>
    %107 = arith.addf %104, %106 : vector<8x32xf32>
    %c0_40 = arith.constant 0 : index
    %c0_41 = arith.constant 0 : index
    %108 = vector.load %arg11[%c0_40, %c0_41] : memref<32x64xf32, #tpu.memory_space<vmem>>, vector<32x64xf32>
    %cst_42 = arith.constant dense<0.000000e+00> : vector<8x64xf32>
    %109 = tpu.matmul %3, %108, %cst_42 {dimension_numbers = #tpu.dot_dimension_numbers<[1], [0], [0], [1], [0, 0, 1, 1], [], []>} : vector<8x32xf32>, vector<32x64xf32>, vector<8x64xf32> -> vector<8x64xf32>
    %c0_43 = arith.constant 0 : index
    %c0_44 = arith.constant 0 : index
    %110 = vector.load %arg12[%c0_43, %c0_44] : memref<1x64xf32, #tpu.memory_space<vmem>>, vector<1x64xf32>
    %111 = vector.broadcast %110 : vector<1x64xf32> to vector<8x64xf32>
    %112 = arith.addf %109, %111 : vector<8x64xf32>
    %113 = vector.extract_strided_slice %112 {offsets = [0, 0], sizes = [8, 32], strides = [1, 1]} : vector<8x64xf32> to vector<8x32xf32>
    %114 = vector.extract_strided_slice %112 {offsets = [0, 32], sizes = [8, 32], strides = [1, 1]} : vector<8x64xf32> to vector<8x32xf32>
    %115 = vector.extract_strided_slice %107 {offsets = [0, 0], sizes = [8, 8], strides = [1, 1]} : vector<8x32xf32> to vector<8x8xf32>
    %116 = vector.extract_strided_slice %107 {offsets = [0, 8], sizes = [8, 8], strides = [1, 1]} : vector<8x32xf32> to vector<8x8xf32>
    %117 = vector.extract_strided_slice %107 {offsets = [0, 16], sizes = [8, 8], strides = [1, 1]} : vector<8x32xf32> to vector<8x8xf32>
    %118 = vector.extract_strided_slice %107 {offsets = [0, 24], sizes = [8, 8], strides = [1, 1]} : vector<8x32xf32> to vector<8x8xf32>
    %119 = vector.shape_cast %115 : vector<8x8xf32> to vector<1x8x8xf32>
    %120 = vector.shape_cast %116 : vector<8x8xf32> to vector<1x8x8xf32>
    %121 = vector.shape_cast %117 : vector<8x8xf32> to vector<1x8x8xf32>
    %122 = vector.shape_cast %118 : vector<8x8xf32> to vector<1x8x8xf32>
    %123 = tpu.concatenate %119, %120, %121, %122 in 0 : vector<1x8x8xf32>, vector<1x8x8xf32>, vector<1x8x8xf32>, vector<1x8x8xf32> -> vector<4x8x8xf32>
    %124 = vector.extract_strided_slice %113 {offsets = [0, 0], sizes = [8, 8], strides = [1, 1]} : vector<8x32xf32> to vector<8x8xf32>
    %125 = vector.extract_strided_slice %113 {offsets = [0, 8], sizes = [8, 8], strides = [1, 1]} : vector<8x32xf32> to vector<8x8xf32>
    %126 = vector.extract_strided_slice %113 {offsets = [0, 16], sizes = [8, 8], strides = [1, 1]} : vector<8x32xf32> to vector<8x8xf32>
    %127 = vector.extract_strided_slice %113 {offsets = [0, 24], sizes = [8, 8], strides = [1, 1]} : vector<8x32xf32> to vector<8x8xf32>
    %128 = vector.shape_cast %124 : vector<8x8xf32> to vector<1x8x8xf32>
    %129 = vector.shape_cast %125 : vector<8x8xf32> to vector<1x8x8xf32>
    %130 = vector.shape_cast %126 : vector<8x8xf32> to vector<1x8x8xf32>
    %131 = vector.shape_cast %127 : vector<8x8xf32> to vector<1x8x8xf32>
    %132 = tpu.concatenate %128, %129, %130, %131 in 0 : vector<1x8x8xf32>, vector<1x8x8xf32>, vector<1x8x8xf32>, vector<1x8x8xf32> -> vector<4x8x8xf32>
    %133 = vector.extract_strided_slice %114 {offsets = [0, 0], sizes = [8, 8], strides = [1, 1]} : vector<8x32xf32> to vector<8x8xf32>
    %134 = vector.extract_strided_slice %114 {offsets = [0, 8], sizes = [8, 8], strides = [1, 1]} : vector<8x32xf32> to vector<8x8xf32>
    %135 = vector.extract_strided_slice %114 {offsets = [0, 16], sizes = [8, 8], strides = [1, 1]} : vector<8x32xf32> to vector<8x8xf32>
    %136 = vector.extract_strided_slice %114 {offsets = [0, 24], sizes = [8, 8], strides = [1, 1]} : vector<8x32xf32> to vector<8x8xf32>
    %137 = vector.shape_cast %133 : vector<8x8xf32> to vector<1x8x8xf32>
    %138 = vector.shape_cast %134 : vector<8x8xf32> to vector<1x8x8xf32>
    %139 = vector.shape_cast %135 : vector<8x8xf32> to vector<1x8x8xf32>
    %140 = vector.shape_cast %136 : vector<8x8xf32> to vector<1x8x8xf32>
    %141 = tpu.concatenate %137, %138, %139, %140 in 0 : vector<1x8x8xf32>, vector<1x8x8xf32>, vector<1x8x8xf32>, vector<1x8x8xf32> -> vector<4x8x8xf32>
    "tpu.trace_start"() <{level = 10 : i32, message = "hqe,hke->hqk"}> : () -> ()
    %cst_45 = arith.constant dense<0.000000e+00> : vector<4x8x8xf32>
    %142 = tpu.matmul %123, %132, %cst_45 {dimension_numbers = #tpu.dot_dimension_numbers<[2], [2], [1], [1], [0, 0, 0, 1, 1, 1], [0], [0]>} : vector<4x8x8xf32>, vector<4x8x8xf32>, vector<4x8x8xf32> -> vector<4x8x8xf32>
    "tpu.trace_stop"() : () -> ()
    %143 = vector.shape_cast %11 : vector<8x8xi1> to vector<1x8x8xi1>
    %cst_46 = arith.constant -1.000000e+04 : f32
    %144 = vector.shape_cast %143 : vector<1x8x8xi1> to vector<1x8x8xi1>
    %145 = vector.broadcast %144 : vector<1x8x8xi1> to vector<4x8x8xi1>
    %146 = vector.broadcast %cst_46 : f32 to vector<4x8x8xf32>
    %147 = arith.select %145, %146, %142 : vector<4x8x8xi1>, vector<4x8x8xf32>
    %cst_47 = arith.constant dense<0xFF800000> : vector<4x8xf32>
    %148 = vector.multi_reduction <maximumf>, %147, %cst_47 [2] : vector<4x8x8xf32> to vector<4x8xf32>
    %149 = vector.shape_cast %148 : vector<4x8xf32> to vector<4x8x1xf32>
    %150 = vector.broadcast %149 : vector<4x8x1xf32> to vector<4x8x8xf32>
    %151 = arith.subf %147, %150 : vector<4x8x8xf32>
    %152 = math.exp %151 : vector<4x8x8xf32>
    %cst_48 = arith.constant dense<0.000000e+00> : vector<4x8xf32>
    %153 = vector.multi_reduction <add>, %152, %cst_48 [2] : vector<4x8x8xf32> to vector<4x8xf32>
    %154 = vector.shape_cast %153 : vector<4x8xf32> to vector<4x8x1xf32>
    %155 = tpu.reciprocal %154 {approx = true} : vector<4x8x1xf32> -> vector<4x8x1xf32>
    %156 = vector.broadcast %155 : vector<4x8x1xf32> to vector<4x8x8xf32>
    %157 = arith.mulf %152, %156 : vector<4x8x8xf32>
    "tpu.trace_start"() <{level = 10 : i32, message = "hqk,hke->hqe"}> : () -> ()
    %cst_49 = arith.constant dense<0.000000e+00> : vector<4x8x8xf32>
    %158 = tpu.matmul %157, %141, %cst_49 {dimension_numbers = #tpu.dot_dimension_numbers<[2], [1], [1], [2], [0, 0, 0, 1, 1, 2], [0], [0]>} : vector<4x8x8xf32>, vector<4x8x8xf32>, vector<4x8x8xf32> -> vector<4x8x8xf32>
    "tpu.trace_stop"() : () -> ()
    %159 = vector.extract_strided_slice %158 {offsets = [0, 0, 0], sizes = [1, 8, 8], strides = [1, 1, 1]} : vector<4x8x8xf32> to vector<1x8x8xf32>
    %160 = vector.shape_cast %159 : vector<1x8x8xf32> to vector<8x8xf32>
    %161 = vector.extract_strided_slice %158 {offsets = [1, 0, 0], sizes = [1, 8, 8], strides = [1, 1, 1]} : vector<4x8x8xf32> to vector<1x8x8xf32>
    %162 = vector.shape_cast %161 : vector<1x8x8xf32> to vector<8x8xf32>
    %163 = vector.extract_strided_slice %158 {offsets = [2, 0, 0], sizes = [1, 8, 8], strides = [1, 1, 1]} : vector<4x8x8xf32> to vector<1x8x8xf32>
    %164 = vector.shape_cast %163 : vector<1x8x8xf32> to vector<8x8xf32>
    %165 = vector.extract_strided_slice %158 {offsets = [3, 0, 0], sizes = [1, 8, 8], strides = [1, 1, 1]} : vector<4x8x8xf32> to vector<1x8x8xf32>
    %166 = vector.shape_cast %165 : vector<1x8x8xf32> to vector<8x8xf32>
    %167 = tpu.concatenate %160, %162, %164, %166 in 1 : vector<8x8xf32>, vector<8x8xf32>, vector<8x8xf32>, vector<8x8xf32> -> vector<8x32xf32>
    %c0_50 = arith.constant 0 : index
    %c0_51 = arith.constant 0 : index
    %168 = vector.load %arg13[%c0_50, %c0_51] : memref<32x32xf32, #tpu.memory_space<vmem>>, vector<32x32xf32>
    %cst_52 = arith.constant dense<0.000000e+00> : vector<8x32xf32>
    %169 = tpu.matmul %167, %168, %cst_52 {dimension_numbers = #tpu.dot_dimension_numbers<[1], [0], [0], [1], [0, 0, 1, 1], [], []>} : vector<8x32xf32>, vector<32x32xf32>, vector<8x32xf32> -> vector<8x32xf32>
    %c0_53 = arith.constant 0 : index
    %c0_54 = arith.constant 0 : index
    %170 = vector.load %arg14[%c0_53, %c0_54] : memref<1x32xf32, #tpu.memory_space<vmem>>, vector<1x32xf32>
    %171 = vector.broadcast %170 : vector<1x32xf32> to vector<8x32xf32>
    %172 = arith.addf %169, %171 : vector<8x32xf32>
    %173 = arith.addf %102, %172 : vector<8x32xf32>
    %c0_55 = arith.constant 0 : index
    %c0_56 = arith.constant 0 : index
    %174 = vector.load %arg17[%c0_55, %c0_56] : memref<1x32xf32, #tpu.memory_space<vmem>>, vector<1x32xf32>
    %c0_57 = arith.constant 0 : index
    %c0_58 = arith.constant 0 : index
    %175 = vector.load %arg18[%c0_57, %c0_58] : memref<1x32xf32, #tpu.memory_space<vmem>>, vector<1x32xf32>
    %cst_59 = arith.constant dense<0.000000e+00> : vector<8xf32>
    %176 = vector.multi_reduction <add>, %173, %cst_59 [1] : vector<8x32xf32> to vector<8xf32>
    %177 = vector.shape_cast %176 : vector<8xf32> to vector<8x1xf32>
    %cst_60 = arith.constant 3.200000e+01 : f32
    %178 = vector.broadcast %cst_60 : f32 to vector<8x1xf32>
    %179 = arith.divf %177, %178 : vector<8x1xf32>
    %180 = vector.broadcast %179 : vector<8x1xf32> to vector<8x32xf32>
    %181 = arith.subf %173, %180 : vector<8x32xf32>
    %182 = arith.mulf %181, %181 : vector<8x32xf32>
    %cst_61 = arith.constant dense<0.000000e+00> : vector<8xf32>
    %183 = vector.multi_reduction <add>, %182, %cst_61 [1] : vector<8x32xf32> to vector<8xf32>
    %184 = vector.shape_cast %183 : vector<8xf32> to vector<8x1xf32>
    %cst_62 = arith.constant 3.200000e+01 : f32
    %185 = vector.broadcast %cst_62 : f32 to vector<8x1xf32>
    %186 = arith.divf %184, %185 : vector<8x1xf32>
    %187 = vector.broadcast %179 : vector<8x1xf32> to vector<8x32xf32>
    %188 = arith.subf %173, %187 : vector<8x32xf32>
    %cst_63 = arith.constant 9.99999974E-6 : f32
    %189 = vector.broadcast %cst_63 : f32 to vector<8x1xf32>
    %190 = arith.addf %186, %189 : vector<8x1xf32>
    %191 = math.rsqrt %190 : vector<8x1xf32>
    %192 = vector.broadcast %191 : vector<8x1xf32> to vector<8x32xf32>
    %193 = arith.mulf %188, %192 : vector<8x32xf32>
    %194 = vector.broadcast %174 : vector<1x32xf32> to vector<8x32xf32>
    %195 = arith.mulf %193, %194 : vector<8x32xf32>
    %196 = vector.broadcast %175 : vector<1x32xf32> to vector<8x32xf32>
    %197 = arith.addf %195, %196 : vector<8x32xf32>
    %c0_64 = arith.constant 0 : index
    %c0_65 = arith.constant 0 : index
    %198 = vector.load %arg21[%c0_64, %c0_65] : memref<32x64xf32, #tpu.memory_space<vmem>>, vector<32x64xf32>
    %cst_66 = arith.constant dense<0.000000e+00> : vector<8x64xf32>
    %199 = tpu.matmul %197, %198, %cst_66 {dimension_numbers = #tpu.dot_dimension_numbers<[1], [0], [0], [1], [0, 0, 1, 1], [], []>} : vector<8x32xf32>, vector<32x64xf32>, vector<8x64xf32> -> vector<8x64xf32>
    %c0_67 = arith.constant 0 : index
    %c0_68 = arith.constant 0 : index
    %200 = vector.load %arg22[%c0_67, %c0_68] : memref<1x64xf32, #tpu.memory_space<vmem>>, vector<1x64xf32>
    %201 = vector.broadcast %200 : vector<1x64xf32> to vector<8x64xf32>
    %202 = arith.addf %199, %201 : vector<8x64xf32>
    %cst_69 = arith.constant 0.000000e+00 : f32
    %203 = vector.broadcast %cst_69 : f32 to vector<8x64xf32>
    %204 = arith.maximumf %202, %203 : vector<8x64xf32>
    %c0_70 = arith.constant 0 : index
    %c0_71 = arith.constant 0 : index
    %205 = vector.load %arg23[%c0_70, %c0_71] : memref<64x32xf32, #tpu.memory_space<vmem>>, vector<64x32xf32>
    %cst_72 = arith.constant dense<0.000000e+00> : vector<8x32xf32>
    %206 = tpu.matmul %204, %205, %cst_72 {dimension_numbers = #tpu.dot_dimension_numbers<[1], [0], [0], [1], [0, 0, 1, 1], [], []>} : vector<8x64xf32>, vector<64x32xf32>, vector<8x32xf32> -> vector<8x32xf32>
    %c0_73 = arith.constant 0 : index
    %c0_74 = arith.constant 0 : index
    %207 = vector.load %arg24[%c0_73, %c0_74] : memref<1x32xf32, #tpu.memory_space<vmem>>, vector<1x32xf32>
    %208 = vector.broadcast %207 : vector<1x32xf32> to vector<8x32xf32>
    %209 = arith.addf %206, %208 : vector<8x32xf32>
    %210 = arith.addf %197, %209 : vector<8x32xf32>
    %c0_75 = arith.constant 0 : index
    %c0_76 = arith.constant 0 : index
    %211 = vector.load %arg19[%c0_75, %c0_76] : memref<1x32xf32, #tpu.memory_space<vmem>>, vector<1x32xf32>
    %c0_77 = arith.constant 0 : index
    %c0_78 = arith.constant 0 : index
    %212 = vector.load %arg20[%c0_77, %c0_78] : memref<1x32xf32, #tpu.memory_space<vmem>>, vector<1x32xf32>
    %cst_79 = arith.constant dense<0.000000e+00> : vector<8xf32>
    %213 = vector.multi_reduction <add>, %210, %cst_79 [1] : vector<8x32xf32> to vector<8xf32>
    %214 = vector.shape_cast %213 : vector<8xf32> to vector<8x1xf32>
    %cst_80 = arith.constant 3.200000e+01 : f32
    %215 = vector.broadcast %cst_80 : f32 to vector<8x1xf32>
    %216 = arith.divf %214, %215 : vector<8x1xf32>
    %217 = vector.broadcast %216 : vector<8x1xf32> to vector<8x32xf32>
    %218 = arith.subf %210, %217 : vector<8x32xf32>
    %219 = arith.mulf %218, %218 : vector<8x32xf32>
    %cst_81 = arith.constant dense<0.000000e+00> : vector<8xf32>
    %220 = vector.multi_reduction <add>, %219, %cst_81 [1] : vector<8x32xf32> to vector<8xf32>
    %221 = vector.shape_cast %220 : vector<8xf32> to vector<8x1xf32>
    %cst_82 = arith.constant 3.200000e+01 : f32
    %222 = vector.broadcast %cst_82 : f32 to vector<8x1xf32>
    %223 = arith.divf %221, %222 : vector<8x1xf32>
    %224 = vector.broadcast %216 : vector<8x1xf32> to vector<8x32xf32>
    %225 = arith.subf %210, %224 : vector<8x32xf32>
    %cst_83 = arith.constant 9.99999974E-6 : f32
    %226 = vector.broadcast %cst_83 : f32 to vector<8x1xf32>
    %227 = arith.addf %223, %226 : vector<8x1xf32>
    %228 = math.rsqrt %227 : vector<8x1xf32>
    %229 = vector.broadcast %228 : vector<8x1xf32> to vector<8x32xf32>
    %230 = arith.mulf %225, %229 : vector<8x32xf32>
    %231 = vector.broadcast %211 : vector<1x32xf32> to vector<8x32xf32>
    %232 = arith.mulf %230, %231 : vector<8x32xf32>
    %233 = vector.broadcast %212 : vector<1x32xf32> to vector<8x32xf32>
    %234 = arith.addf %232, %233 : vector<8x32xf32>
    %c0_84 = arith.constant 0 : index
    %c0_85 = arith.constant 0 : index
    %c0_86 = arith.constant 0 : index
    %235 = vector.load %arg25[%c0_84, %c0_85, %c0_86] : memref<1x8x32xf32, #tpu.memory_space<vmem>>, vector<1x8x32xf32>
    %236 = vector.shape_cast %235 : vector<1x8x32xf32> to vector<8x32xf32>
    %237 = vector.shape_cast %234 : vector<8x32xf32> to vector<1x8x32xf32>
    tpu.vector_store %arg25[%c0_84, %c0_85, %c0_86], %237 {strides = array<i32>} : memref<1x8x32xf32, #tpu.memory_space<vmem>>, vector<1x8x32xf32>,
    return
  }
  func.func @transform_0(%arg0: i32) -> (i32, i32, i32) {
    %c0_i32 = arith.constant 0 : i32
    %c0_i32_0 = arith.constant 0 : i32
    %c0_i32_1 = arith.constant 0 : i32
    return %arg0, %c0_i32, %c0_i32_0 : i32, i32, i32
  }
  func.func @transform_1(%arg0: i32) -> (i32, i32, i32) {
    %c0_i32 = arith.constant 0 : i32
    %c0_i32_0 = arith.constant 0 : i32
    %c0_i32_1 = arith.constant 0 : i32
    return %arg0, %c0_i32, %c0_i32_0 : i32, i32, i32
  }
  func.func @transform_2(%arg0: i32) -> (i32, i32, i32) {
    %c0_i32 = arith.constant 0 : i32
    %c0_i32_0 = arith.constant 0 : i32
    %c0_i32_1 = arith.constant 0 : i32
    return %arg0, %c0_i32, %c0_i32_0 : i32, i32, i32
  }
  func.func @transform_3(%arg0: i32) -> (i32, i32, i32) {
    %c0_i32 = arith.constant 0 : i32
    %c0_i32_0 = arith.constant 0 : i32
    %c0_i32_1 = arith.constant 0 : i32
    return %arg0, %c0_i32, %c0_i32_0 : i32, i32, i32
  }
  func.func @transform_4(%arg0: i32) -> (i32, i32) {
    %c0_i32 = arith.constant 0 : i32
    %c0_i32_0 = arith.constant 0 : i32
    %c0_i32_1 = arith.constant 0 : i32
    return %c0_i32, %c0_i32_0 : i32, i32
  }
  func.func @transform_5(%arg0: i32) -> (i32, i32) {
    %c0_i32 = arith.constant 0 : i32
    %c0_i32_0 = arith.constant 0 : i32
    %c0_i32_1 = arith.constant 0 : i32
    return %c0_i32, %c0_i32_0 : i32, i32
  }
  func.func @transform_6(%arg0: i32) -> (i32, i32) {
    %c0_i32 = arith.constant 0 : i32
    %c0_i32_0 = arith.constant 0 : i32
    %c0_i32_1 = arith.constant 0 : i32
    return %c0_i32, %c0_i32_0 : i32, i32
  }
  func.func @transform_7(%arg0: i32) -> (i32, i32) {
    %c0_i32 = arith.constant 0 : i32
    %c0_i32_0 = arith.constant 0 : i32
    %c0_i32_1 = arith.constant 0 : i32
    return %c0_i32, %c0_i32_0 : i32, i32
  }
  func.func @transform_8(%arg0: i32) -> (i32, i32) {
    %c0_i32 = arith.constant 0 : i32
    %c0_i32_0 = arith.constant 0 : i32
    %c0_i32_1 = arith.constant 0 : i32
    return %c0_i32, %c0_i32_0 : i32, i32
  }
  func.func @transform_9(%arg0: i32) -> (i32, i32) {
    %c0_i32 = arith.constant 0 : i32
    %c0_i32_0 = arith.constant 0 : i32
    %c0_i32_1 = arith.constant 0 : i32
    return %c0_i32, %c0_i32_0 : i32, i32
  }
  func.func @transform_10(%arg0: i32) -> (i32, i32) {
    %c0_i32 = arith.constant 0 : i32
    %c0_i32_0 = arith.constant 0 : i32
    %c0_i32_1 = arith.constant 0 : i32
    return %c0_i32, %c0_i32_0 : i32, i32
  }
  func.func @transform_11(%arg0: i32) -> (i32, i32) {
    %c0_i32 = arith.constant 0 : i32
    %c0_i32_0 = arith.constant 0 : i32
    %c0_i32_1 = arith.constant 0 : i32
    return %c0_i32, %c0_i32_0 : i32, i32
  }
  func.func @transform_12(%arg0: i32) -> (i32, i32) {
    %c0_i32 = arith.constant 0 : i32
    %c0_i32_0 = arith.constant 0 : i32
    %c0_i32_1 = arith.constant 0 : i32
    return %c0_i32, %c0_i32_0 : i32, i32
  }
  func.func @transform_13(%arg0: i32) -> (i32, i32) {
    %c0_i32 = arith.constant 0 : i32
    %c0_i32_0 = arith.constant 0 : i32
    %c0_i32_1 = arith.constant 0 : i32
    return %c0_i32, %c0_i32_0 : i32, i32
  }
  func.func @transform_14(%arg0: i32) -> (i32, i32) {
    %c0_i32 = arith.constant 0 : i32
    %c0_i32_0 = arith.constant 0 : i32
    %c0_i32_1 = arith.constant 0 : i32
    return %c0_i32, %c0_i32_0 : i32, i32
  }
  func.func @transform_15(%arg0: i32) -> (i32, i32) {
    %c0_i32 = arith.constant 0 : i32
    %c0_i32_0 = arith.constant 0 : i32
    %c0_i32_1 = arith.constant 0 : i32
    return %c0_i32, %c0_i32_0 : i32, i32
  }
  func.func @transform_16(%arg0: i32) -> (i32, i32) {
    %c0_i32 = arith.constant 0 : i32
    %c0_i32_0 = arith.constant 0 : i32
    %c0_i32_1 = arith.constant 0 : i32
    return %c0_i32, %c0_i32_0 : i32, i32
  }
  func.func @transform_17(%arg0: i32) -> (i32, i32) {
    %c0_i32 = arith.constant 0 : i32
    %c0_i32_0 = arith.constant 0 : i32
    %c0_i32_1 = arith.constant 0 : i32
    return %c0_i32, %c0_i32_0 : i32, i32
  }
  func.func @transform_18(%arg0: i32) -> (i32, i32) {
    %c0_i32 = arith.constant 0 : i32
    %c0_i32_0 = arith.constant 0 : i32
    %c0_i32_1 = arith.constant 0 : i32
    return %c0_i32, %c0_i32_0 : i32, i32
  }
  func.func @transform_19(%arg0: i32) -> (i32, i32) {
    %c0_i32 = arith.constant 0 : i32
    %c0_i32_0 = arith.constant 0 : i32
    %c0_i32_1 = arith.constant 0 : i32
    return %c0_i32, %c0_i32_0 : i32, i32
  }
  func.func @transform_20(%arg0: i32) -> (i32, i32) {
    %c0_i32 = arith.constant 0 : i32
    %c0_i32_0 = arith.constant 0 : i32
    %c0_i32_1 = arith.constant 0 : i32
    return %c0_i32, %c0_i32_0 : i32, i32
  }
  func.func @transform_21(%arg0: i32) -> (i32, i32) {
    %c0_i32 = arith.constant 0 : i32
    %c0_i32_0 = arith.constant 0 : i32
    %c0_i32_1 = arith.constant 0 : i32
    return %c0_i32, %c0_i32_0 : i32, i32
  }
  func.func @transform_22(%arg0: i32) -> (i32, i32) {
    %c0_i32 = arith.constant 0 : i32
    %c0_i32_0 = arith.constant 0 : i32
    %c0_i32_1 = arith.constant 0 : i32
    return %c0_i32, %c0_i32_0 : i32, i32
  }
  func.func @transform_23(%arg0: i32) -> (i32, i32) {
    %c0_i32 = arith.constant 0 : i32
    %c0_i32_0 = arith.constant 0 : i32
    %c0_i32_1 = arith.constant 0 : i32
    return %c0_i32, %c0_i32_0 : i32, i32
  }
  func.func @transform_24(%arg0: i32) -> (i32, i32, i32) {
    %c0_i32 = arith.constant 0 : i32
    %c0_i32_0 = arith.constant 0 : i32
    %c0_i32_1 = arith.constant 0 : i32
    return %arg0, %c0_i32, %c0_i32_0 : i32, i32, i32
  }
}

</mosaic_0001>

<llo_original>
// kernel: tpu_custom_call.1
$region0: #{tpu_custom_call.1}
  #allocation0 [shape = 'u32[]', space=smem, size = 0x4, offset = 0x4, fixed_abs, tag = 'smem constant byte address 0x4 - core index']
  #allocation1 [shape = 'u32[144,128]{1,0:T(1,128)}', space=vmem, size = 0x12000, scoped, tag = 'internal scratch']
  %s0 = inlined_call_operand.hbm [shape: f32[2,8,32], index: 0, kind: input, shape index: {}]
  %s1 = inlined_call_operand.hbm [shape: f32[2,8,32], index: 1, kind: input, shape index: {}]
  %s2 = inlined_call_operand.hbm [shape: s32[2,8,8], index: 2, kind: input, shape index: {}]
  %s3 = inlined_call_operand.hbm [shape: s32[2,8,8], index: 3, kind: input, shape index: {}]
  %s4 = inlined_call_operand.vmem [shape: f32[32,96], index: 4, kind: input, shape index: {}]
  %s5 = inlined_call_operand.hbm [shape: f32[1,96], index: 5, kind: input, shape index: {}]
  %s6 = inlined_call_operand.vmem [shape: f32[32,32], index: 6, kind: input, shape index: {}]
  %s7 = inlined_call_operand.hbm [shape: f32[1,32], index: 7, kind: input, shape index: {}]
  %s8 = inlined_call_operand.vmem [shape: f32[32,32], index: 8, kind: input, shape index: {}]
  %s9 = inlined_call_operand.hbm [shape: f32[1,32], index: 9, kind: input, shape index: {}]
  %s10 = inlined_call_operand.vmem [shape: f32[32,64], index: 10, kind: input, shape index: {}]
  %s11 = inlined_call_operand.hbm [shape: f32[1,64], index: 11, kind: input, shape index: {}]
  %s12 = inlined_call_operand.hbm [shape: f32[32,32], index: 12, kind: input, shape index: {}]
  %s13 = inlined_call_operand.hbm [shape: f32[1,32], index: 13, kind: input, shape index: {}]
  %s14 = inlined_call_operand.hbm [shape: f32[1,32], index: 14, kind: input, shape index: {}]
  %s15 = inlined_call_operand.hbm [shape: f32[1,32], index: 15, kind: input, shape index: {}]
  %s16 = inlined_call_operand.hbm [shape: f32[1,32], index: 16, kind: input, shape index: {}]
  %s17 = inlined_call_operand.hbm [shape: f32[1,32], index: 17, kind: input, shape index: {}]
  %s18 = inlined_call_operand.vmem [shape: f32[1,32], index: 18, kind: input, shape index: {}]
  %s19 = inlined_call_operand.vmem [shape: f32[1,32], index: 19, kind: input, shape index: {}]
  %s20 = inlined_call_operand.hbm [shape: f32[32,64], index: 20, kind: input, shape index: {}]
  %s21 = inlined_call_operand.vmem [shape: f32[1,64], index: 21, kind: input, shape index: {}]
  %s22 = inlined_call_operand.vmem [shape: f32[64,32], index: 22, kind: input, shape index: {}]
  %s23 = inlined_call_operand.vmem [shape: f32[1,32], index: 23, kind: input, shape index: {}]
  %s24 = inlined_call_operand.hbm [shape: f32[2,8,32], index: 24, kind: output, shape index: {}]
  %s25 = sld [smem:[#allocation0]]
  $region189: #{tpu_custom_call.1} parent=0
    _
  %s27 = ssub.s32 1, %s25
  %s28 = scalar_select 0, %s27, %s25
  $region1: #{tpu_custom_call.1} parent=0
    #allocation2 [shape = 'u8[8192]{0}', space=vmem, size = 0x2000, scoped, tag = 'input window, operand 0']
    #allocation3 [shape = 's32[2]{0}', space=sflag, size = 0x8, scoped, tag = 'scoped memory for tpu_custom_call.1']
    #allocation4 [shape = 's32[2]{0}', space=sflag, size = 0x8, scoped, tag = 'scoped memory for tpu_custom_call.1']
    #allocation5 [shape = 'u8[8192]{0}', space=vmem, size = 0x2000, scoped, tag = 'input window, operand 1']
    #allocation6 [shape = 's32[2]{0}', space=sflag, size = 0x8, scoped, tag = 'scoped memory for tpu_custom_call.1']
    #allocation7 [shape = 'u8[8192]{0}', space=vmem, size = 0x2000, scoped, tag = 'input window, operand 2']
    #allocation8 [shape = 'u8[8192]{0}', space=vmem, size = 0x2000, scoped, tag = 'input window, operand 3']
    #allocation9 [shape = 's32[2]{0}', space=sflag, size = 0x8, scoped, tag = 'scoped memory for tpu_custom_call.1']
    #allocation10 [shape = 'u8[512]{0}', space=vmem, size = 0x400, scoped, tag = 'input window, operand 5, single buffered']
    #allocation11 [shape = 'u8[512]{0}', space=vmem, size = 0x400, scoped, tag = 'input window, operand 7, single buffered']
    #allocation12 [shape = 's32[1]{0}', space=sflag, size = 0x4, scoped, tag = 'scoped memory for tpu_custom_call.1']
    #allocation13 [shape = 'u8[512]{0}', space=vmem, size = 0x400, scoped, tag = 'input window, operand 9, single buffered']
    #allocation14 [shape = 'u8[512]{0}', space=vmem, size = 0x400, scoped, tag = 'input window, operand 11, single buffered']
    #allocation15 [shape = 's32[1]{0}', space=sflag, size = 0x4, scoped, tag = 'scoped memory for tpu_custom_call.1']
    #allocation16 [shape = 'u8[16384]{0}', space=vmem, size = 0x4000, scoped, tag = 'input window, operand 12, single buffered']
    #allocation17 [shape = 'u8[512]{0}', space=vmem, size = 0x400, scoped, tag = 'input window, operand 13, single buffered']
    #allocation18 [shape = 's32[1]{0}', space=sflag, size = 0x4, scoped, tag = 'scoped memory for tpu_custom_call.1']
    #allocation19 [shape = 'u8[512]{0}', space=vmem, size = 0x400, scoped, tag = 'input window, operand 14, single buffered']
    #allocation20 [shape = 'u8[512]{0}', space=vmem, size = 0x400, scoped, tag = 'input window, operand 15, single buffered']
    #allocation21 [shape = 's32[1]{0}', space=sflag, size = 0x4, scoped, tag = 'scoped memory for tpu_custom_call.1']
    #allocation22 [shape = 'u8[512]{0}', space=vmem, size = 0x400, scoped, tag = 'input window, operand 16, single buffered']
    #allocation23 [shape = 'u8[512]{0}', space=vmem, size = 0x400, scoped, tag = 'input window, operand 17, single buffered']
    #allocation24 [shape = 's32[1]{0}', space=sflag, size = 0x4, scoped, tag = 'scoped memory for tpu_custom_call.1']
    #allocation25 [shape = 'u8[16384]{0}', space=vmem, size = 0x4000, scoped, tag = 'input window, operand 20, single buffered']
    #allocation26 [shape = 'u8[8192]{0}', space=vmem, size = 0x2000, scoped, tag = 'output window, operand 0']
    %29 = vsyncpa [#allocation3], 0
    %s30 = scalar_lea.sflag [#allocation3], 1
    %31 = vsyncpa %s30, 0
    %32 = vsyncpa [#allocation6], 0
    %s33 = scalar_lea.sflag [#allocation6], 1
    %34 = vsyncpa %s33, 0
    %35 = vsyncpa [#allocation9], 0
    %s36 = scalar_lea.sflag [#allocation9], 1
    %37 = vsyncpa %s36, 0
    %38 = vsyncpa [#allocation12], 0
    %39 = vsyncpa [#allocation15], 0
    %40 = vsyncpa [#allocation18], 0
    %41 = vsyncpa [#allocation21], 0
    %42 = vsyncpa [#allocation24], 0
    %43 = vsyncpa [#allocation4], 0
    %s44 = scalar_lea.sflag [#allocation4], 1
    %45 = vsyncpa %s44, 0
    loop: start=0, step=1, limit=4
    $region2: #{tpu_custom_call.1} parent=1 // loop_pre_header
      _
    $region3: #{tpu_custom_call.1} parent=1 // loop_header
      %s47 = sphi 0, %s51
      %p48 = scmp.ge.s32.totalorder %s47, 4
      %s57 = sphi 0, %s59
      %s60 = sphi 0, %s57
      %s61 = sphi 0, %s60
      %s77 = sphi 0, %s61
      %s83 = sphi 0, %s85
      %s86 = sphi 0, %s83
      %s87 = sphi 0, %s86
      %s103 = sphi 0, %s87
      %s109 = sphi 0, %s111
      %s112 = sphi 0, %s109
      %s113 = sphi 0, %s112
      %s129 = sphi 0, %s113
      %s135 = sphi 0, %s137
      %s138 = sphi 0, %s135
      %s139 = sphi 0, %s138
      %s155 = sphi 0, %s139
      %s159 = sphi 0, %s159
      %s161 = sphi 0, %s159
      %s162 = sphi 0, %s161
      %s176 = sphi 0, %s162
      %s180 = sphi 0, %s180
      %s182 = sphi 0, %s180
      %s183 = sphi 0, %s182
      %s197 = sphi 0, %s183
      %s201 = sphi 0, %s201
      %s203 = sphi 0, %s201
      %s204 = sphi 0, %s203
      %s218 = sphi 0, %s204
      %s222 = sphi 0, %s222
      %s224 = sphi 0, %s222
      %s225 = sphi 0, %s224
      %s239 = sphi 0, %s225
      %s243 = sphi 0, %s243
      %s245 = sphi 0, %s243
      %s246 = sphi 0, %s245
      %s260 = sphi 0, %s246
      %s264 = sphi 0, %s264
      %s266 = sphi 0, %s264
      %s267 = sphi 0, %s266
      %s281 = sphi 0, %s267
      %s285 = sphi 0, %s285
      %s287 = sphi 0, %s285
      %s288 = sphi 0, %s287
      %s302 = sphi 0, %s288
      %s306 = sphi 0, %s306
      %s308 = sphi 0, %s306
      %s309 = sphi 0, %s308
      %s323 = sphi 0, %s309
      %s327 = sphi 0, %s327
      %s329 = sphi 0, %s327
      %s330 = sphi 0, %s329
      %s344 = sphi 0, %s330
      %s348 = sphi 0, %s348
      %s350 = sphi 0, %s348
      %s351 = sphi 0, %s350
      %s365 = sphi 0, %s351
      %s369 = sphi 0, %s369
      %s371 = sphi 0, %s369
      %s372 = sphi 0, %s371
      %s386 = sphi 0, %s372
      %s390 = sphi 0, %s390
      %s392 = sphi 0, %s390
      %s393 = sphi 0, %s392
      %s407 = sphi 0, %s393
      %s411 = sphi 0, %s411
      %s413 = sphi 0, %s411
      %s414 = sphi 0, %s413
      %s428 = sphi 0, %s414
      %s432 = sphi 0, %s432
      %s434 = sphi 0, %s432
      %s435 = sphi 0, %s434
      %s449 = sphi 0, %s435
      %s453 = sphi 0, %s453
      %s455 = sphi 0, %s453
      %s456 = sphi 0, %s455
      %s470 = sphi 0, %s456
      %s474 = sphi 0, %s474
      %s476 = sphi 0, %s474
      %s477 = sphi 0, %s476
      %s491 = sphi 0, %s477
      %s495 = sphi 0, %s495
      %s497 = sphi 0, %s495
      %s498 = sphi 0, %s497
      %s512 = sphi 0, %s498
      %s516 = sphi 0, %s516
      %s518 = sphi 0, %s516
      %s519 = sphi 0, %s518
      %s533 = sphi 0, %s519
      %s537 = sphi 0, %s537
      %s539 = sphi 0, %s537
      %s540 = sphi 0, %s539
      %s554 = sphi 0, %s540
      %s558 = sphi 0, %s558
      %s560 = sphi 0, %s558
      %s561 = sphi 0, %s560
      %s575 = sphi 0, %s561
      %s581 = sphi 0, %s583
      %s584 = sphi 0, %s581
      %s585 = sphi 0, %s584
      %s601 = sphi 0, %s585
    $region4: #{tpu_custom_call.1} parent=1 // loop_header_branch
      %50 = sbr.rel (%p48) target = $region8
    $region5: #{tpu_custom_call.1} parent=1 // loop_body
      %s52 = ssub.s32 %s47, 1
      %s53 = ssub.s32 %s47, 2
      %s54 = sadd.s32 %s47, 1
      %s55 = ssub.s32 %s47, %s54
      %p56 = scmp.eq.s32.totalorder %s55, 0
      %s58 = sadd.s32 %s57, 1
      %s59 = scalar_select %p56, %s57, %s58
      %p62 = pneg %p56
      %p63 = scmp.eq.s32.totalorder %s47, 1
      %p64 = por %p62, %p63
      %p65 = scmp.ne.s32.totalorder %s57, %s60
      %p66 = scmp.eq.s32.totalorder %s47, 0
      %p67 = por %p65, %p66
      %p68 = scmp.ne.s32.totalorder %s57, %s60
      %p69 = scmp.eq.s32.totalorder %s52, 1
      %p70 = por %p68, %p69
      %p71 = scmp.ne.s32.totalorder %s60, %s61
      %p72 = scmp.eq.s32.totalorder %s52, 0
      %p73 = por %p71, %p72
      %p74 = scmp.ne.s32.totalorder %s60, %s61
      %p75 = scmp.eq.s32.totalorder %s53, 1
      %p76 = por %p74, %p75
      %p78 = scmp.ne.s32.totalorder %s61, %s77
      %p79 = scmp.eq.s32.totalorder %s53, 0
      %p80 = por %p78, %p79
      %s81 = ssub.s32 %s47, %s54
      %p82 = scmp.eq.s32.totalorder %s81, 0
      %s84 = sadd.s32 %s83, 1
      %s85 = scalar_select %p82, %s83, %s84
      %p88 = pneg %p82
      %p89 = scmp.eq.s32.totalorder %s47, 1
      %p90 = por %p88, %p89
      %p91 = scmp.ne.s32.totalorder %s83, %s86
      %p92 = scmp.eq.s32.totalorder %s47, 0
      %p93 = por %p91, %p92
      %p94 = scmp.ne.s32.totalorder %s83, %s86
      %p95 = scmp.eq.s32.totalorder %s52, 1
      %p96 = por %p94, %p95
      %p97 = scmp.ne.s32.totalorder %s86, %s87
      %p98 = scmp.eq.s32.totalorder %s52, 0
      %p99 = por %p97, %p98
      %p100 = scmp.ne.s32.totalorder %s86, %s87
      %p101 = scmp.eq.s32.totalorder %s53, 1
      %p102 = por %p100, %p101
      %p104 = scmp.ne.s32.totalorder %s87, %s103
      %p105 = scmp.eq.s32.totalorder %s53, 0
      %p106 = por %p104, %p105
      %s107 = ssub.s32 %s47, %s54
      %p108 = scmp.eq.s32.totalorder %s107, 0
      %s110 = sadd.s32 %s109, 1
      %s111 = scalar_select %p108, %s109, %s110
      %p114 = pneg %p108
      %p115 = scmp.eq.s32.totalorder %s47, 1
      %p116 = por %p114, %p115
      %p117 = scmp.ne.s32.totalorder %s109, %s112
      %p118 = scmp.eq.s32.totalorder %s47, 0
      %p119 = por %p117, %p118
      %p120 = scmp.ne.s32.totalorder %s109, %s112
      %p121 = scmp.eq.s32.totalorder %s52, 1
      %p122 = por %p120, %p121
      %p123 = scmp.ne.s32.totalorder %s112, %s113
      %p124 = scmp.eq.s32.totalorder %s52, 0
      %p125 = por %p123, %p124
      %p126 = scmp.ne.s32.totalorder %s112, %s113
      %p127 = scmp.eq.s32.totalorder %s53, 1
      %p128 = por %p126, %p127
      %p130 = scmp.ne.s32.totalorder %s113, %s129
      %p131 = scmp.eq.s32.totalorder %s53, 0
      %p132 = por %p130, %p131
      %s133 = ssub.s32 %s47, %s54
      %p134 = scmp.eq.s32.totalorder %s133, 0
      %s136 = sadd.s32 %s135, 1
      %s137 = scalar_select %p134, %s135, %s136
      %p140 = pneg %p134
      %p141 = scmp.eq.s32.totalorder %s47, 1
      %p142 = por %p140, %p141
      %p143 = scmp.ne.s32.totalorder %s135, %s138
      %p144 = scmp.eq.s32.totalorder %s47, 0
      %p145 = por %p143, %p144
      %p146 = scmp.ne.s32.totalorder %s135, %s138
      %p147 = scmp.eq.s32.totalorder %s52, 1
      %p148 = por %p146, %p147
      %p149 = scmp.ne.s32.totalorder %s138, %s139
      %p150 = scmp.eq.s32.totalorder %s52, 0
      %p151 = por %p149, %p150
      %p152 = scmp.ne.s32.totalorder %s138, %s139
      %p153 = scmp.eq.s32.totalorder %s53, 1
      %p154 = por %p152, %p153
      %p156 = scmp.ne.s32.totalorder %s139, %s155
      %p157 = scmp.eq.s32.totalorder %s53, 0
      %p158 = por %p156, %p157
      %s160 = sadd.s32 %s159, 1
      %p163 = scmp.eq.s32.totalorder %s47, 1
      %p164 = scmp.ne.s32.totalorder %s159, %s161
      %p165 = scmp.eq.s32.totalorder %s47, 0
      %p166 = por %p164, %p165
      %p167 = scmp.ne.s32.totalorder %s159, %s161
      %p168 = scmp.eq.s32.totalorder %s52, 1
      %p169 = por %p167, %p168
      %p170 = scmp.ne.s32.totalorder %s161, %s162
      %p171 = scmp.eq.s32.totalorder %s52, 0
      %p172 = por %p170, %p171
      %p173 = scmp.ne.s32.totalorder %s161, %s162
      %p174 = scmp.eq.s32.totalorder %s53, 1
      %p175 = por %p173, %p174
      %p177 = scmp.ne.s32.totalorder %s162, %s176
      %p178 = scmp.eq.s32.totalorder %s53, 0
      %p179 = por %p177, %p178
      %s181 = sadd.s32 %s180, 1
      %p184 = scmp.eq.s32.totalorder %s47, 1
      %p185 = scmp.ne.s32.totalorder %s180, %s182
      %p186 = scmp.eq.s32.totalorder %s47, 0
      %p187 = por %p185, %p186
      %p188 = scmp.ne.s32.totalorder %s180, %s182
      %p189 = scmp.eq.s32.totalorder %s52, 1
      %p190 = por %p188, %p189
      %p191 = scmp.ne.s32.totalorder %s182, %s183
      %p192 = scmp.eq.s32.totalorder %s52, 0
      %p193 = por %p191, %p192
      %p194 = scmp.ne.s32.totalorder %s182, %s183
      %p195 = scmp.eq.s32.totalorder %s53, 1
      %p196 = por %p194, %p195
      %p198 = scmp.ne.s32.totalorder %s183, %s197
      %p199 = scmp.eq.s32.totalorder %s53, 0
      %p200 = por %p198, %p199
      %s202 = sadd.s32 %s201, 1
      %p205 = scmp.eq.s32.totalorder %s47, 1
      %p206 = scmp.ne.s32.totalorder %s201, %s203
      %p207 = scmp.eq.s32.totalorder %s47, 0
      %p208 = por %p206, %p207
      %p209 = scmp.ne.s32.totalorder %s201, %s203
      %p210 = scmp.eq.s32.totalorder %s52, 1
      %p211 = por %p209, %p210
      %p212 = scmp.ne.s32.totalorder %s203, %s204
      %p213 = scmp.eq.s32.totalorder %s52, 0
      %p214 = por %p212, %p213
      %p215 = scmp.ne.s32.totalorder %s203, %s204
      %p216 = scmp.eq.s32.totalorder %s53, 1
      %p217 = por %p215, %p216
      %p219 = scmp.ne.s32.totalorder %s204, %s218
      %p220 = scmp.eq.s32.totalorder %s53, 0
      %p221 = por %p219, %p220
      %s223 = sadd.s32 %s222, 1
      %p226 = scmp.eq.s32.totalorder %s47, 1
      %p227 = scmp.ne.s32.totalorder %s222, %s224
      %p228 = scmp.eq.s32.totalorder %s47, 0
      %p229 = por %p227, %p228
      %p230 = scmp.ne.s32.totalorder %s222, %s224
      %p231 = scmp.eq.s32.totalorder %s52, 1
      %p232 = por %p230, %p231
      %p233 = scmp.ne.s32.totalorder %s224, %s225
      %p234 = scmp.eq.s32.totalorder %s52, 0
      %p235 = por %p233, %p234
      %p236 = scmp.ne.s32.totalorder %s224, %s225
      %p237 = scmp.eq.s32.totalorder %s53, 1
      %p238 = por %p236, %p237
      %p240 = scmp.ne.s32.totalorder %s225, %s239
      %p241 = scmp.eq.s32.totalorder %s53, 0
      %p242 = por %p240, %p241
      %s244 = sadd.s32 %s243, 1
      %p247 = scmp.eq.s32.totalorder %s47, 1
      %p248 = scmp.ne.s32.totalorder %s243, %s245
      %p249 = scmp.eq.s32.totalorder %s47, 0
      %p250 = por %p248, %p249
      %p251 = scmp.ne.s32.totalorder %s243, %s245
      %p252 = scmp.eq.s32.totalorder %s52, 1
      %p253 = por %p251, %p252
      %p254 = scmp.ne.s32.totalorder %s245, %s246
      %p255 = scmp.eq.s32.totalorder %s52, 0
      %p256 = por %p254, %p255
      %p257 = scmp.ne.s32.totalorder %s245, %s246
      %p258 = scmp.eq.s32.totalorder %s53, 1
      %p259 = por %p257, %p258
      %p261 = scmp.ne.s32.totalorder %s246, %s260
      %p262 = scmp.eq.s32.totalorder %s53, 0
      %p263 = por %p261, %p262
      %s265 = sadd.s32 %s264, 1
      %p268 = scmp.eq.s32.totalorder %s47, 1
      %p269 = scmp.ne.s32.totalorder %s264, %s266
      %p270 = scmp.eq.s32.totalorder %s47, 0
      %p271 = por %p269, %p270
      %p272 = scmp.ne.s32.totalorder %s264, %s266
      %p273 = scmp.eq.s32.totalorder %s52, 1
      %p274 = por %p272, %p273
      %p275 = scmp.ne.s32.totalorder %s266, %s267
      %p276 = scmp.eq.s32.totalorder %s52, 0
      %p277 = por %p275, %p276
      %p278 = scmp.ne.s32.totalorder %s266, %s267
      %p279 = scmp.eq.s32.totalorder %s53, 1
      %p280 = por %p278, %p279
      %p282 = scmp.ne.s32.totalorder %s267, %s281
      %p283 = scmp.eq.s32.totalorder %s53, 0
      %p284 = por %p282, %p283
      %s286 = sadd.s32 %s285, 1
      %p289 = scmp.eq.s32.totalorder %s47, 1
      %p290 = scmp.ne.s32.totalorder %s285, %s287
      %p291 = scmp.eq.s32.totalorder %s47, 0
      %p292 = por %p290, %p291
      %p293 = scmp.ne.s32.totalorder %s285, %s287
      %p294 = scmp.eq.s32.totalorder %s52, 1
      %p295 = por %p293, %p294
      %p296 = scmp.ne.s32.totalorder %s287, %s288
      %p297 = scmp.eq.s32.totalorder %s52, 0
      %p298 = por %p296, %p297
      %p299 = scmp.ne.s32.totalorder %s287, %s288
      %p300 = scmp.eq.s32.totalorder %s53, 1
      %p301 = por %p299, %p300
      %p303 = scmp.ne.s32.totalorder %s288, %s302
      %p304 = scmp.eq.s32.totalorder %s53, 0
      %p305 = por %p303, %p304
      %s307 = sadd.s32 %s306, 1
      %p310 = scmp.eq.s32.totalorder %s47, 1
      %p311 = scmp.ne.s32.totalorder %s306, %s308
      %p312 = scmp.eq.s32.totalorder %s47, 0
      %p313 = por %p311, %p312
      %p314 = scmp.ne.s32.totalorder %s306, %s308
      %p315 = scmp.eq.s32.totalorder %s52, 1
      %p316 = por %p314, %p315
      %p317 = scmp.ne.s32.totalorder %s308, %s309
      %p318 = scmp.eq.s32.totalorder %s52, 0
      %p319 = por %p317, %p318
      %p320 = scmp.ne.s32.totalorder %s308, %s309
      %p321 = scmp.eq.s32.totalorder %s53, 1
      %p322 = por %p320, %p321
      %p324 = scmp.ne.s32.totalorder %s309, %s323
      %p325 = scmp.eq.s32.totalorder %s53, 0
      %p326 = por %p324, %p325
      %s328 = sadd.s32 %s327, 1
      %p331 = scmp.eq.s32.totalorder %s47, 1
      %p332 = scmp.ne.s32.totalorder %s327, %s329
      %p333 = scmp.eq.s32.totalorder %s47, 0
      %p334 = por %p332, %p333
      %p335 = scmp.ne.s32.totalorder %s327, %s329
      %p336 = scmp.eq.s32.totalorder %s52, 1
      %p337 = por %p335, %p336
      %p338 = scmp.ne.s32.totalorder %s329, %s330
      %p339 = scmp.eq.s32.totalorder %s52, 0
      %p340 = por %p338, %p339
      %p341 = scmp.ne.s32.totalorder %s329, %s330
      %p342 = scmp.eq.s32.totalorder %s53, 1
      %p343 = por %p341, %p342
      %p345 = scmp.ne.s32.totalorder %s330, %s344
      %p346 = scmp.eq.s32.totalorder %s53, 0
      %p347 = por %p345, %p346
      %s349 = sadd.s32 %s348, 1
      %p352 = scmp.eq.s32.totalorder %s47, 1
      %p353 = scmp.ne.s32.totalorder %s348, %s350
      %p354 = scmp.eq.s32.totalorder %s47, 0
      %p355 = por %p353, %p354
      %p356 = scmp.ne.s32.totalorder %s348, %s350
      %p357 = scmp.eq.s32.totalorder %s52, 1
      %p358 = por %p356, %p357
      %p359 = scmp.ne.s32.totalorder %s350, %s351
      %p360 = scmp.eq.s32.totalorder %s52, 0
      %p361 = por %p359, %p360
      %p362 = scmp.ne.s32.totalorder %s350, %s351
      %p363 = scmp.eq.s32.totalorder %s53, 1
      %p364 = por %p362, %p363
      %p366 = scmp.ne.s32.totalorder %s351, %s365
      %p367 = scmp.eq.s32.totalorder %s53, 0
      %p368 = por %p366, %p367
      %s370 = sadd.s32 %s369, 1
      %p373 = scmp.eq.s32.totalorder %s47, 1
      %p374 = scmp.ne.s32.totalorder %s369, %s371
      %p375 = scmp.eq.s32.totalorder %s47, 0
      %p376 = por %p374, %p375
      %p377 = scmp.ne.s32.totalorder %s369, %s371
      %p378 = scmp.eq.s32.totalorder %s52, 1
      %p379 = por %p377, %p378
      %p380 = scmp.ne.s32.totalorder %s371, %s372
      %p381 = scmp.eq.s32.totalorder %s52, 0
      %p382 = por %p380, %p381
      %p383 = scmp.ne.s32.totalorder %s371, %s372
      %p384 = scmp.eq.s32.totalorder %s53, 1
      %p385 = por %p383, %p384
      %p387 = scmp.ne.s32.totalorder %s372, %s386
      %p388 = scmp.eq.s32.totalorder %s53, 0
      %p389 = por %p387, %p388
      %s391 = sadd.s32 %s390, 1
      %p394 = scmp.eq.s32.totalorder %s47, 1
      %p395 = scmp.ne.s32.totalorder %s390, %s392
      %p396 = scmp.eq.s32.totalorder %s47, 0
      %p397 = por %p395, %p396
      %p398 = scmp.ne.s32.totalorder %s390, %s392
      %p399 = scmp.eq.s32.totalorder %s52, 1
      %p400 = por %p398, %p399
      %p401 = scmp.ne.s32.totalorder %s392, %s393
      %p402 = scmp.eq.s32.totalorder %s52, 0
      %p403 = por %p401, %p402
      %p404 = scmp.ne.s32.totalorder %s392, %s393
      %p405 = scmp.eq.s32.totalorder %s53, 1
      %p406 = por %p404, %p405
      %p408 = scmp.ne.s32.totalorder %s393, %s407
      %p409 = scmp.eq.s32.totalorder %s53, 0
      %p410 = por %p408, %p409
      %s412 = sadd.s32 %s411, 1
      %p415 = scmp.eq.s32.totalorder %s47, 1
      %p416 = scmp.ne.s32.totalorder %s411, %s413
      %p417 = scmp.eq.s32.totalorder %s47, 0
      %p418 = por %p416, %p417
      %p419 = scmp.ne.s32.totalorder %s411, %s413
      %p420 = scmp.eq.s32.totalorder %s52, 1
      %p421 = por %p419, %p420
      %p422 = scmp.ne.s32.totalorder %s413, %s414
      %p423 = scmp.eq.s32.totalorder %s52, 0
      %p424 = por %p422, %p423
      %p425 = scmp.ne.s32.totalorder %s413, %s414
      %p426 = scmp.eq.s32.totalorder %s53, 1
      %p427 = por %p425, %p426
      %p429 = scmp.ne.s32.totalorder %s414, %s428
      %p430 = scmp.eq.s32.totalorder %s53, 0
      %p431 = por %p429, %p430
      %s433 = sadd.s32 %s432, 1
      %p436 = scmp.eq.s32.totalorder %s47, 1
      %p437 = scmp.ne.s32.totalorder %s432, %s434
      %p438 = scmp.eq.s32.totalorder %s47, 0
      %p439 = por %p437, %p438
      %p440 = scmp.ne.s32.totalorder %s432, %s434
      %p441 = scmp.eq.s32.totalorder %s52, 1
      %p442 = por %p440, %p441
      %p443 = scmp.ne.s32.totalorder %s434, %s435
      %p444 = scmp.eq.s32.totalorder %s52, 0
      %p445 = por %p443, %p444
      %p446 = scmp.ne.s32.totalorder %s434, %s435
      %p447 = scmp.eq.s32.totalorder %s53, 1
      %p448 = por %p446, %p447
      %p450 = scmp.ne.s32.totalorder %s435, %s449
      %p451 = scmp.eq.s32.totalorder %s53, 0
      %p452 = por %p450, %p451
      %s454 = sadd.s32 %s453, 1
      %p457 = scmp.eq.s32.totalorder %s47, 1
      %p458 = scmp.ne.s32.totalorder %s453, %s455
      %p459 = scmp.eq.s32.totalorder %s47, 0
      %p460 = por %p458, %p459
      %p461 = scmp.ne.s32.totalorder %s453, %s455
      %p462 = scmp.eq.s32.totalorder %s52, 1
      %p463 = por %p461, %p462
      %p464 = scmp.ne.s32.totalorder %s455, %s456
      %p465 = scmp.eq.s32.totalorder %s52, 0
      %p466 = por %p464, %p465
      %p467 = scmp.ne.s32.totalorder %s455, %s456
      %p468 = scmp.eq.s32.totalorder %s53, 1
      %p469 = por %p467, %p468
      %p471 = scmp.ne.s32.totalorder %s456, %s470
      %p472 = scmp.eq.s32.totalorder %s53, 0
      %p473 = por %p471, %p472
      %s475 = sadd.s32 %s474, 1
      %p478 = scmp.eq.s32.totalorder %s47, 1
      %p479 = scmp.ne.s32.totalorder %s474, %s476
      %p480 = scmp.eq.s32.totalorder %s47, 0
      %p481 = por %p479, %p480
      %p482 = scmp.ne.s32.totalorder %s474, %s476
      %p483 = scmp.eq.s32.totalorder %s52, 1
      %p484 = por %p482, %p483
      %p485 = scmp.ne.s32.totalorder %s476, %s477
      %p486 = scmp.eq.s32.totalorder %s52, 0
      %p487 = por %p485, %p486
      %p488 = scmp.ne.s32.totalorder %s476, %s477
      %p489 = scmp.eq.s32.totalorder %s53, 1
      %p490 = por %p488, %p489
      %p492 = scmp.ne.s32.totalorder %s477, %s491
      %p493 = scmp.eq.s32.totalorder %s53, 0
      %p494 = por %p492, %p493
      %s496 = sadd.s32 %s495, 1
      %p499 = scmp.eq.s32.totalorder %s47, 1
      %p500 = scmp.ne.s32.totalorder %s495, %s497
      %p501 = scmp.eq.s32.totalorder %s47, 0
      %p502 = por %p500, %p501
      %p503 = scmp.ne.s32.totalorder %s495, %s497
      %p504 = scmp.eq.s32.totalorder %s52, 1
      %p505 = por %p503, %p504
      %p506 = scmp.ne.s32.totalorder %s497, %s498
      %p507 = scmp.eq.s32.totalorder %s52, 0
      %p508 = por %p506, %p507
      %p509 = scmp.ne.s32.totalorder %s497, %s498
      %p510 = scmp.eq.s32.totalorder %s53, 1
      %p511 = por %p509, %p510
      %p513 = scmp.ne.s32.totalorder %s498, %s512
      %p514 = scmp.eq.s32.totalorder %s53, 0
      %p515 = por %p513, %p514
      %s517 = sadd.s32 %s516, 1
      %p520 = scmp.eq.s32.totalorder %s47, 1
      %p521 = scmp.ne.s32.totalorder %s516, %s518
      %p522 = scmp.eq.s32.totalorder %s47, 0
      %p523 = por %p521, %p522
      %p524 = scmp.ne.s32.totalorder %s516, %s518
      %p525 = scmp.eq.s32.totalorder %s52, 1
      %p526 = por %p524, %p525
      %p527 = scmp.ne.s32.totalorder %s518, %s519
      %p528 = scmp.eq.s32.totalorder %s52, 0
      %p529 = por %p527, %p528
      %p530 = scmp.ne.s32.totalorder %s518, %s519
      %p531 = scmp.eq.s32.totalorder %s53, 1
      %p532 = por %p530, %p531
      %p534 = scmp.ne.s32.totalorder %s519, %s533
      %p535 = scmp.eq.s32.totalorder %s53, 0
      %p536 = por %p534, %p535
      %s538 = sadd.s32 %s537, 1
      %p541 = scmp.eq.s32.totalorder %s47, 1
      %p542 = scmp.ne.s32.totalorder %s537, %s539
      %p543 = scmp.eq.s32.totalorder %s47, 0
      %p544 = por %p542, %p543
      %p545 = scmp.ne.s32.totalorder %s537, %s539
      %p546 = scmp.eq.s32.totalorder %s52, 1
      %p547 = por %p545, %p546
      %p548 = scmp.ne.s32.totalorder %s539, %s540
      %p549 = scmp.eq.s32.totalorder %s52, 0
      %p550 = por %p548, %p549
      %p551 = scmp.ne.s32.totalorder %s539, %s540
      %p552 = scmp.eq.s32.totalorder %s53, 1
      %p553 = por %p551, %p552
      %p555 = scmp.ne.s32.totalorder %s540, %s554
      %p556 = scmp.eq.s32.totalorder %s53, 0
      %p557 = por %p555, %p556
      %s559 = sadd.s32 %s558, 1
      %p562 = scmp.eq.s32.totalorder %s47, 1
      %p563 = scmp.ne.s32.totalorder %s558, %s560
      %p564 = scmp.eq.s32.totalorder %s47, 0
      %p565 = por %p563, %p564
      %p566 = scmp.ne.s32.totalorder %s558, %s560
      %p567 = scmp.eq.s32.totalorder %s52, 1
      %p568 = por %p566, %p567
      %p569 = scmp.ne.s32.totalorder %s560, %s561
      %p570 = scmp.eq.s32.totalorder %s52, 0
      %p571 = por %p569, %p570
      %p572 = scmp.ne.s32.totalorder %s560, %s561
      %p573 = scmp.eq.s32.totalorder %s53, 1
      %p574 = por %p572, %p573
      %p576 = scmp.ne.s32.totalorder %s561, %s575
      %p577 = scmp.eq.s32.totalorder %s53, 0
      %p578 = por %p576, %p577
      %s579 = ssub.s32 %s47, %s54
      %p580 = scmp.eq.s32.totalorder %s579, 0
      %s582 = sadd.s32 %s581, 1
      %s583 = scalar_select %p580, %s581, %s582
      %p586 = pneg %p580
      %p587 = scmp.eq.s32.totalorder %s47, 1
      %p588 = por %p586, %p587
      %p589 = scmp.ne.s32.totalorder %s581, %s584
      %p590 = scmp.eq.s32.totalorder %s47, 0
      %p591 = por %p589, %p590
      %p592 = scmp.ne.s32.totalorder %s581, %s584
      %p593 = scmp.eq.s32.totalorder %s52, 1
      %p594 = por %p592, %p593
      %p595 = scmp.ne.s32.totalorder %s584, %s585
      %p596 = scmp.eq.s32.totalorder %s52, 0
      %p597 = por %p595, %p596
      %p598 = scmp.ne.s32.totalorder %s584, %s585
      %p599 = scmp.eq.s32.totalorder %s53, 1
      %p600 = por %p598, %p599
      %p602 = scmp.ne.s32.totalorder %s585, %s601
      %p603 = scmp.eq.s32.totalorder %s53, 0
      %p604 = por %p602, %p603
      %p605 = scmp.le.s32.totalorder 1, %s47
      %p606 = scmp.lt.s32.totalorder %s47, 3
      %p607 = pnand %p605, %p606
      %p608 = pneg %p607
      // Predicated region
      $region9: #{tpu_custom_call.1} parent=5 // pred_check
        _
      $region10: #{tpu_custom_call.1} parent=5 // pred_check_branch
        %610 = sbr.rel (%p607) target = $region12
      $region11: #{tpu_custom_call.1} parent=5 // pred_region
        %s611 = ssub.s32 %s47, 1
        // Predicated region
        $region13: #{tpu_custom_call.1} parent=11 // pred_check
          %p612 = pneg %p172
        $region14: #{tpu_custom_call.1} parent=11 // pred_check_branch
          %614 = sbr.rel (%p612) target = $region16
        $region15: #{tpu_custom_call.1} parent=11 // pred_region
          _
        $region16: #{tpu_custom_call.1} parent=11 // pred_fallthru
          _
        // Predicated region
        $region17: #{tpu_custom_call.1} parent=11 // pred_check
          %p615 = pneg %p193
        $region18: #{tpu_custom_call.1} parent=11 // pred_check_branch
          %617 = sbr.rel (%p615) target = $region20
        $region19: #{tpu_custom_call.1} parent=11 // pred_region
          %s619 = ssub.s32 16, 16
          %620 = vsyncadd [#allocation9], %s619
          %s622 = sshll.u32 [#allocation10], 4
          %s623 = int_to_ptr.vmem [resolvable:$true] %s622
          %625 = dma.hbm_to_vmem [thread:$0]  %s5, 16, %s623, [#allocation9]
        $region20: #{tpu_custom_call.1} parent=11 // pred_fallthru
          _
        // Predicated region
        $region21: #{tpu_custom_call.1} parent=11 // pred_check
          %p626 = pneg %p214
        $region22: #{tpu_custom_call.1} parent=11 // pred_check_branch
          %628 = sbr.rel (%p626) target = $region24
        $region23: #{tpu_custom_call.1} parent=11 // pred_region
          _
        $region24: #{tpu_custom_call.1} parent=11 // pred_fallthru
          _
        // Predicated region
        $region25: #{tpu_custom_call.1} parent=11 // pred_check
          %p629 = pneg %p235
        $region26: #{tpu_custom_call.1} parent=11 // pred_check_branch
          %631 = sbr.rel (%p629) target = $region28
        $region27: #{tpu_custom_call.1} parent=11 // pred_region
          %s633 = ssub.s32 16, 16
          %634 = vsyncadd [#allocation12], %s633
          %s636 = sshll.u32 [#allocation11], 4
          %s637 = int_to_ptr.vmem [resolvable:$true] %s636
          %639 = dma.hbm_to_vmem [thread:$0]  %s7, 16, %s637, [#allocation12]
        $region28: #{tpu_custom_call.1} parent=11 // pred_fallthru
          _
        // Predicated region
        $region29: #{tpu_custom_call.1} parent=11 // pred_check
          %p640 = pneg %p256
        $region30: #{tpu_custom_call.1} parent=11 // pred_check_branch
          %642 = sbr.rel (%p640) target = $region32
        $region31: #{tpu_custom_call.1} parent=11 // pred_region
          _
        $region32: #{tpu_custom_call.1} parent=11 // pred_fallthru
          _
        // Predicated region
        $region33: #{tpu_custom_call.1} parent=11 // pred_check
          %p643 = pneg %p277
        $region34: #{tpu_custom_call.1} parent=11 // pred_check_branch
          %645 = sbr.rel (%p643) target = $region36
        $region35: #{tpu_custom_call.1} parent=11 // pred_region
          %s647 = ssub.s32 16, 16
          %648 = vsyncadd [#allocation12], %s647
          %s650 = sshll.u32 [#allocation13], 4
          %s651 = int_to_ptr.vmem [resolvable:$true] %s650
          %653 = dma.hbm_to_vmem [thread:$0]  %s9, 16, %s651, [#allocation12]
        $region36: #{tpu_custom_call.1} parent=11 // pred_fallthru
          _
        // Predicated region
        $region37: #{tpu_custom_call.1} parent=11 // pred_check
          %p654 = pneg %p298
        $region38: #{tpu_custom_call.1} parent=11 // pred_check_branch
          %656 = sbr.rel (%p654) target = $region40
        $region39: #{tpu_custom_call.1} parent=11 // pred_region
          _
        $region40: #{tpu_custom_call.1} parent=11 // pred_fallthru
          _
        // Predicated region
        $region41: #{tpu_custom_call.1} parent=11 // pred_check
          %p657 = pneg %p319
        $region42: #{tpu_custom_call.1} parent=11 // pred_check_branch
          %659 = sbr.rel (%p657) target = $region44
        $region43: #{tpu_custom_call.1} parent=11 // pred_region
          %s661 = ssub.s32 16, 16
          %662 = vsyncadd [#allocation15], %s661
          %s664 = sshll.u32 [#allocation14], 4
          %s665 = int_to_ptr.vmem [resolvable:$true] %s664
          %667 = dma.hbm_to_vmem [thread:$0]  %s11, 16, %s665, [#allocation15]
        $region44: #{tpu_custom_call.1} parent=11 // pred_fallthru
          _
        // Predicated region
        $region45: #{tpu_custom_call.1} parent=11 // pred_check
          %p668 = pneg %p340
        $region46: #{tpu_custom_call.1} parent=11 // pred_check_branch
          %670 = sbr.rel (%p668) target = $region48
        $region47: #{tpu_custom_call.1} parent=11 // pred_region
          %s672 = ssub.s32 512, 512
          %673 = vsyncadd [#allocation15], %s672
          %s674 = sshll.u32 [#allocation16], 4
          %s675 = int_to_ptr.vmem [resolvable:$true] %s674
          %680 = dma.hbm_to_vmem [thread:$0]  %s12, 512, %s675, [#allocation15], 128, 128, 8
        $region48: #{tpu_custom_call.1} parent=11 // pred_fallthru
          _
        // Predicated region
        $region49: #{tpu_custom_call.1} parent=11 // pred_check
          %p681 = pneg %p361
        $region50: #{tpu_custom_call.1} parent=11 // pred_check_branch
          %683 = sbr.rel (%p681) target = $region52
        $region51: #{tpu_custom_call.1} parent=11 // pred_region
          %s685 = ssub.s32 16, 16
          %686 = vsyncadd [#allocation18], %s685
          %s688 = sshll.u32 [#allocation17], 4
          %s689 = int_to_ptr.vmem [resolvable:$true] %s688
          %691 = dma.hbm_to_vmem [thread:$0]  %s13, 16, %s689, [#allocation18]
        $region52: #{tpu_custom_call.1} parent=11 // pred_fallthru
          _
        // Predicated region
        $region53: #{tpu_custom_call.1} parent=11 // pred_check
          %p692 = pneg %p382
        $region54: #{tpu_custom_call.1} parent=11 // pred_check_branch
          %694 = sbr.rel (%p692) target = $region56
        $region55: #{tpu_custom_call.1} parent=11 // pred_region
          %s696 = ssub.s32 16, 16
          %697 = vsyncadd [#allocation18], %s696
          %s699 = sshll.u32 [#allocation19], 4
          %s700 = int_to_ptr.vmem [resolvable:$true] %s699
          %702 = dma.hbm_to_vmem [thread:$0]  %s14, 16, %s700, [#allocation18]
        $region56: #{tpu_custom_call.1} parent=11 // pred_fallthru
          _
        // Predicated region
        $region57: #{tpu_custom_call.1} parent=11 // pred_check
          %p703 = pneg %p403
        $region58: #{tpu_custom_call.1} parent=11 // pred_check_branch
          %705 = sbr.rel (%p703) target = $region60
        $region59: #{tpu_custom_call.1} parent=11 // pred_region
          %s707 = ssub.s32 16, 16
          %708 = vsyncadd [#allocation21], %s707
          %s710 = sshll.u32 [#allocation20], 4
          %s711 = int_to_ptr.vmem [resolvable:$true] %s710
          %713 = dma.hbm_to_vmem [thread:$0]  %s15, 16, %s711, [#allocation21]
        $region60: #{tpu_custom_call.1} parent=11 // pred_fallthru
          _
        // Predicated region
        $region61: #{tpu_custom_call.1} parent=11 // pred_check
          %p714 = pneg %p424
        $region62: #{tpu_custom_call.1} parent=11 // pred_check_branch
          %716 = sbr.rel (%p714) target = $region64
        $region63: #{tpu_custom_call.1} parent=11 // pred_region
          %s718 = ssub.s32 16, 16
          %719 = vsyncadd [#allocation21], %s718
          %s721 = sshll.u32 [#allocation22], 4
          %s722 = int_to_ptr.vmem [resolvable:$true] %s721
          %724 = dma.hbm_to_vmem [thread:$0]  %s16, 16, %s722, [#allocation21]
        $region64: #{tpu_custom_call.1} parent=11 // pred_fallthru
          _
        // Predicated region
        $region65: #{tpu_custom_call.1} parent=11 // pred_check
          %p725 = pneg %p445
        $region66: #{tpu_custom_call.1} parent=11 // pred_check_branch
          %727 = sbr.rel (%p725) target = $region68
        $region67: #{tpu_custom_call.1} parent=11 // pred_region
          %s729 = ssub.s32 16, 16
          %730 = vsyncadd [#allocation24], %s729
          %s732 = sshll.u32 [#allocation23], 4
          %s733 = int_to_ptr.vmem [resolvable:$true] %s732
          %735 = dma.hbm_to_vmem [thread:$0]  %s17, 16, %s733, [#allocation24]
        $region68: #{tpu_custom_call.1} parent=11 // pred_fallthru
          _
        // Predicated region
        $region69: #{tpu_custom_call.1} parent=11 // pred_check
          %p736 = pneg %p466
        $region70: #{tpu_custom_call.1} parent=11 // pred_check_branch
          %738 = sbr.rel (%p736) target = $region72
        $region71: #{tpu_custom_call.1} parent=11 // pred_region
          _
        $region72: #{tpu_custom_call.1} parent=11 // pred_fallthru
          _
        // Predicated region
        $region73: #{tpu_custom_call.1} parent=11 // pred_check
          %p739 = pneg %p487
        $region74: #{tpu_custom_call.1} parent=11 // pred_check_branch
          %741 = sbr.rel (%p739) target = $region76
        $region75: #{tpu_custom_call.1} parent=11 // pred_region
          _
        $region76: #{tpu_custom_call.1} parent=11 // pred_fallthru
          _
        // Predicated region
        $region77: #{tpu_custom_call.1} parent=11 // pred_check
          %p742 = pneg %p508
        $region78: #{tpu_custom_call.1} parent=11 // pred_check_branch
          %744 = sbr.rel (%p742) target = $region80
        $region79: #{tpu_custom_call.1} parent=11 // pred_region
          %s746 = ssub.s32 512, 512
          %747 = vsyncadd [#allocation24], %s746
          %s748 = sshll.u32 [#allocation25], 4
          %s749 = int_to_ptr.vmem [resolvable:$true] %s748
          %754 = dma.hbm_to_vmem [thread:$0]  %s20, 512, %s749, [#allocation24], 128, 128, 8
        $region80: #{tpu_custom_call.1} parent=11 // pred_fallthru
          _
        // Predicated region
        $region81: #{tpu_custom_call.1} parent=11 // pred_check
          %p755 = pneg %p529
        $region82: #{tpu_custom_call.1} parent=11 // pred_check_branch
          %757 = sbr.rel (%p755) target = $region84
        $region83: #{tpu_custom_call.1} parent=11 // pred_region
          _
        $region84: #{tpu_custom_call.1} parent=11 // pred_fallthru
          _
        // Predicated region
        $region85: #{tpu_custom_call.1} parent=11 // pred_check
          %p758 = pneg %p550
        $region86: #{tpu_custom_call.1} parent=11 // pred_check_branch
          %760 = sbr.rel (%p758) target = $region88
        $region87: #{tpu_custom_call.1} parent=11 // pred_region
          _
        $region88: #{tpu_custom_call.1} parent=11 // pred_fallthru
          _
        // Predicated region
        $region89: #{tpu_custom_call.1} parent=11 // pred_check
          %p761 = pneg %p571
        $region90: #{tpu_custom_call.1} parent=11 // pred_check_branch
          %763 = sbr.rel (%p761) target = $region92
        $region91: #{tpu_custom_call.1} parent=11 // pred_region
          _
        $region92: #{tpu_custom_call.1} parent=11 // pred_fallthru
          _
      $region12: #{tpu_custom_call.1} parent=5 // pred_fallthru
        _
      %p764 = scmp.lt.s32.totalorder %s47, 2
      // Predicated region
      $region93: #{tpu_custom_call.1} parent=5 // pred_check
        %p765 = pneg %p764
      $region94: #{tpu_custom_call.1} parent=5 // pred_check_branch
        %767 = sbr.rel (%p765) target = $region96
      $region95: #{tpu_custom_call.1} parent=5 // pred_region
        // Predicated region
        $region97: #{tpu_custom_call.1} parent=95 // pred_check
          %p768 = pneg %p67
        $region98: #{tpu_custom_call.1} parent=95 // pred_check_branch
          %770 = sbr.rel (%p768) target = $region100
        $region99: #{tpu_custom_call.1} parent=95 // pred_region
          %s771 = sand.u32 %s57, 1
          %s772 = scalar_lea.sflag [#allocation3], %s771
          %s773 = sand.u32 %s57, 1
          %s774 = smul.addr %s773, 8
          %s775 = scalar_lea.vmem [#allocation2], %s774
          %s777 = ssub.s32 128, 128
          %778 = vsyncadd %s772, %s777
          %s779 = smul.addr %s47, 128
          %s780 = scalar_lea.hbm %s0, %s779
          %s782 = sshll.u32 %s775, 4
          %s783 = int_to_ptr.vmem [resolvable:$true] %s782
          %785 = dma.hbm_to_vmem [thread:$0]  %s780, 128, %s783, %s772
        $region100: #{tpu_custom_call.1} parent=95 // pred_fallthru
          _
        // Predicated region
        $region101: #{tpu_custom_call.1} parent=95 // pred_check
          %p786 = pneg %p93
        $region102: #{tpu_custom_call.1} parent=95 // pred_check_branch
          %788 = sbr.rel (%p786) target = $region104
        $region103: #{tpu_custom_call.1} parent=95 // pred_region
          %s789 = sand.u32 %s47, 1
          %s790 = scalar_lea.sflag [#allocation6], %s789
          %s791 = sand.u32 %s83, 1
          %s792 = smul.addr %s791, 8
          %s793 = scalar_lea.vmem [#allocation5], %s792
          %s795 = ssub.s32 128, 128
          %796 = vsyncadd %s790, %s795
          %s797 = smul.addr %s47, 128
          %s798 = scalar_lea.hbm %s1, %s797
          %s800 = sshll.u32 %s793, 4
          %s801 = int_to_ptr.vmem [resolvable:$true] %s800
          %803 = dma.hbm_to_vmem [thread:$0]  %s798, 128, %s801, %s790
        $region104: #{tpu_custom_call.1} parent=95 // pred_fallthru
          _
        // Predicated region
        $region105: #{tpu_custom_call.1} parent=95 // pred_check
          %p804 = pneg %p119
        $region106: #{tpu_custom_call.1} parent=95 // pred_check_branch
          %806 = sbr.rel (%p804) target = $region108
        $region107: #{tpu_custom_call.1} parent=95 // pred_region
          %s807 = sand.u32 %s47, 1
          %s808 = scalar_lea.sflag [#allocation6], %s807
          %s809 = sand.u32 %s109, 1
          %s810 = smul.addr %s809, 8
          %s811 = scalar_lea.vmem [#allocation7], %s810
          %s813 = ssub.s32 128, 128
          %814 = vsyncadd %s808, %s813
          %s815 = smul.addr %s47, 128
          %s816 = scalar_lea.hbm %s2, %s815
          %s818 = sshll.u32 %s811, 4
          %s819 = int_to_ptr.vmem [resolvable:$true] %s818
          %821 = dma.hbm_to_vmem [thread:$0]  %s816, 128, %s819, %s808
        $region108: #{tpu_custom_call.1} parent=95 // pred_fallthru
          _
        // Predicated region
        $region109: #{tpu_custom_call.1} parent=95 // pred_check
          %p822 = pneg %p145
        $region110: #{tpu_custom_call.1} parent=95 // pred_check_branch
          %824 = sbr.rel (%p822) target = $region112
        $region111: #{tpu_custom_call.1} parent=95 // pred_region
          %s825 = sand.u32 %s47, 1
          %s826 = scalar_lea.sflag [#allocation9], %s825
          %s827 = sand.u32 %s135, 1
          %s828 = smul.addr %s827, 8
          %s829 = scalar_lea.vmem [#allocation8], %s828
          %s831 = ssub.s32 128, 128
          %832 = vsyncadd %s826, %s831
          %s833 = smul.addr %s47, 128
          %s834 = scalar_lea.hbm %s3, %s833
          %s836 = sshll.u32 %s829, 4
          %s837 = int_to_ptr.vmem [resolvable:$true] %s836
          %839 = dma.hbm_to_vmem [thread:$0]  %s834, 128, %s837, %s826
        $region112: #{tpu_custom_call.1} parent=95 // pred_fallthru
          _
      $region96: #{tpu_custom_call.1} parent=5 // pred_fallthru
        _
      %p840 = scmp.le.s32.totalorder 1, %s47
      %p841 = scmp.lt.s32.totalorder %s47, 3
      %p842 = pnand %p840, %p841
      %p843 = pneg %p842
      // Predicated region
      $region113: #{tpu_custom_call.1} parent=5 // pred_check
        _
      $region114: #{tpu_custom_call.1} parent=5 // pred_check_branch
        %845 = sbr.rel (%p842) target = $region116
      $region115: #{tpu_custom_call.1} parent=5 // pred_region
        %s846 = ssub.s32 %s47, 1
        %s847 = sand.u32 %s60, 1
        %s848 = scalar_lea.sflag [#allocation3], %s847
        %s849 = sand.u32 %s60, 1
        %s850 = smul.addr %s849, 8
        %s851 = scalar_lea.vmem [#allocation2], %s850
        // Predicated region
        $region117: #{tpu_custom_call.1} parent=115 // pred_check
          %p852 = pneg %p73
        $region118: #{tpu_custom_call.1} parent=115 // pred_check_branch
          %854 = sbr.rel (%p852) target = $region120
        $region119: #{tpu_custom_call.1} parent=115 // pred_region
          %855 = dma.done %s848, 128
        $region120: #{tpu_custom_call.1} parent=115 // pred_fallthru
          _
        %s856 = sand.u32 %s52, 1
        %s857 = scalar_lea.sflag [#allocation6], %s856
        %s858 = sand.u32 %s86, 1
        %s859 = smul.addr %s858, 8
        %s860 = scalar_lea.vmem [#allocation5], %s859
        // Predicated region
        $region121: #{tpu_custom_call.1} parent=115 // pred_check
          %p861 = pneg %p99
        $region122: #{tpu_custom_call.1} parent=115 // pred_check_branch
          %863 = sbr.rel (%p861) target = $region124
        $region123: #{tpu_custom_call.1} parent=115 // pred_region
          %864 = dma.done %s857, 128
        $region124: #{tpu_custom_call.1} parent=115 // pred_fallthru
          _
        %s865 = sand.u32 %s52, 1
        %s866 = scalar_lea.sflag [#allocation6], %s865
        %s867 = sand.u32 %s112, 1
        %s868 = smul.addr %s867, 8
        %s869 = scalar_lea.vmem [#allocation7], %s868
        // Predicated region
        $region125: #{tpu_custom_call.1} parent=115 // pred_check
          %p870 = pneg %p125
        $region126: #{tpu_custom_call.1} parent=115 // pred_check_branch
          %872 = sbr.rel (%p870) target = $region128
        $region127: #{tpu_custom_call.1} parent=115 // pred_region
          %873 = dma.done %s866, 128
        $region128: #{tpu_custom_call.1} parent=115 // pred_fallthru
          _
        %s874 = sand.u32 %s52, 1
        %s875 = scalar_lea.sflag [#allocation9], %s874
        %s876 = sand.u32 %s138, 1
        %s877 = smul.addr %s876, 8
        %s878 = scalar_lea.vmem [#allocation8], %s877
        // Predicated region
        $region129: #{tpu_custom_call.1} parent=115 // pred_check
          %p879 = pneg %p151
        $region130: #{tpu_custom_call.1} parent=115 // pred_check_branch
          %881 = sbr.rel (%p879) target = $region132
        $region131: #{tpu_custom_call.1} parent=115 // pred_region
          %882 = dma.done %s875, 128
        $region132: #{tpu_custom_call.1} parent=115 // pred_fallthru
          _
        // Predicated region
        $region133: #{tpu_custom_call.1} parent=115 // pred_check
          %p883 = pneg %p193
        $region134: #{tpu_custom_call.1} parent=115 // pred_check_branch
          %885 = sbr.rel (%p883) target = $region136
        $region135: #{tpu_custom_call.1} parent=115 // pred_region
          %886 = dma.done [#allocation9], 16
        $region136: #{tpu_custom_call.1} parent=115 // pred_fallthru
          _
        // Predicated region
        $region137: #{tpu_custom_call.1} parent=115 // pred_check
          %p887 = pneg %p235
        $region138: #{tpu_custom_call.1} parent=115 // pred_check_branch
          %889 = sbr.rel (%p887) target = $region140
        $region139: #{tpu_custom_call.1} parent=115 // pred_region
          %890 = dma.done [#allocation12], 16
        $region140: #{tpu_custom_call.1} parent=115 // pred_fallthru
          _
        // Predicated region
        $region141: #{tpu_custom_call.1} parent=115 // pred_check
          %p891 = pneg %p277
        $region142: #{tpu_custom_call.1} parent=115 // pred_check_branch
          %893 = sbr.rel (%p891) target = $region144
        $region143: #{tpu_custom_call.1} parent=115 // pred_region
          %894 = dma.done [#allocation12], 16
        $region144: #{tpu_custom_call.1} parent=115 // pred_fallthru
          _
        // Predicated region
        $region145: #{tpu_custom_call.1} parent=115 // pred_check
          %p895 = pneg %p319
        $region146: #{tpu_custom_call.1} parent=115 // pred_check_branch
          %897 = sbr.rel (%p895) target = $region148
        $region147: #{tpu_custom_call.1} parent=115 // pred_region
          %898 = dma.done [#allocation15], 16
        $region148: #{tpu_custom_call.1} parent=115 // pred_fallthru
          _
        // Predicated region
        $region149: #{tpu_custom_call.1} parent=115 // pred_check
          %p899 = pneg %p340
        $region150: #{tpu_custom_call.1} parent=115 // pred_check_branch
          %901 = sbr.rel (%p899) target = $region152
        $region151: #{tpu_custom_call.1} parent=115 // pred_region
          %902 = dma.done [#allocation15], 512
        $region152: #{tpu_custom_call.1} parent=115 // pred_fallthru
          _
        // Predicated region
        $region153: #{tpu_custom_call.1} parent=115 // pred_check
          %p903 = pneg %p361
        $region154: #{tpu_custom_call.1} parent=115 // pred_check_branch
          %905 = sbr.rel (%p903) target = $region156
        $region155: #{tpu_custom_call.1} parent=115 // pred_region
          %906 = dma.done [#allocation18], 16
        $region156: #{tpu_custom_call.1} parent=115 // pred_fallthru
          _
        // Predicated region
        $region157: #{tpu_custom_call.1} parent=115 // pred_check
          %p907 = pneg %p382
        $region158: #{tpu_custom_call.1} parent=115 // pred_check_branch
          %909 = sbr.rel (%p907) target = $region160
        $region159: #{tpu_custom_call.1} parent=115 // pred_region
          %910 = dma.done [#allocation18], 16
        $region160: #{tpu_custom_call.1} parent=115 // pred_fallthru
          _
        // Predicated region
        $region161: #{tpu_custom_call.1} parent=115 // pred_check
          %p911 = pneg %p403
        $region162: #{tpu_custom_call.1} parent=115 // pred_check_branch
          %913 = sbr.rel (%p911) target = $region164
        $region163: #{tpu_custom_call.1} parent=115 // pred_region
          %914 = dma.done [#allocation21], 16
        $region164: #{tpu_custom_call.1} parent=115 // pred_fallthru
          _
        // Predicated region
        $region165: #{tpu_custom_call.1} parent=115 // pred_check
          %p915 = pneg %p424
        $region166: #{tpu_custom_call.1} parent=115 // pred_check_branch
          %917 = sbr.rel (%p915) target = $region168
        $region167: #{tpu_custom_call.1} parent=115 // pred_region
          %918 = dma.done [#allocation21], 16
        $region168: #{tpu_custom_call.1} parent=115 // pred_fallthru
          _
        // Predicated region
        $region169: #{tpu_custom_call.1} parent=115 // pred_check
          %p919 = pneg %p445
        $region170: #{tpu_custom_call.1} parent=115 // pred_check_branch
          %921 = sbr.rel (%p919) target = $region172
        $region171: #{tpu_custom_call.1} parent=115 // pred_region
          %922 = dma.done [#allocation24], 16
        $region172: #{tpu_custom_call.1} parent=115 // pred_fallthru
          _
        // Predicated region
        $region173: #{tpu_custom_call.1} parent=115 // pred_check
          %p923 = pneg %p508
        $region174: #{tpu_custom_call.1} parent=115 // pred_check_branch
          %925 = sbr.rel (%p923) target = $region176
        $region175: #{tpu_custom_call.1} parent=115 // pred_region
          %926 = dma.done [#allocation24], 512
        $region176: #{tpu_custom_call.1} parent=115 // pred_fallthru
          _
        %s927 = sand.u32 %s60, 1
        %s928 = scalar_lea.sflag [#allocation3], %s927
        %s929 = sand.u32 %s60, 1
        %s930 = smul.addr %s929, 8
        %s931 = scalar_lea.vmem [#allocation2], %s930
        %p932 = pneg %p73
        %p933 = pneg %p70
        %s934 = sand.u32 %s52, 1
        %s935 = scalar_lea.sflag [#allocation6], %s934
        %s936 = sand.u32 %s86, 1
        %s937 = smul.addr %s936, 8
        %s938 = scalar_lea.vmem [#allocation5], %s937
        %p939 = pneg %p99
        %p940 = pneg %p96
        %s941 = sand.u32 %s52, 1
        %s942 = scalar_lea.sflag [#allocation6], %s941
        %s943 = sand.u32 %s112, 1
        %s944 = smul.addr %s943, 8
        %s945 = scalar_lea.vmem [#allocation7], %s944
        %p946 = pneg %p125
        %p947 = pneg %p122
        %s948 = sand.u32 %s52, 1
        %s949 = scalar_lea.sflag [#allocation9], %s948
        %s950 = sand.u32 %s138, 1
        %s951 = smul.addr %s950, 8
        %s952 = scalar_lea.vmem [#allocation8], %s951
        %p953 = pneg %p151
        %p954 = pneg %p148
        %p955 = pneg %p172
        %p956 = pneg %p169
        %p957 = pneg %p193
        %p958 = pneg %p190
        %p959 = pneg %p214
        %p960 = pneg %p211
        %p961 = pneg %p235
        %p962 = pneg %p232
        %p963 = pneg %p256
        %p964 = pneg %p253
        %p965 = pneg %p277
        %p966 = pneg %p274
        %p967 = pneg %p298
        %p968 = pneg %p295
        %p969 = pneg %p319
        %p970 = pneg %p316
        %p971 = pneg %p340
        %p972 = pneg %p337
        %p973 = pneg %p361
        %p974 = pneg %p358
        %p975 = pneg %p382
        %p976 = pneg %p379
        %p977 = pneg %p403
        %p978 = pneg %p400
        %p979 = pneg %p424
        %p980 = pneg %p421
        %p981 = pneg %p445
        %p982 = pneg %p442
        %p983 = pneg %p466
        %p984 = pneg %p463
        %p985 = pneg %p487
        %p986 = pneg %p484
        %p987 = pneg %p508
        %p988 = pneg %p505
        %p989 = pneg %p529
        %p990 = pneg %p526
        %p991 = pneg %p550
        %p992 = pneg %p547
        %p993 = pneg %p571
        %p994 = pneg %p568
        %p995 = pneg %p597
        %p996 = pneg %p594
        %s997 = sand.u32 %s584, 1
        %s998 = scalar_lea.sflag [#allocation4], %s997
        %s999 = sand.u32 %s584, 1
        %s1000 = smul.addr %s999, 8
        %s1001 = scalar_lea.vmem [#allocation26], %s1000
        %v1002 = vld [vmem:[%s851] sm:$0xff]
        %v1003 = vld [vmem:[%s860] sm:$0xff]
        %v1004 = vld [vmem:[%s869] sm:$0xff]
        %vm1005 = vcmp.ne.s32.totalorder %v1004, 0
        %v1006 = vld [vmem:[%s878] sm:$0xff]
        %vm1007 = vcmp.ne.s32.totalorder %v1006, 0
        %v1008 = vld [vmem:[%s4] sm:$0xff]
        %v1009 = vld [vmem:[%s4 + $0x8] sm:$0xff]
        %v1010 = vld [vmem:[%s4 + $0x10] sm:$0xff]
        %v1011 = vld [vmem:[%s4 + $0x18] sm:$0xff]
        %v1012 = vld [vmem:[#allocation10] sm:$0x1]
        %v1014 = vlaneseq
        %v1015 = vshrl.u32 %v1014, 7
        %v1016 = vsub.s32 0, %v1015
        %v1017 = vrot.slane %v1012, %v1016
        %vm1019 = vcmask 261120
        %v1021 = vsel %vm1019, %v1002, 0
        %1023 = vmatprep.subr.mxu0 0.0
        %1024 = vmatpush1.msra.mxu0 %v1008
        %1025 = vmatprep.subr.mxu0 0.0
        %1026 = vmatpush1.msra.mxu0 %v1009
        %1027 = vmatprep.subr.mxu0 0.0
        %1028 = vmatpush1.msra.mxu0 %v1010
        %1029 = vmatprep.subr.mxu0 0.0
        %1030 = vmatpush1.msra.mxu0 %v1011
        %1031 = vmatprep.subr.mxu0 0.0
        %1032 = vmatpush1.msra.mxu0 0.0
        %1033 = vmatprep.subr.mxu0 0.0
        %1034 = vmatpush1.msra.mxu0 0.0
        %1035 = vmatprep.subr.mxu0 0.0
        %1036 = vmatpush1.msra.mxu0 0.0
        %1037 = vmatprep.subr.mxu0 0.0
        %1038 = vmatpush1.msra.mxu0 0.0
        %1039 = vmatprep.subr.mxu0 0.0
        %1040 = vmatpush1.msra.mxu0 0.0
        %1041 = vmatprep.subr.mxu0 0.0
        %1042 = vmatpush1.msra.mxu0 0.0
        %1043 = vmatprep.subr.mxu0 0.0
        %1044 = vmatpush1.msra.mxu0 0.0
        %1045 = vmatprep.subr.mxu0 0.0
        %1046 = vmatpush1.msra.mxu0 0.0
        %1047 = vmatprep.subr.mxu0 0.0
        %1048 = vmatpush1.msra.mxu0 0.0
        %1049 = vmatprep.subr.mxu0 0.0
        %1050 = vmatpush1.msra.mxu0 0.0
        %1051 = vmatprep.subr.mxu0 0.0
        %1052 = vmatpush1.msra.mxu0 0.0
        %1053 = vmatprep.subr.mxu0 0.0
        %1054 = vmatpush1.msra.mxu0 0.0
        %1055 = vmatprep.subr.mxu0 0.0
        %1056 = vmatpush1.msra.mxu0 0.0
        %1057 = vmatprep.subr.mxu0 0.0
        %1058 = vmatpush1.msra.mxu0 0.0
        %1059 = vmatprep.subr.mxu0 0.0
        %1060 = vmatpush1.msra.mxu0 0.0
        %1061 = vmatprep.subr.mxu0 0.0
        %1062 = vmatpush1.msra.mxu0 0.0
        %1063 = vmatprep.subr.mxu0 0.0
        %1064 = vmatpush1.msra.mxu0 0.0
        %1065 = vmatprep.subr.mxu0 0.0
        %1066 = vmatpush1.msra.mxu0 0.0
        %1067 = vmatprep.subr.mxu0 0.0
        %1068 = vmatpush1.msra.mxu0 0.0
        %1069 = vmatprep.subr.mxu0 0.0
        %1070 = vmatpush1.msra.mxu0 0.0
        %1071 = vmatprep.subr.mxu0 0.0
        %1072 = vmatpush1.msra.mxu0 0.0
        %1073 = vmatprep.subr.mxu0 0.0
        %1074 = vmatpush1.msra.mxu0 0.0
        %1075 = vmatprep.subr.mxu0 0.0
        %1076 = vmatpush1.msra.mxu0 0.0
        %1077 = vmatprep.subr.mxu0 0.0
        %1078 = vmatpush1.msra.mxu0 0.0
        %1079 = vmatprep.subr.mxu0 0.0
        %1080 = vmatpush1.msra.mxu0 0.0
        %1081 = vmatprep.subr.mxu0 0.0
        %1082 = vmatpush1.msra.mxu0 0.0
        %1083 = vmatprep.subr.mxu0 0.0
        %1084 = vmatpush1.msra.mxu0 0.0
        %1085 = vmatprep.subr.mxu0 0.0
        %1086 = vmatpush1.msra.mxu0 0.0
        %1087 = vmatprep.mubr.f32.mxu0 0.0
        %1088 = vmatmul.mubr.f32.gmra.mrb[0].mxu0 %v1021
        %v1089 = vpop.f32.mrb[0].mxu0
        %v1090 = vadd.f32 %v1017, %v1089
        %v1091 = vpop.f32.mrb[0].mxu0
        %1092 = vdwg.mxu0
        %1094 = vrot.lane.b32.xlu0 %v1090, 120
        %v1095 = vpop.permute.xlu0 %1094
        %1096 = vrot.lane.b32.xlu0 %v1090, 112
        %v1097 = vpop.permute.xlu0 %1096
        %1098 = vrot.lane.b32.xlu0 %v1090, 104
        %v1099 = vpop.permute.xlu0 %1098
        %1100 = vrot.lane.b32.xlu0 %v1090, 96
        %v1101 = vpop.permute.xlu0 %1100
        %vm1102 = vcmask 64512
        %v1103 = vsel %vm1102, %v1090, 0
        %v1105 = vsel %vm1102, %v1101, 0
        %1107 = vmatprep.subr.mxu0 0.0
        %1108 = vmatpush1.xpose.msra.mxu0 %v1105
        %1109 = vmatprep.subr.mxu0 0.0
        %1110 = vmatpush1.xpose.msra.mxu0 0.0
        %1111 = vmatprep.subr.mxu0 0.0
        %1112 = vmatpush1.xpose.msra.mxu0 0.0
        %1113 = vmatprep.subr.mxu0 0.0
        %1114 = vmatpush1.xpose.msra.mxu0 0.0
        %1115 = vmatprep.subr.mxu0 0.0
        %1116 = vmatpush1.xpose.msra.mxu0 0.0
        %1117 = vmatprep.subr.mxu0 0.0
        %1118 = vmatpush1.xpose.msra.mxu0 0.0
        %1119 = vmatprep.subr.mxu0 0.0
        %1120 = vmatpush1.xpose.msra.mxu0 0.0
        %1121 = vmatprep.subr.mxu0 0.0
        %1122 = vmatpush1.xpose.msra.mxu0 0.0
        %1123 = vmatprep.subr.mxu0 0.0
        %1124 = vmatpush1.xpose.msra.mxu0 0.0
        %1125 = vmatprep.subr.mxu0 0.0
        %1126 = vmatpush1.xpose.msra.mxu0 0.0
        %1127 = vmatprep.subr.mxu0 0.0
        %1128 = vmatpush1.xpose.msra.mxu0 0.0
        %1129 = vmatprep.subr.mxu0 0.0
        %1130 = vmatpush1.xpose.msra.mxu0 0.0
        %1131 = vmatprep.subr.mxu0 0.0
        %1132 = vmatpush1.xpose.msra.mxu0 0.0
        %1133 = vmatprep.subr.mxu0 0.0
        %1134 = vmatpush1.xpose.msra.mxu0 0.0
        %1135 = vmatprep.subr.mxu0 0.0
        %1136 = vmatpush1.xpose.msra.mxu0 0.0
        %1137 = vmatprep.subr.mxu0 0.0
        %1138 = vmatpush1.xpose.msra.mxu0 0.0
        %1139 = vmatprep.subr.mxu0 0.0
        %1140 = vmatpush1.xpose.msra.mxu0 0.0
        %1141 = vmatprep.subr.mxu0 0.0
        %1142 = vmatpush1.xpose.msra.mxu0 0.0
        %1143 = vmatprep.subr.mxu0 0.0
        %1144 = vmatpush1.xpose.msra.mxu0 0.0
        %1145 = vmatprep.subr.mxu0 0.0
        %1146 = vmatpush1.xpose.msra.mxu0 0.0
        %1147 = vmatprep.subr.mxu0 0.0
        %1148 = vmatpush1.xpose.msra.mxu0 0.0
        %1149 = vmatprep.subr.mxu0 0.0
        %1150 = vmatpush1.xpose.msra.mxu0 0.0
        %1151 = vmatprep.subr.mxu0 0.0
        %1152 = vmatpush1.xpose.msra.mxu0 0.0
        %1153 = vmatprep.subr.mxu0 0.0
        %1154 = vmatpush1.xpose.msra.mxu0 0.0
        %1155 = vmatprep.subr.mxu0 0.0
        %1156 = vmatpush1.xpose.msra.mxu0 0.0
        %1157 = vmatprep.subr.mxu0 0.0
        %1158 = vmatpush1.xpose.msra.mxu0 0.0
        %1159 = vmatprep.subr.mxu0 0.0
        %1160 = vmatpush1.xpose.msra.mxu0 0.0
        %1161 = vmatprep.subr.mxu0 0.0
        %1162 = vmatpush1.xpose.msra.mxu0 0.0
        %1163 = vmatprep.subr.mxu0 0.0
        %1164 = vmatpush1.xpose.msra.mxu0 0.0
        %1165 = vmatprep.subr.mxu0 0.0
        %1166 = vmatpush1.xpose.msra.mxu0 0.0
        %1167 = vmatprep.subr.mxu0 0.0
        %1168 = vmatpush1.xpose.msra.mxu0 0.0
        %1169 = vmatprep.subr.mxu0 0.0
        %1170 = vmatpush1.xpose.msra.mxu0 0.0
        %1171 = vmatprep.mubr.f32.mxu0 0.0
        %1172 = vmatmul.mubr.f32.gmra.mrb[0].mxu0 %v1103
        %v1173 = vpop.f32.mrb[0].mxu0
        %v1174 = vadd.f32 0.0, %v1173
        %v1175 = vpop.f32.mrb[0].mxu0
        %1176 = vdwg.mxu0
        %1177 = vrot.lane.b32.xlu0 %v1095, 96
        %v1178 = vpop.permute.xlu0 %1177
        %v1179 = vsel %vm1102, %v1095, 0
        %v1181 = vsel %vm1102, %v1178, 0
        %1183 = vmatprep.subr.mxu0 0.0
        %1184 = vmatpush1.xpose.msra.mxu0 %v1181
        %1185 = vmatprep.subr.mxu0 0.0
        %1186 = vmatpush1.xpose.msra.mxu0 0.0
        %1187 = vmatprep.subr.mxu0 0.0
        %1188 = vmatpush1.xpose.msra.mxu0 0.0
        %1189 = vmatprep.subr.mxu0 0.0
        %1190 = vmatpush1.xpose.msra.mxu0 0.0
        %1191 = vmatprep.subr.mxu0 0.0
        %1192 = vmatpush1.xpose.msra.mxu0 0.0
        %1193 = vmatprep.subr.mxu0 0.0
        %1194 = vmatpush1.xpose.msra.mxu0 0.0
        %1195 = vmatprep.subr.mxu0 0.0
        %1196 = vmatpush1.xpose.msra.mxu0 0.0
        %1197 = vmatprep.subr.mxu0 0.0
        %1198 = vmatpush1.xpose.msra.mxu0 0.0
        %1199 = vmatprep.subr.mxu0 0.0
        %1200 = vmatpush1.xpose.msra.mxu0 0.0
        %1201 = vmatprep.subr.mxu0 0.0
        %1202 = vmatpush1.xpose.msra.mxu0 0.0
        %1203 = vmatprep.subr.mxu0 0.0
        %1204 = vmatpush1.xpose.msra.mxu0 0.0
        %1205 = vmatprep.subr.mxu0 0.0
        %1206 = vmatpush1.xpose.msra.mxu0 0.0
        %1207 = vmatprep.subr.mxu0 0.0
        %1208 = vmatpush1.xpose.msra.mxu0 0.0
        %1209 = vmatprep.subr.mxu0 0.0
        %1210 = vmatpush1.xpose.msra.mxu0 0.0
        %1211 = vmatprep.subr.mxu0 0.0
        %1212 = vmatpush1.xpose.msra.mxu0 0.0
        %1213 = vmatprep.subr.mxu0 0.0
        %1214 = vmatpush1.xpose.msra.mxu0 0.0
        %1215 = vmatprep.subr.mxu0 0.0
        %1216 = vmatpush1.xpose.msra.mxu0 0.0
        %1217 = vmatprep.subr.mxu0 0.0
        %1218 = vmatpush1.xpose.msra.mxu0 0.0
        %1219 = vmatprep.subr.mxu0 0.0
        %1220 = vmatpush1.xpose.msra.mxu0 0.0
        %1221 = vmatprep.subr.mxu0 0.0
        %1222 = vmatpush1.xpose.msra.mxu0 0.0
        %1223 = vmatprep.subr.mxu0 0.0
        %1224 = vmatpush1.xpose.msra.mxu0 0.0
        %1225 = vmatprep.subr.mxu0 0.0
        %1226 = vmatpush1.xpose.msra.mxu0 0.0
        %1227 = vmatprep.subr.mxu0 0.0
        %1228 = vmatpush1.xpose.msra.mxu0 0.0
        %1229 = vmatprep.subr.mxu0 0.0
        %1230 = vmatpush1.xpose.msra.mxu0 0.0
        %1231 = vmatprep.subr.mxu0 0.0
        %1232 = vmatpush1.xpose.msra.mxu0 0.0
        %1233 = vmatprep.subr.mxu0 0.0
        %1234 = vmatpush1.xpose.msra.mxu0 0.0
        %1235 = vmatprep.subr.mxu0 0.0
        %1236 = vmatpush1.xpose.msra.mxu0 0.0
        %1237 = vmatprep.subr.mxu0 0.0
        %1238 = vmatpush1.xpose.msra.mxu0 0.0
        %1239 = vmatprep.subr.mxu0 0.0
        %1240 = vmatpush1.xpose.msra.mxu0 0.0
        %1241 = vmatprep.subr.mxu0 0.0
        %1242 = vmatpush1.xpose.msra.mxu0 0.0
        %1243 = vmatprep.subr.mxu0 0.0
        %1244 = vmatpush1.xpose.msra.mxu0 0.0
        %1245 = vmatprep.subr.mxu0 0.0
        %1246 = vmatpush1.xpose.msra.mxu0 0.0
        %1247 = vmatprep.mubr.f32.mxu0 0.0
        %1248 = vmatmul.mubr.f32.gmra.mrb[0].mxu0 %v1179
        %v1249 = vpop.f32.mrb[0].mxu0
        %v1250 = vadd.f32 0.0, %v1249
        %v1251 = vpop.f32.mrb[0].mxu0
        %1252 = vdwg.mxu0
        %1253 = vrot.lane.b32.xlu0 %v1097, 96
        %v1254 = vpop.permute.xlu0 %1253
        %v1255 = vsel %vm1102, %v1097, 0
        %v1257 = vsel %vm1102, %v1254, 0
        %1259 = vmatprep.subr.mxu0 0.0
        %1260 = vmatpush1.xpose.msra.mxu0 %v1257
        %1261 = vmatprep.subr.mxu0 0.0
        %1262 = vmatpush1.xpose.msra.mxu0 0.0
        %1263 = vmatprep.subr.mxu0 0.0
        %1264 = vmatpush1.xpose.msra.mxu0 0.0
        %1265 = vmatprep.subr.mxu0 0.0
        %1266 = vmatpush1.xpose.msra.mxu0 0.0
        %1267 = vmatprep.subr.mxu0 0.0
        %1268 = vmatpush1.xpose.msra.mxu0 0.0
        %1269 = vmatprep.subr.mxu0 0.0
        %1270 = vmatpush1.xpose.msra.mxu0 0.0
        %1271 = vmatprep.subr.mxu0 0.0
        %1272 = vmatpush1.xpose.msra.mxu0 0.0
        %1273 = vmatprep.subr.mxu0 0.0
        %1274 = vmatpush1.xpose.msra.mxu0 0.0
        %1275 = vmatprep.subr.mxu0 0.0
        %1276 = vmatpush1.xpose.msra.mxu0 0.0
        %1277 = vmatprep.subr.mxu0 0.0
        %1278 = vmatpush1.xpose.msra.mxu0 0.0
        %1279 = vmatprep.subr.mxu0 0.0
        %1280 = vmatpush1.xpose.msra.mxu0 0.0
        %1281 = vmatprep.subr.mxu0 0.0
        %1282 = vmatpush1.xpose.msra.mxu0 0.0
        %1283 = vmatprep.subr.mxu0 0.0
        %1284 = vmatpush1.xpose.msra.mxu0 0.0
        %1285 = vmatprep.subr.mxu0 0.0
        %1286 = vmatpush1.xpose.msra.mxu0 0.0
        %1287 = vmatprep.subr.mxu0 0.0
        %1288 = vmatpush1.xpose.msra.mxu0 0.0
        %1289 = vmatprep.subr.mxu0 0.0
        %1290 = vmatpush1.xpose.msra.mxu0 0.0
        %1291 = vmatprep.subr.mxu0 0.0
        %1292 = vmatpush1.xpose.msra.mxu0 0.0
        %1293 = vmatprep.subr.mxu0 0.0
        %1294 = vmatpush1.xpose.msra.mxu0 0.0
        %1295 = vmatprep.subr.mxu0 0.0
        %1296 = vmatpush1.xpose.msra.mxu0 0.0
        %1297 = vmatprep.subr.mxu0 0.0
        %1298 = vmatpush1.xpose.msra.mxu0 0.0
        %1299 = vmatprep.subr.mxu0 0.0
        %1300 = vmatpush1.xpose.msra.mxu0 0.0
        %1301 = vmatprep.subr.mxu0 0.0
        %1302 = vmatpush1.xpose.msra.mxu0 0.0
        %1303 = vmatprep.subr.mxu0 0.0
        %1304 = vmatpush1.xpose.msra.mxu0 0.0
        %1305 = vmatprep.subr.mxu0 0.0
        %1306 = vmatpush1.xpose.msra.mxu0 0.0
        %1307 = vmatprep.subr.mxu0 0.0
        %1308 = vmatpush1.xpose.msra.mxu0 0.0
        %1309 = vmatprep.subr.mxu0 0.0
        %1310 = vmatpush1.xpose.msra.mxu0 0.0
        %1311 = vmatprep.subr.mxu0 0.0
        %1312 = vmatpush1.xpose.msra.mxu0 0.0
        %1313 = vmatprep.subr.mxu0 0.0
        %1314 = vmatpush1.xpose.msra.mxu0 0.0
        %1315 = vmatprep.subr.mxu0 0.0
        %1316 = vmatpush1.xpose.msra.mxu0 0.0
        %1317 = vmatprep.subr.mxu0 0.0
        %1318 = vmatpush1.xpose.msra.mxu0 0.0
        %1319 = vmatprep.subr.mxu0 0.0
        %1320 = vmatpush1.xpose.msra.mxu0 0.0
        %1321 = vmatprep.subr.mxu0 0.0
        %1322 = vmatpush1.xpose.msra.mxu0 0.0
        %1323 = vmatprep.mubr.f32.mxu0 0.0
        %1324 = vmatmul.mubr.f32.gmra.mrb[0].mxu0 %v1255
        %v1325 = vpop.f32.mrb[0].mxu0
        %v1326 = vadd.f32 0.0, %v1325
        %v1327 = vpop.f32.mrb[0].mxu0
        %1328 = vdwg.mxu0
        %1329 = vrot.lane.b32.xlu0 %v1099, 96
        %v1330 = vpop.permute.xlu0 %1329
        %v1331 = vsel %vm1102, %v1099, 0
        %v1333 = vsel %vm1102, %v1330, 0
        %1335 = vmatprep.subr.mxu0 0.0
        %1336 = vmatpush1.xpose.msra.mxu0 %v1333
        %1337 = vmatprep.subr.mxu0 0.0
        %1338 = vmatpush1.xpose.msra.mxu0 0.0
        %1339 = vmatprep.subr.mxu0 0.0
        %1340 = vmatpush1.xpose.msra.mxu0 0.0
        %1341 = vmatprep.subr.mxu0 0.0
        %1342 = vmatpush1.xpose.msra.mxu0 0.0
        %1343 = vmatprep.subr.mxu0 0.0
        %1344 = vmatpush1.xpose.msra.mxu0 0.0
        %1345 = vmatprep.subr.mxu0 0.0
        %1346 = vmatpush1.xpose.msra.mxu0 0.0
        %1347 = vmatprep.subr.mxu0 0.0
        %1348 = vmatpush1.xpose.msra.mxu0 0.0
        %1349 = vmatprep.subr.mxu0 0.0
        %1350 = vmatpush1.xpose.msra.mxu0 0.0
        %1351 = vmatprep.subr.mxu0 0.0
        %1352 = vmatpush1.xpose.msra.mxu0 0.0
        %1353 = vmatprep.subr.mxu0 0.0
        %1354 = vmatpush1.xpose.msra.mxu0 0.0
        %1355 = vmatprep.subr.mxu0 0.0
        %1356 = vmatpush1.xpose.msra.mxu0 0.0
        %1357 = vmatprep.subr.mxu0 0.0
        %1358 = vmatpush1.xpose.msra.mxu0 0.0
        %1359 = vmatprep.subr.mxu0 0.0
        %1360 = vmatpush1.xpose.msra.mxu0 0.0
        %1361 = vmatprep.subr.mxu0 0.0
        %1362 = vmatpush1.xpose.msra.mxu0 0.0
        %1363 = vmatprep.subr.mxu0 0.0
        %1364 = vmatpush1.xpose.msra.mxu0 0.0
        %1365 = vmatprep.subr.mxu0 0.0
        %1366 = vmatpush1.xpose.msra.mxu0 0.0
        %1367 = vmatprep.subr.mxu0 0.0
        %1368 = vmatpush1.xpose.msra.mxu0 0.0
        %1369 = vmatprep.subr.mxu0 0.0
        %1370 = vmatpush1.xpose.msra.mxu0 0.0
        %1371 = vmatprep.subr.mxu0 0.0
        %1372 = vmatpush1.xpose.msra.mxu0 0.0
        %1373 = vmatprep.subr.mxu0 0.0
        %1374 = vmatpush1.xpose.msra.mxu0 0.0
        %1375 = vmatprep.subr.mxu0 0.0
        %1376 = vmatpush1.xpose.msra.mxu0 0.0
        %1377 = vmatprep.subr.mxu0 0.0
        %1378 = vmatpush1.xpose.msra.mxu0 0.0
        %1379 = vmatprep.subr.mxu0 0.0
        %1380 = vmatpush1.xpose.msra.mxu0 0.0
        %1381 = vmatprep.subr.mxu0 0.0
        %1382 = vmatpush1.xpose.msra.mxu0 0.0
        %1383 = vmatprep.subr.mxu0 0.0
        %1384 = vmatpush1.xpose.msra.mxu0 0.0
        %1385 = vmatprep.subr.mxu0 0.0
        %1386 = vmatpush1.xpose.msra.mxu0 0.0
        %1387 = vmatprep.subr.mxu0 0.0
        %1388 = vmatpush1.xpose.msra.mxu0 0.0
        %1389 = vmatprep.subr.mxu0 0.0
        %1390 = vmatpush1.xpose.msra.mxu0 0.0
        %1391 = vmatprep.subr.mxu0 0.0
        %1392 = vmatpush1.xpose.msra.mxu0 0.0
        %1393 = vmatprep.subr.mxu0 0.0
        %1394 = vmatpush1.xpose.msra.mxu0 0.0
        %1395 = vmatprep.subr.mxu0 0.0
        %1396 = vmatpush1.xpose.msra.mxu0 0.0
        %1397 = vmatprep.subr.mxu0 0.0
        %1398 = vmatpush1.xpose.msra.mxu0 0.0
        %1399 = vmatprep.mubr.f32.mxu0 0.0
        %1400 = vmatmul.mubr.f32.gmra.mrb[0].mxu0 %v1331
        %v1401 = vpop.f32.mrb[0].mxu0
        %v1402 = vadd.f32 0.0, %v1401
        %v1403 = vpop.f32.mrb[0].mxu0
        %1404 = vdwg.mxu0
        %v1405 = vsel %vm1005, 1, 0
        %vm1406 = vcmp.eq.s32.totalorder %v1405, 1
        %v1407 = vsel %vm1406, -10000.0, %v1174
        %v1408 = vsel %vm1406, -10000.0, %v1250
        %v1409 = vsel %vm1406, -10000.0, %v1326
        %v1410 = vsel %vm1406, -10000.0, %v1402
        %v1411 = vsel %vm1102, %v1407, -inf
        %1412 = vmax.xlane.f32.xlu0 %v1411
        %v1413 = vpop.xlane.xlu0 %1412
        %v1414 = vsel %vm1102, %v1408, -inf
        %1415 = vmax.xlane.f32.xlu0 %v1414
        %v1416 = vpop.xlane.xlu0 %1415
        %v1417 = vsel %vm1102, %v1409, -inf
        %1418 = vmax.xlane.f32.xlu0 %v1417
        %v1419 = vpop.xlane.xlu0 %1418
        %v1420 = vsel %vm1102, %v1410, -inf
        %1421 = vmax.xlane.f32.xlu0 %v1420
        %v1422 = vpop.xlane.xlu0 %1421
        %v1423 = vsub.f32 %v1407, %v1413
        %v1424 = vsub.f32 %v1408, %v1416
        %v1425 = vsub.f32 %v1409, %v1419
        %v1426 = vsub.f32 %v1410, %v1422
        %v1427 = vmul.f32 %v1423, 1.442695
        %v1428 = vpow.pop %v1427
        %v1429 = vmul.f32 %v1424, 1.442695
        %v1430 = vpow.pop %v1429
        %v1431 = vmul.f32 %v1425, 1.442695
        %v1432 = vpow.pop %v1431
        %v1433 = vmul.f32 %v1426, 1.442695
        %v1434 = vpow.pop %v1433
        %v1435 = vsel %vm1102, %v1428, 0.0
        %1436 = vadd.xlane.f32.xlu0 %v1435
        %v1437 = vpop.xlane.xlu0 %1436
        %v1438 = vsel %vm1102, %v1430, 0.0
        %1439 = vadd.xlane.f32.xlu0 %v1438
        %v1440 = vpop.xlane.xlu0 %1439
        %v1441 = vsel %vm1102, %v1432, 0.0
        %1442 = vadd.xlane.f32.xlu0 %v1441
        %v1443 = vpop.xlane.xlu0 %1442
        %v1444 = vsel %vm1102, %v1434, 0.0
        %1445 = vadd.xlane.f32.xlu0 %v1444
        %v1446 = vpop.xlane.xlu0 %1445
        %v1447 = vrcp.pop %v1437
        %v1448 = vrcp.pop %v1440
        %v1449 = vrcp.pop %v1443
        %v1450 = vrcp.pop %v1446
        %v1451 = vmul.f32 %v1428, %v1447
        %v1452 = vmul.f32 %v1430, %v1448
        %v1453 = vmul.f32 %v1432, %v1449
        %v1454 = vmul.f32 %v1434, %v1450
        %1455 = vrot.lane.b32.xlu0 %v1090, 64
        %v1456 = vpop.permute.xlu0 %1455
        %v1459 = vsel %vm1102, %v1451, 0
        %1461 = vmatprep.subr.mxu0 0.0
        %1462 = vmatpush1.msra.mxu0 %v1456
        %1463 = vmatprep.subr.mxu0 0.0
        %1464 = vmatpush1.msra.mxu0 0.0
        %1465 = vmatprep.subr.mxu0 0.0
        %1466 = vmatpush1.msra.mxu0 0.0
        %1467 = vmatprep.subr.mxu0 0.0
        %1468 = vmatpush1.msra.mxu0 0.0
        %1469 = vmatprep.subr.mxu0 0.0
        %1470 = vmatpush1.msra.mxu0 0.0
        %1471 = vmatprep.subr.mxu0 0.0
        %1472 = vmatpush1.msra.mxu0 0.0
        %1473 = vmatprep.subr.mxu0 0.0
        %1474 = vmatpush1.msra.mxu0 0.0
        %1475 = vmatprep.subr.mxu0 0.0
        %1476 = vmatpush1.msra.mxu0 0.0
        %1477 = vmatprep.subr.mxu0 0.0
        %1478 = vmatpush1.msra.mxu0 0.0
        %1479 = vmatprep.subr.mxu0 0.0
        %1480 = vmatpush1.msra.mxu0 0.0
        %1481 = vmatprep.subr.mxu0 0.0
        %1482 = vmatpush1.msra.mxu0 0.0
        %1483 = vmatprep.subr.mxu0 0.0
        %1484 = vmatpush1.msra.mxu0 0.0
        %1485 = vmatprep.subr.mxu0 0.0
        %1486 = vmatpush1.msra.mxu0 0.0
        %1487 = vmatprep.subr.mxu0 0.0
        %1488 = vmatpush1.msra.mxu0 0.0
        %1489 = vmatprep.subr.mxu0 0.0
        %1490 = vmatpush1.msra.mxu0 0.0
        %1491 = vmatprep.subr.mxu0 0.0
        %1492 = vmatpush1.msra.mxu0 0.0
        %1493 = vmatprep.subr.mxu0 0.0
        %1494 = vmatpush1.msra.mxu0 0.0
        %1495 = vmatprep.subr.mxu0 0.0
        %1496 = vmatpush1.msra.mxu0 0.0
        %1497 = vmatprep.subr.mxu0 0.0
        %1498 = vmatpush1.msra.mxu0 0.0
        %1499 = vmatprep.subr.mxu0 0.0
        %1500 = vmatpush1.msra.mxu0 0.0
        %1501 = vmatprep.subr.mxu0 0.0
        %1502 = vmatpush1.msra.mxu0 0.0
        %1503 = vmatprep.subr.mxu0 0.0
        %1504 = vmatpush1.msra.mxu0 0.0
        %1505 = vmatprep.subr.mxu0 0.0
        %1506 = vmatpush1.msra.mxu0 0.0
        %1507 = vmatprep.subr.mxu0 0.0
        %1508 = vmatpush1.msra.mxu0 0.0
        %1509 = vmatprep.subr.mxu0 0.0
        %1510 = vmatpush1.msra.mxu0 0.0
        %1511 = vmatprep.subr.mxu0 0.0
        %1512 = vmatpush1.msra.mxu0 0.0
        %1513 = vmatprep.subr.mxu0 0.0
        %1514 = vmatpush1.msra.mxu0 0.0
        %1515 = vmatprep.subr.mxu0 0.0
        %1516 = vmatpush1.msra.mxu0 0.0
        %1517 = vmatprep.subr.mxu0 0.0
        %1518 = vmatpush1.msra.mxu0 0.0
        %1519 = vmatprep.subr.mxu0 0.0
        %1520 = vmatpush1.msra.mxu0 0.0
        %1521 = vmatprep.subr.mxu0 0.0
        %1522 = vmatpush1.msra.mxu0 0.0
        %1523 = vmatprep.subr.mxu0 0.0
        %1524 = vmatpush1.msra.mxu0 0.0
        %1525 = vmatprep.mubr.f32.mxu0 0.0
        %1526 = vmatmul.mubr.f32.gmra.mrb[0].mxu0 %v1459
        %v1527 = vpop.f32.mrb[0].mxu0
        %v1528 = vadd.f32 0.0, %v1527
        %v1529 = vpop.f32.mrb[0].mxu0
        %1530 = vdwg.mxu0
        %1531 = vrot.lane.b32.xlu0 %v1095, 64
        %v1532 = vpop.permute.xlu0 %1531
        %v1535 = vsel %vm1102, %v1452, 0
        %1537 = vmatprep.subr.mxu0 0.0
        %1538 = vmatpush1.msra.mxu0 %v1532
        %1539 = vmatprep.subr.mxu0 0.0
        %1540 = vmatpush1.msra.mxu0 0.0
        %1541 = vmatprep.subr.mxu0 0.0
        %1542 = vmatpush1.msra.mxu0 0.0
        %1543 = vmatprep.subr.mxu0 0.0
        %1544 = vmatpush1.msra.mxu0 0.0
        %1545 = vmatprep.subr.mxu0 0.0
        %1546 = vmatpush1.msra.mxu0 0.0
        %1547 = vmatprep.subr.mxu0 0.0
        %1548 = vmatpush1.msra.mxu0 0.0
        %1549 = vmatprep.subr.mxu0 0.0
        %1550 = vmatpush1.msra.mxu0 0.0
        %1551 = vmatprep.subr.mxu0 0.0
        %1552 = vmatpush1.msra.mxu0 0.0
        %1553 = vmatprep.subr.mxu0 0.0
        %1554 = vmatpush1.msra.mxu0 0.0
        %1555 = vmatprep.subr.mxu0 0.0
        %1556 = vmatpush1.msra.mxu0 0.0
        %1557 = vmatprep.subr.mxu0 0.0
        %1558 = vmatpush1.msra.mxu0 0.0
        %1559 = vmatprep.subr.mxu0 0.0
        %1560 = vmatpush1.msra.mxu0 0.0
        %1561 = vmatprep.subr.mxu0 0.0
        %1562 = vmatpush1.msra.mxu0 0.0
        %1563 = vmatprep.subr.mxu0 0.0
        %1564 = vmatpush1.msra.mxu0 0.0
        %1565 = vmatprep.subr.mxu0 0.0
        %1566 = vmatpush1.msra.mxu0 0.0
        %1567 = vmatprep.subr.mxu0 0.0
        %1568 = vmatpush1.msra.mxu0 0.0
        %1569 = vmatprep.subr.mxu0 0.0
        %1570 = vmatpush1.msra.mxu0 0.0
        %1571 = vmatprep.subr.mxu0 0.0
        %1572 = vmatpush1.msra.mxu0 0.0
        %1573 = vmatprep.subr.mxu0 0.0
        %1574 = vmatpush1.msra.mxu0 0.0
        %1575 = vmatprep.subr.mxu0 0.0
        %1576 = vmatpush1.msra.mxu0 0.0
        %1577 = vmatprep.subr.mxu0 0.0
        %1578 = vmatpush1.msra.mxu0 0.0
        %1579 = vmatprep.subr.mxu0 0.0
        %1580 = vmatpush1.msra.mxu0 0.0
        %1581 = vmatprep.subr.mxu0 0.0
        %1582 = vmatpush1.msra.mxu0 0.0
        %1583 = vmatprep.subr.mxu0 0.0
        %1584 = vmatpush1.msra.mxu0 0.0
        %1585 = vmatprep.subr.mxu0 0.0
        %1586 = vmatpush1.msra.mxu0 0.0
        %1587 = vmatprep.subr.mxu0 0.0
        %1588 = vmatpush1.msra.mxu0 0.0
        %1589 = vmatprep.subr.mxu0 0.0
        %1590 = vmatpush1.msra.mxu0 0.0
        %1591 = vmatprep.subr.mxu0 0.0
        %1592 = vmatpush1.msra.mxu0 0.0
        %1593 = vmatprep.subr.mxu0 0.0
        %1594 = vmatpush1.msra.mxu0 0.0
        %1595 = vmatprep.subr.mxu0 0.0
        %1596 = vmatpush1.msra.mxu0 0.0
        %1597 = vmatprep.subr.mxu0 0.0
        %1598 = vmatpush1.msra.mxu0 0.0
        %1599 = vmatprep.subr.mxu0 0.0
        %1600 = vmatpush1.msra.mxu0 0.0
        %1601 = vmatprep.mubr.f32.mxu0 0.0
        %1602 = vmatmul.mubr.f32.gmra.mrb[0].mxu0 %v1535
        %v1603 = vpop.f32.mrb[0].mxu0
        %v1604 = vadd.f32 0.0, %v1603
        %v1605 = vpop.f32.mrb[0].mxu0
        %1606 = vdwg.mxu0
        %1607 = vrot.lane.b32.xlu0 %v1097, 64
        %v1608 = vpop.permute.xlu0 %1607
        %v1611 = vsel %vm1102, %v1453, 0
        %1613 = vmatprep.subr.mxu0 0.0
        %1614 = vmatpush1.msra.mxu0 %v1608
        %1615 = vmatprep.subr.mxu0 0.0
        %1616 = vmatpush1.msra.mxu0 0.0
        %1617 = vmatprep.subr.mxu0 0.0
        %1618 = vmatpush1.msra.mxu0 0.0
        %1619 = vmatprep.subr.mxu0 0.0
        %1620 = vmatpush1.msra.mxu0 0.0
        %1621 = vmatprep.subr.mxu0 0.0
        %1622 = vmatpush1.msra.mxu0 0.0
        %1623 = vmatprep.subr.mxu0 0.0
        %1624 = vmatpush1.msra.mxu0 0.0
        %1625 = vmatprep.subr.mxu0 0.0
        %1626 = vmatpush1.msra.mxu0 0.0
        %1627 = vmatprep.subr.mxu0 0.0
        %1628 = vmatpush1.msra.mxu0 0.0
        %1629 = vmatprep.subr.mxu0 0.0
        %1630 = vmatpush1.msra.mxu0 0.0
        %1631 = vmatprep.subr.mxu0 0.0
        %1632 = vmatpush1.msra.mxu0 0.0
        %1633 = vmatprep.subr.mxu0 0.0
        %1634 = vmatpush1.msra.mxu0 0.0
        %1635 = vmatprep.subr.mxu0 0.0
        %1636 = vmatpush1.msra.mxu0 0.0
        %1637 = vmatprep.subr.mxu0 0.0
        %1638 = vmatpush1.msra.mxu0 0.0
        %1639 = vmatprep.subr.mxu0 0.0
        %1640 = vmatpush1.msra.mxu0 0.0
        %1641 = vmatprep.subr.mxu0 0.0
        %1642 = vmatpush1.msra.mxu0 0.0
        %1643 = vmatprep.subr.mxu0 0.0
        %1644 = vmatpush1.msra.mxu0 0.0
        %1645 = vmatprep.subr.mxu0 0.0
        %1646 = vmatpush1.msra.mxu0 0.0
        %1647 = vmatprep.subr.mxu0 0.0
        %1648 = vmatpush1.msra.mxu0 0.0
        %1649 = vmatprep.subr.mxu0 0.0
        %1650 = vmatpush1.msra.mxu0 0.0
        %1651 = vmatprep.subr.mxu0 0.0
        %1652 = vmatpush1.msra.mxu0 0.0
        %1653 = vmatprep.subr.mxu0 0.0
        %1654 = vmatpush1.msra.mxu0 0.0
        %1655 = vmatprep.subr.mxu0 0.0
        %1656 = vmatpush1.msra.mxu0 0.0
        %1657 = vmatprep.subr.mxu0 0.0
        %1658 = vmatpush1.msra.mxu0 0.0
        %1659 = vmatprep.subr.mxu0 0.0
        %1660 = vmatpush1.msra.mxu0 0.0
        %1661 = vmatprep.subr.mxu0 0.0
        %1662 = vmatpush1.msra.mxu0 0.0
        %1663 = vmatprep.subr.mxu0 0.0
        %1664 = vmatpush1.msra.mxu0 0.0
        %1665 = vmatprep.subr.mxu0 0.0
        %1666 = vmatpush1.msra.mxu0 0.0
        %1667 = vmatprep.subr.mxu0 0.0
        %1668 = vmatpush1.msra.mxu0 0.0
        %1669 = vmatprep.subr.mxu0 0.0
        %1670 = vmatpush1.msra.mxu0 0.0
        %1671 = vmatprep.subr.mxu0 0.0
        %1672 = vmatpush1.msra.mxu0 0.0
        %1673 = vmatprep.subr.mxu0 0.0
        %1674 = vmatpush1.msra.mxu0 0.0
        %1675 = vmatprep.subr.mxu0 0.0
        %1676 = vmatpush1.msra.mxu0 0.0
        %1677 = vmatprep.mubr.f32.mxu0 0.0
        %1678 = vmatmul.mubr.f32.gmra.mrb[0].mxu0 %v1611
        %v1679 = vpop.f32.mrb[0].mxu0
        %v1680 = vadd.f32 0.0, %v1679
        %v1681 = vpop.f32.mrb[0].mxu0
        %1682 = vdwg.mxu0
        %1683 = vrot.lane.b32.xlu0 %v1099, 64
        %v1684 = vpop.permute.xlu0 %1683
        %v1687 = vsel %vm1102, %v1454, 0
        %1689 = vmatprep.subr.mxu0 0.0
        %1690 = vmatpush1.msra.mxu0 %v1684
        %1691 = vmatprep.subr.mxu0 0.0
        %1692 = vmatpush1.msra.mxu0 0.0
        %1693 = vmatprep.subr.mxu0 0.0
        %1694 = vmatpush1.msra.mxu0 0.0
        %1695 = vmatprep.subr.mxu0 0.0
        %1696 = vmatpush1.msra.mxu0 0.0
        %1697 = vmatprep.subr.mxu0 0.0
        %1698 = vmatpush1.msra.mxu0 0.0
        %1699 = vmatprep.subr.mxu0 0.0
        %1700 = vmatpush1.msra.mxu0 0.0
        %1701 = vmatprep.subr.mxu0 0.0
        %1702 = vmatpush1.msra.mxu0 0.0
        %1703 = vmatprep.subr.mxu0 0.0
        %1704 = vmatpush1.msra.mxu0 0.0
        %1705 = vmatprep.subr.mxu0 0.0
        %1706 = vmatpush1.msra.mxu0 0.0
        %1707 = vmatprep.subr.mxu0 0.0
        %1708 = vmatpush1.msra.mxu0 0.0
        %1709 = vmatprep.subr.mxu0 0.0
        %1710 = vmatpush1.msra.mxu0 0.0
        %1711 = vmatprep.subr.mxu0 0.0
        %1712 = vmatpush1.msra.mxu0 0.0
        %1713 = vmatprep.subr.mxu0 0.0
        %1714 = vmatpush1.msra.mxu0 0.0
        %1715 = vmatprep.subr.mxu0 0.0
        %1716 = vmatpush1.msra.mxu0 0.0
        %1717 = vmatprep.subr.mxu0 0.0
        %1718 = vmatpush1.msra.mxu0 0.0
        %1719 = vmatprep.subr.mxu0 0.0
        %1720 = vmatpush1.msra.mxu0 0.0
        %1721 = vmatprep.subr.mxu0 0.0
        %1722 = vmatpush1.msra.mxu0 0.0
        %1723 = vmatprep.subr.mxu0 0.0
        %1724 = vmatpush1.msra.mxu0 0.0
        %1725 = vmatprep.subr.mxu0 0.0
        %1726 = vmatpush1.msra.mxu0 0.0
        %1727 = vmatprep.subr.mxu0 0.0
        %1728 = vmatpush1.msra.mxu0 0.0
        %1729 = vmatprep.subr.mxu0 0.0
        %1730 = vmatpush1.msra.mxu0 0.0
        %1731 = vmatprep.subr.mxu0 0.0
        %1732 = vmatpush1.msra.mxu0 0.0
        %1733 = vmatprep.subr.mxu0 0.0
        %1734 = vmatpush1.msra.mxu0 0.0
        %1735 = vmatprep.subr.mxu0 0.0
        %1736 = vmatpush1.msra.mxu0 0.0
        %1737 = vmatprep.subr.mxu0 0.0
        %1738 = vmatpush1.msra.mxu0 0.0
        %1739 = vmatprep.subr.mxu0 0.0
        %1740 = vmatpush1.msra.mxu0 0.0
        %1741 = vmatprep.subr.mxu0 0.0
        %1742 = vmatpush1.msra.mxu0 0.0
        %1743 = vmatprep.subr.mxu0 0.0
        %1744 = vmatpush1.msra.mxu0 0.0
        %1745 = vmatprep.subr.mxu0 0.0
        %1746 = vmatpush1.msra.mxu0 0.0
        %1747 = vmatprep.subr.mxu0 0.0
        %1748 = vmatpush1.msra.mxu0 0.0
        %1749 = vmatprep.subr.mxu0 0.0
        %1750 = vmatpush1.msra.mxu0 0.0
        %1751 = vmatprep.subr.mxu0 0.0
        %1752 = vmatpush1.msra.mxu0 0.0
        %1753 = vmatprep.mubr.f32.mxu0 0.0
        %1754 = vmatmul.mubr.f32.gmra.mrb[0].mxu0 %v1687
        %v1755 = vpop.f32.mrb[0].mxu0
        %v1756 = vadd.f32 0.0, %v1755
        %v1757 = vpop.f32.mrb[0].mxu0
        %1758 = vdwg.mxu0
        %1760 = vrot.lane.b32.xlu0 %v1604, 8
        %v1761 = vpop.permute.xlu0 %1760
        %1764 = vrot.lane.b32.xlu0 %v1680, 16
        %v1765 = vpop.permute.xlu0 %1764
        %1768 = vrot.lane.b32.xlu0 %v1756, 24
        %v1769 = vpop.permute.xlu0 %1768
        %v1771 = vsel %vm1102, %v1528, %v1761
        %vm1772 = vcmask 130048
        %v1773 = vsel %vm1772, %v1771, %v1765
        %vm1774 = vcmask 195584
        %v1775 = vsel %vm1774, %v1773, %v1769
        %v1776 = vld [vmem:[%s6] sm:$0xff]
        %v1777 = vld [vmem:[%s6 + $0x8] sm:$0xff]
        %v1778 = vld [vmem:[%s6 + $0x10] sm:$0xff]
        %v1779 = vld [vmem:[%s6 + $0x18] sm:$0xff]
        %v1780 = vld [vmem:[#allocation11] sm:$0x1]
        %v1782 = vlaneseq
        %v1783 = vshrl.u32 %v1782, 7
        %v1784 = vsub.s32 0, %v1783
        %v1785 = vrot.slane %v1780, %v1784
        %v1788 = vsel %vm1019, %v1775, 0
        %1790 = vmatprep.subr.mxu0 0.0
        %1791 = vmatpush1.msra.mxu0 %v1776
        %1792 = vmatprep.subr.mxu0 0.0
        %1793 = vmatpush1.msra.mxu0 %v1777
        %1794 = vmatprep.subr.mxu0 0.0
        %1795 = vmatpush1.msra.mxu0 %v1778
        %1796 = vmatprep.subr.mxu0 0.0
        %1797 = vmatpush1.msra.mxu0 %v1779
        %1798 = vmatprep.subr.mxu0 0.0
        %1799 = vmatpush1.msra.mxu0 0.0
        %1800 = vmatprep.subr.mxu0 0.0
        %1801 = vmatpush1.msra.mxu0 0.0
        %1802 = vmatprep.subr.mxu0 0.0
        %1803 = vmatpush1.msra.mxu0 0.0
        %1804 = vmatprep.subr.mxu0 0.0
        %1805 = vmatpush1.msra.mxu0 0.0
        %1806 = vmatprep.subr.mxu0 0.0
        %1807 = vmatpush1.msra.mxu0 0.0
        %1808 = vmatprep.subr.mxu0 0.0
        %1809 = vmatpush1.msra.mxu0 0.0
        %1810 = vmatprep.subr.mxu0 0.0
        %1811 = vmatpush1.msra.mxu0 0.0
        %1812 = vmatprep.subr.mxu0 0.0
        %1813 = vmatpush1.msra.mxu0 0.0
        %1814 = vmatprep.subr.mxu0 0.0
        %1815 = vmatpush1.msra.mxu0 0.0
        %1816 = vmatprep.subr.mxu0 0.0
        %1817 = vmatpush1.msra.mxu0 0.0
        %1818 = vmatprep.subr.mxu0 0.0
        %1819 = vmatpush1.msra.mxu0 0.0
        %1820 = vmatprep.subr.mxu0 0.0
        %1821 = vmatpush1.msra.mxu0 0.0
        %1822 = vmatprep.subr.mxu0 0.0
        %1823 = vmatpush1.msra.mxu0 0.0
        %1824 = vmatprep.subr.mxu0 0.0
        %1825 = vmatpush1.msra.mxu0 0.0
        %1826 = vmatprep.subr.mxu0 0.0
        %1827 = vmatpush1.msra.mxu0 0.0
        %1828 = vmatprep.subr.mxu0 0.0
        %1829 = vmatpush1.msra.mxu0 0.0
        %1830 = vmatprep.subr.mxu0 0.0
        %1831 = vmatpush1.msra.mxu0 0.0
        %1832 = vmatprep.subr.mxu0 0.0
        %1833 = vmatpush1.msra.mxu0 0.0
        %1834 = vmatprep.subr.mxu0 0.0
        %1835 = vmatpush1.msra.mxu0 0.0
        %1836 = vmatprep.subr.mxu0 0.0
        %1837 = vmatpush1.msra.mxu0 0.0
        %1838 = vmatprep.subr.mxu0 0.0
        %1839 = vmatpush1.msra.mxu0 0.0
        %1840 = vmatprep.subr.mxu0 0.0
        %1841 = vmatpush1.msra.mxu0 0.0
        %1842 = vmatprep.subr.mxu0 0.0
        %1843 = vmatpush1.msra.mxu0 0.0
        %1844 = vmatprep.subr.mxu0 0.0
        %1845 = vmatpush1.msra.mxu0 0.0
        %1846 = vmatprep.subr.mxu0 0.0
        %1847 = vmatpush1.msra.mxu0 0.0
        %1848 = vmatprep.subr.mxu0 0.0
        %1849 = vmatpush1.msra.mxu0 0.0
        %1850 = vmatprep.subr.mxu0 0.0
        %1851 = vmatpush1.msra.mxu0 0.0
        %1852 = vmatprep.subr.mxu0 0.0
        %1853 = vmatpush1.msra.mxu0 0.0
        %1854 = vmatprep.mubr.f32.mxu0 0.0
        %1855 = vmatmul.mubr.f32.gmra.mrb[0].mxu0 %v1788
        %v1856 = vpop.f32.mrb[0].mxu0
        %v1857 = vadd.f32 %v1785, %v1856
        %v1858 = vpop.f32.mrb[0].mxu0
        %1859 = vdwg.mxu0
        %v1860 = vadd.f32 %v1002, %v1857
        %v1861 = vld [vmem:[#allocation19] sm:$0x1]
        %v1862 = vld [vmem:[#allocation20] sm:$0x1]
        %v1863 = vsel %vm1019, %v1860, 0.0
        %1864 = vadd.xlane.f32.xlu0 %v1863
        %v1865 = vpop.xlane.xlu0 %1864
        %v1866 = vrcp.pop 32.0
        %v1867 = vmul.f32 %v1865, %v1866
        %v1868 = vsub.f32 %v1860, %v1867
        %v1869 = vmul.f32 %v1868, %v1868
        %v1870 = vsel %vm1019, %v1869, 0.0
        %1871 = vadd.xlane.f32.xlu0 %v1870
        %v1872 = vpop.xlane.xlu0 %1871
        %v1873 = vmul.f32 %v1872, %v1866
        %v1874 = vadd.f32 %v1873, 1e-05
        %v1875 = vrsqrt.pop %v1874
        %v1876 = vmul.f32 %v1868, %v1875
        %v1878 = vlaneseq
        %v1879 = vshrl.u32 %v1878, 7
        %v1880 = vsub.s32 0, %v1879
        %v1881 = vrot.slane %v1861, %v1880
        %v1883 = vmul.f32 %v1876, %v1881
        %v1885 = vlaneseq
        %v1886 = vshrl.u32 %v1885, 7
        %v1887 = vsub.s32 0, %v1886
        %v1888 = vrot.slane %v1862, %v1887
        %v1890 = vadd.f32 %v1883, %v1888
        %v1891 = vld [vmem:[%s8] sm:$0xff]
        %v1892 = vld [vmem:[%s8 + $0x8] sm:$0xff]
        %v1893 = vld [vmem:[%s8 + $0x10] sm:$0xff]
        %v1894 = vld [vmem:[%s8 + $0x18] sm:$0xff]
        %v1895 = vld [vmem:[#allocation13] sm:$0x1]
        %v1897 = vlaneseq
        %v1898 = vshrl.u32 %v1897, 7
        %v1899 = vsub.s32 0, %v1898
        %v1900 = vrot.slane %v1895, %v1899
        %v1903 = vsel %vm1019, %v1890, 0
        %1905 = vmatprep.subr.mxu0 0.0
        %1906 = vmatpush1.msra.mxu0 %v1891
        %1907 = vmatprep.subr.mxu0 0.0
        %1908 = vmatpush1.msra.mxu0 %v1892
        %1909 = vmatprep.subr.mxu0 0.0
        %1910 = vmatpush1.msra.mxu0 %v1893
        %1911 = vmatprep.subr.mxu0 0.0
        %1912 = vmatpush1.msra.mxu0 %v1894
        %1913 = vmatprep.subr.mxu0 0.0
        %1914 = vmatpush1.msra.mxu0 0.0
        %1915 = vmatprep.subr.mxu0 0.0
        %1916 = vmatpush1.msra.mxu0 0.0
        %1917 = vmatprep.subr.mxu0 0.0
        %1918 = vmatpush1.msra.mxu0 0.0
        %1919 = vmatprep.subr.mxu0 0.0
        %1920 = vmatpush1.msra.mxu0 0.0
        %1921 = vmatprep.subr.mxu0 0.0
        %1922 = vmatpush1.msra.mxu0 0.0
        %1923 = vmatprep.subr.mxu0 0.0
        %1924 = vmatpush1.msra.mxu0 0.0
        %1925 = vmatprep.subr.mxu0 0.0
        %1926 = vmatpush1.msra.mxu0 0.0
        %1927 = vmatprep.subr.mxu0 0.0
        %1928 = vmatpush1.msra.mxu0 0.0
        %1929 = vmatprep.subr.mxu0 0.0
        %1930 = vmatpush1.msra.mxu0 0.0
        %1931 = vmatprep.subr.mxu0 0.0
        %1932 = vmatpush1.msra.mxu0 0.0
        %1933 = vmatprep.subr.mxu0 0.0
        %1934 = vmatpush1.msra.mxu0 0.0
        %1935 = vmatprep.subr.mxu0 0.0
        %1936 = vmatpush1.msra.mxu0 0.0
        %1937 = vmatprep.subr.mxu0 0.0
        %1938 = vmatpush1.msra.mxu0 0.0
        %1939 = vmatprep.subr.mxu0 0.0
        %1940 = vmatpush1.msra.mxu0 0.0
        %1941 = vmatprep.subr.mxu0 0.0
        %1942 = vmatpush1.msra.mxu0 0.0
        %1943 = vmatprep.subr.mxu0 0.0
        %1944 = vmatpush1.msra.mxu0 0.0
        %1945 = vmatprep.subr.mxu0 0.0
        %1946 = vmatpush1.msra.mxu0 0.0
        %1947 = vmatprep.subr.mxu0 0.0
        %1948 = vmatpush1.msra.mxu0 0.0
        %1949 = vmatprep.subr.mxu0 0.0
        %1950 = vmatpush1.msra.mxu0 0.0
        %1951 = vmatprep.subr.mxu0 0.0
        %1952 = vmatpush1.msra.mxu0 0.0
        %1953 = vmatprep.subr.mxu0 0.0
        %1954 = vmatpush1.msra.mxu0 0.0
        %1955 = vmatprep.subr.mxu0 0.0
        %1956 = vmatpush1.msra.mxu0 0.0
        %1957 = vmatprep.subr.mxu0 0.0
        %1958 = vmatpush1.msra.mxu0 0.0
        %1959 = vmatprep.subr.mxu0 0.0
        %1960 = vmatpush1.msra.mxu0 0.0
        %1961 = vmatprep.subr.mxu0 0.0
        %1962 = vmatpush1.msra.mxu0 0.0
        %1963 = vmatprep.subr.mxu0 0.0
        %1964 = vmatpush1.msra.mxu0 0.0
        %1965 = vmatprep.subr.mxu0 0.0
        %1966 = vmatpush1.msra.mxu0 0.0
        %1967 = vmatprep.subr.mxu0 0.0
        %1968 = vmatpush1.msra.mxu0 0.0
        %1969 = vmatprep.mubr.f32.mxu0 0.0
        %1970 = vmatmul.mubr.f32.gmra.mrb[0].mxu0 %v1903
        %v1971 = vpop.f32.mrb[0].mxu0
        %v1972 = vadd.f32 %v1900, %v1971
        %v1973 = vpop.f32.mrb[0].mxu0
        %1974 = vdwg.mxu0
        %v1975 = vld [vmem:[%s10] sm:$0xff]
        %v1976 = vld [vmem:[%s10 + $0x8] sm:$0xff]
        %v1977 = vld [vmem:[%s10 + $0x10] sm:$0xff]
        %v1978 = vld [vmem:[%s10 + $0x18] sm:$0xff]
        %v1979 = vld [vmem:[#allocation14] sm:$0x1]
        %v1981 = vlaneseq
        %v1982 = vshrl.u32 %v1981, 7
        %v1983 = vsub.s32 0, %v1982
        %v1984 = vrot.slane %v1979, %v1983
        %v1987 = vsel %vm1019, %v1003, 0
        %1989 = vmatprep.subr.mxu0 0.0
        %1990 = vmatpush1.msra.mxu0 %v1975
        %1991 = vmatprep.subr.mxu0 0.0
        %1992 = vmatpush1.msra.mxu0 %v1976
        %1993 = vmatprep.subr.mxu0 0.0
        %1994 = vmatpush1.msra.mxu0 %v1977
        %1995 = vmatprep.subr.mxu0 0.0
        %1996 = vmatpush1.msra.mxu0 %v1978
        %1997 = vmatprep.subr.mxu0 0.0
        %1998 = vmatpush1.msra.mxu0 0.0
        %1999 = vmatprep.subr.mxu0 0.0
        %2000 = vmatpush1.msra.mxu0 0.0
        %2001 = vmatprep.subr.mxu0 0.0
        %2002 = vmatpush1.msra.mxu0 0.0
        %2003 = vmatprep.subr.mxu0 0.0
        %2004 = vmatpush1.msra.mxu0 0.0
        %2005 = vmatprep.subr.mxu0 0.0
        %2006 = vmatpush1.msra.mxu0 0.0
        %2007 = vmatprep.subr.mxu0 0.0
        %2008 = vmatpush1.msra.mxu0 0.0
        %2009 = vmatprep.subr.mxu0 0.0
        %2010 = vmatpush1.msra.mxu0 0.0
        %2011 = vmatprep.subr.mxu0 0.0
        %2012 = vmatpush1.msra.mxu0 0.0
        %2013 = vmatprep.subr.mxu0 0.0
        %2014 = vmatpush1.msra.mxu0 0.0
        %2015 = vmatprep.subr.mxu0 0.0
        %2016 = vmatpush1.msra.mxu0 0.0
        %2017 = vmatprep.subr.mxu0 0.0
        %2018 = vmatpush1.msra.mxu0 0.0
        %2019 = vmatprep.subr.mxu0 0.0
        %2020 = vmatpush1.msra.mxu0 0.0
        %2021 = vmatprep.subr.mxu0 0.0
        %2022 = vmatpush1.msra.mxu0 0.0
        %2023 = vmatprep.subr.mxu0 0.0
        %2024 = vmatpush1.msra.mxu0 0.0
        %2025 = vmatprep.subr.mxu0 0.0
        %2026 = vmatpush1.msra.mxu0 0.0
        %2027 = vmatprep.subr.mxu0 0.0
        %2028 = vmatpush1.msra.mxu0 0.0
        %2029 = vmatprep.subr.mxu0 0.0
        %2030 = vmatpush1.msra.mxu0 0.0
        %2031 = vmatprep.subr.mxu0 0.0
        %2032 = vmatpush1.msra.mxu0 0.0
        %2033 = vmatprep.subr.mxu0 0.0
        %2034 = vmatpush1.msra.mxu0 0.0
        %2035 = vmatprep.subr.mxu0 0.0
        %2036 = vmatpush1.msra.mxu0 0.0
        %2037 = vmatprep.subr.mxu0 0.0
        %2038 = vmatpush1.msra.mxu0 0.0
        %2039 = vmatprep.subr.mxu0 0.0
        %2040 = vmatpush1.msra.mxu0 0.0
        %2041 = vmatprep.subr.mxu0 0.0
        %2042 = vmatpush1.msra.mxu0 0.0
        %2043 = vmatprep.subr.mxu0 0.0
        %2044 = vmatpush1.msra.mxu0 0.0
        %2045 = vmatprep.subr.mxu0 0.0
        %2046 = vmatpush1.msra.mxu0 0.0
        %2047 = vmatprep.subr.mxu0 0.0
        %2048 = vmatpush1.msra.mxu0 0.0
        %2049 = vmatprep.subr.mxu0 0.0
        %2050 = vmatpush1.msra.mxu0 0.0
        %2051 = vmatprep.subr.mxu0 0.0
        %2052 = vmatpush1.msra.mxu0 0.0
        %2053 = vmatprep.mubr.f32.mxu0 0.0
        %2054 = vmatmul.mubr.f32.gmra.mrb[0].mxu0 %v1987
        %v2055 = vpop.f32.mrb[0].mxu0
        %v2056 = vadd.f32 %v1984, %v2055
        %v2057 = vpop.f32.mrb[0].mxu0
        %2058 = vdwg.mxu0
        %2060 = vrot.lane.b32.xlu0 %v1972, 120
        %v2061 = vpop.permute.xlu0 %2060
        %2062 = vrot.lane.b32.xlu0 %v1972, 112
        %v2063 = vpop.permute.xlu0 %2062
        %2064 = vrot.lane.b32.xlu0 %v1972, 104
        %v2065 = vpop.permute.xlu0 %2064
        %2067 = vrot.lane.b32.xlu0 %v2056, 120
        %v2068 = vpop.permute.xlu0 %2067
        %2069 = vrot.lane.b32.xlu0 %v2056, 112
        %v2070 = vpop.permute.xlu0 %2069
        %2071 = vrot.lane.b32.xlu0 %v2056, 104
        %v2072 = vpop.permute.xlu0 %2071
        %v2073 = vsel %vm1102, %v1972, 0
        %v2075 = vsel %vm1102, %v2056, 0
        %2077 = vmatprep.subr.mxu0 0.0
        %2078 = vmatpush1.xpose.msra.mxu0 %v2075
        %2079 = vmatprep.subr.mxu0 0.0
        %2080 = vmatpush1.xpose.msra.mxu0 0.0
        %2081 = vmatprep.subr.mxu0 0.0
        %2082 = vmatpush1.xpose.msra.mxu0 0.0
        %2083 = vmatprep.subr.mxu0 0.0
        %2084 = vmatpush1.xpose.msra.mxu0 0.0
        %2085 = vmatprep.subr.mxu0 0.0
        %2086 = vmatpush1.xpose.msra.mxu0 0.0
        %2087 = vmatprep.subr.mxu0 0.0
        %2088 = vmatpush1.xpose.msra.mxu0 0.0
        %2089 = vmatprep.subr.mxu0 0.0
        %2090 = vmatpush1.xpose.msra.mxu0 0.0
        %2091 = vmatprep.subr.mxu0 0.0
        %2092 = vmatpush1.xpose.msra.mxu0 0.0
        %2093 = vmatprep.subr.mxu0 0.0
        %2094 = vmatpush1.xpose.msra.mxu0 0.0
        %2095 = vmatprep.subr.mxu0 0.0
        %2096 = vmatpush1.xpose.msra.mxu0 0.0
        %2097 = vmatprep.subr.mxu0 0.0
        %2098 = vmatpush1.xpose.msra.mxu0 0.0
        %2099 = vmatprep.subr.mxu0 0.0
        %2100 = vmatpush1.xpose.msra.mxu0 0.0
        %2101 = vmatprep.subr.mxu0 0.0
        %2102 = vmatpush1.xpose.msra.mxu0 0.0
        %2103 = vmatprep.subr.mxu0 0.0
        %2104 = vmatpush1.xpose.msra.mxu0 0.0
        %2105 = vmatprep.subr.mxu0 0.0
        %2106 = vmatpush1.xpose.msra.mxu0 0.0
        %2107 = vmatprep.subr.mxu0 0.0
        %2108 = vmatpush1.xpose.msra.mxu0 0.0
        %2109 = vmatprep.subr.mxu0 0.0
        %2110 = vmatpush1.xpose.msra.mxu0 0.0
        %2111 = vmatprep.subr.mxu0 0.0
        %2112 = vmatpush1.xpose.msra.mxu0 0.0
        %2113 = vmatprep.subr.mxu0 0.0
        %2114 = vmatpush1.xpose.msra.mxu0 0.0
        %2115 = vmatprep.subr.mxu0 0.0
        %2116 = vmatpush1.xpose.msra.mxu0 0.0
        %2117 = vmatprep.subr.mxu0 0.0
        %2118 = vmatpush1.xpose.msra.mxu0 0.0
        %2119 = vmatprep.subr.mxu0 0.0
        %2120 = vmatpush1.xpose.msra.mxu0 0.0
        %2121 = vmatprep.subr.mxu0 0.0
        %2122 = vmatpush1.xpose.msra.mxu0 0.0
        %2123 = vmatprep.subr.mxu0 0.0
        %2124 = vmatpush1.xpose.msra.mxu0 0.0
        %2125 = vmatprep.subr.mxu0 0.0
        %2126 = vmatpush1.xpose.msra.mxu0 0.0
        %2127 = vmatprep.subr.mxu0 0.0
        %2128 = vmatpush1.xpose.msra.mxu0 0.0
        %2129 = vmatprep.subr.mxu0 0.0
        %2130 = vmatpush1.xpose.msra.mxu0 0.0
        %2131 = vmatprep.subr.mxu0 0.0
        %2132 = vmatpush1.xpose.msra.mxu0 0.0
        %2133 = vmatprep.subr.mxu0 0.0
        %2134 = vmatpush1.xpose.msra.mxu0 0.0
        %2135 = vmatprep.subr.mxu0 0.0
        %2136 = vmatpush1.xpose.msra.mxu0 0.0
        %2137 = vmatprep.subr.mxu0 0.0
        %2138 = vmatpush1.xpose.msra.mxu0 0.0
        %2139 = vmatprep.subr.mxu0 0.0
        %2140 = vmatpush1.xpose.msra.mxu0 0.0
        %2141 = vmatprep.mubr.f32.mxu0 0.0
        %2142 = vmatmul.mubr.f32.gmra.mrb[0].mxu0 %v2073
        %v2143 = vpop.f32.mrb[0].mxu0
        %v2144 = vadd.f32 0.0, %v2143
        %v2145 = vpop.f32.mrb[0].mxu0
        %2146 = vdwg.mxu0
        %v2147 = vsel %vm1102, %v2061, 0
        %v2149 = vsel %vm1102, %v2068, 0
        %2151 = vmatprep.subr.mxu0 0.0
        %2152 = vmatpush1.xpose.msra.mxu0 %v2149
        %2153 = vmatprep.subr.mxu0 0.0
        %2154 = vmatpush1.xpose.msra.mxu0 0.0
        %2155 = vmatprep.subr.mxu0 0.0
        %2156 = vmatpush1.xpose.msra.mxu0 0.0
        %2157 = vmatprep.subr.mxu0 0.0
        %2158 = vmatpush1.xpose.msra.mxu0 0.0
        %2159 = vmatprep.subr.mxu0 0.0
        %2160 = vmatpush1.xpose.msra.mxu0 0.0
        %2161 = vmatprep.subr.mxu0 0.0
        %2162 = vmatpush1.xpose.msra.mxu0 0.0
        %2163 = vmatprep.subr.mxu0 0.0
        %2164 = vmatpush1.xpose.msra.mxu0 0.0
        %2165 = vmatprep.subr.mxu0 0.0
        %2166 = vmatpush1.xpose.msra.mxu0 0.0
        %2167 = vmatprep.subr.mxu0 0.0
        %2168 = vmatpush1.xpose.msra.mxu0 0.0
        %2169 = vmatprep.subr.mxu0 0.0
        %2170 = vmatpush1.xpose.msra.mxu0 0.0
        %2171 = vmatprep.subr.mxu0 0.0
        %2172 = vmatpush1.xpose.msra.mxu0 0.0
        %2173 = vmatprep.subr.mxu0 0.0
        %2174 = vmatpush1.xpose.msra.mxu0 0.0
        %2175 = vmatprep.subr.mxu0 0.0
        %2176 = vmatpush1.xpose.msra.mxu0 0.0
        %2177 = vmatprep.subr.mxu0 0.0
        %2178 = vmatpush1.xpose.msra.mxu0 0.0
        %2179 = vmatprep.subr.mxu0 0.0
        %2180 = vmatpush1.xpose.msra.mxu0 0.0
        %2181 = vmatprep.subr.mxu0 0.0
        %2182 = vmatpush1.xpose.msra.mxu0 0.0
        %2183 = vmatprep.subr.mxu0 0.0
        %2184 = vmatpush1.xpose.msra.mxu0 0.0
        %2185 = vmatprep.subr.mxu0 0.0
        %2186 = vmatpush1.xpose.msra.mxu0 0.0
        %2187 = vmatprep.subr.mxu0 0.0
        %2188 = vmatpush1.xpose.msra.mxu0 0.0
        %2189 = vmatprep.subr.mxu0 0.0
        %2190 = vmatpush1.xpose.msra.mxu0 0.0
        %2191 = vmatprep.subr.mxu0 0.0
        %2192 = vmatpush1.xpose.msra.mxu0 0.0
        %2193 = vmatprep.subr.mxu0 0.0
        %2194 = vmatpush1.xpose.msra.mxu0 0.0
        %2195 = vmatprep.subr.mxu0 0.0
        %2196 = vmatpush1.xpose.msra.mxu0 0.0
        %2197 = vmatprep.subr.mxu0 0.0
        %2198 = vmatpush1.xpose.msra.mxu0 0.0
        %2199 = vmatprep.subr.mxu0 0.0
        %2200 = vmatpush1.xpose.msra.mxu0 0.0
        %2201 = vmatprep.subr.mxu0 0.0
        %2202 = vmatpush1.xpose.msra.mxu0 0.0
        %2203 = vmatprep.subr.mxu0 0.0
        %2204 = vmatpush1.xpose.msra.mxu0 0.0
        %2205 = vmatprep.subr.mxu0 0.0
        %2206 = vmatpush1.xpose.msra.mxu0 0.0
        %2207 = vmatprep.subr.mxu0 0.0
        %2208 = vmatpush1.xpose.msra.mxu0 0.0
        %2209 = vmatprep.subr.mxu0 0.0
        %2210 = vmatpush1.xpose.msra.mxu0 0.0
        %2211 = vmatprep.subr.mxu0 0.0
        %2212 = vmatpush1.xpose.msra.mxu0 0.0
        %2213 = vmatprep.subr.mxu0 0.0
        %2214 = vmatpush1.xpose.msra.mxu0 0.0
        %2215 = vmatprep.mubr.f32.mxu0 0.0
        %2216 = vmatmul.mubr.f32.gmra.mrb[0].mxu0 %v2147
        %v2217 = vpop.f32.mrb[0].mxu0
        %v2218 = vadd.f32 0.0, %v2217
        %v2219 = vpop.f32.mrb[0].mxu0
        %2220 = vdwg.mxu0
        %v2221 = vsel %vm1102, %v2063, 0
        %v2223 = vsel %vm1102, %v2070, 0
        %2225 = vmatprep.subr.mxu0 0.0
        %2226 = vmatpush1.xpose.msra.mxu0 %v2223
        %2227 = vmatprep.subr.mxu0 0.0
        %2228 = vmatpush1.xpose.msra.mxu0 0.0
        %2229 = vmatprep.subr.mxu0 0.0
        %2230 = vmatpush1.xpose.msra.mxu0 0.0
        %2231 = vmatprep.subr.mxu0 0.0
        %2232 = vmatpush1.xpose.msra.mxu0 0.0
        %2233 = vmatprep.subr.mxu0 0.0
        %2234 = vmatpush1.xpose.msra.mxu0 0.0
        %2235 = vmatprep.subr.mxu0 0.0
        %2236 = vmatpush1.xpose.msra.mxu0 0.0
        %2237 = vmatprep.subr.mxu0 0.0
        %2238 = vmatpush1.xpose.msra.mxu0 0.0
        %2239 = vmatprep.subr.mxu0 0.0
        %2240 = vmatpush1.xpose.msra.mxu0 0.0
        %2241 = vmatprep.subr.mxu0 0.0
        %2242 = vmatpush1.xpose.msra.mxu0 0.0
        %2243 = vmatprep.subr.mxu0 0.0
        %2244 = vmatpush1.xpose.msra.mxu0 0.0
        %2245 = vmatprep.subr.mxu0 0.0
        %2246 = vmatpush1.xpose.msra.mxu0 0.0
        %2247 = vmatprep.subr.mxu0 0.0
        %2248 = vmatpush1.xpose.msra.mxu0 0.0
        %2249 = vmatprep.subr.mxu0 0.0
        %2250 = vmatpush1.xpose.msra.mxu0 0.0
        %2251 = vmatprep.subr.mxu0 0.0
        %2252 = vmatpush1.xpose.msra.mxu0 0.0
        %2253 = vmatprep.subr.mxu0 0.0
        %2254 = vmatpush1.xpose.msra.mxu0 0.0
        %2255 = vmatprep.subr.mxu0 0.0
        %2256 = vmatpush1.xpose.msra.mxu0 0.0
        %2257 = vmatprep.subr.mxu0 0.0
        %2258 = vmatpush1.xpose.msra.mxu0 0.0
        %2259 = vmatprep.subr.mxu0 0.0
        %2260 = vmatpush1.xpose.msra.mxu0 0.0
        %2261 = vmatprep.subr.mxu0 0.0
        %2262 = vmatpush1.xpose.msra.mxu0 0.0
        %2263 = vmatprep.subr.mxu0 0.0
        %2264 = vmatpush1.xpose.msra.mxu0 0.0
        %2265 = vmatprep.subr.mxu0 0.0
        %2266 = vmatpush1.xpose.msra.mxu0 0.0
        %2267 = vmatprep.subr.mxu0 0.0
        %2268 = vmatpush1.xpose.msra.mxu0 0.0
        %2269 = vmatprep.subr.mxu0 0.0
        %2270 = vmatpush1.xpose.msra.mxu0 0.0
        %2271 = vmatprep.subr.mxu0 0.0
        %2272 = vmatpush1.xpose.msra.mxu0 0.0
        %2273 = vmatprep.subr.mxu0 0.0
        %2274 = vmatpush1.xpose.msra.mxu0 0.0
        %2275 = vmatprep.subr.mxu0 0.0
        %2276 = vmatpush1.xpose.msra.mxu0 0.0
        %2277 = vmatprep.subr.mxu0 0.0
        %2278 = vmatpush1.xpose.msra.mxu0 0.0
        %2279 = vmatprep.subr.mxu0 0.0
        %2280 = vmatpush1.xpose.msra.mxu0 0.0
        %2281 = vmatprep.subr.mxu0 0.0
        %2282 = vmatpush1.xpose.msra.mxu0 0.0
        %2283 = vmatprep.subr.mxu0 0.0
        %2284 = vmatpush1.xpose.msra.mxu0 0.0
        %2285 = vmatprep.subr.mxu0 0.0
        %2286 = vmatpush1.xpose.msra.mxu0 0.0
        %2287 = vmatprep.subr.mxu0 0.0
        %2288 = vmatpush1.xpose.msra.mxu0 0.0
        %2289 = vmatprep.mubr.f32.mxu0 0.0
        %2290 = vmatmul.mubr.f32.gmra.mrb[0].mxu0 %v2221
        %v2291 = vpop.f32.mrb[0].mxu0
        %v2292 = vadd.f32 0.0, %v2291
        %v2293 = vpop.f32.mrb[0].mxu0
        %2294 = vdwg.mxu0
        %v2295 = vsel %vm1102, %v2065, 0
        %v2297 = vsel %vm1102, %v2072, 0
        %2299 = vmatprep.subr.mxu0 0.0
        %2300 = vmatpush1.xpose.msra.mxu0 %v2297
        %2301 = vmatprep.subr.mxu0 0.0
        %2302 = vmatpush1.xpose.msra.mxu0 0.0
        %2303 = vmatprep.subr.mxu0 0.0
        %2304 = vmatpush1.xpose.msra.mxu0 0.0
        %2305 = vmatprep.subr.mxu0 0.0
        %2306 = vmatpush1.xpose.msra.mxu0 0.0
        %2307 = vmatprep.subr.mxu0 0.0
        %2308 = vmatpush1.xpose.msra.mxu0 0.0
        %2309 = vmatprep.subr.mxu0 0.0
        %2310 = vmatpush1.xpose.msra.mxu0 0.0
        %2311 = vmatprep.subr.mxu0 0.0
        %2312 = vmatpush1.xpose.msra.mxu0 0.0
        %2313 = vmatprep.subr.mxu0 0.0
        %2314 = vmatpush1.xpose.msra.mxu0 0.0
        %2315 = vmatprep.subr.mxu0 0.0
        %2316 = vmatpush1.xpose.msra.mxu0 0.0
        %2317 = vmatprep.subr.mxu0 0.0
        %2318 = vmatpush1.xpose.msra.mxu0 0.0
        %2319 = vmatprep.subr.mxu0 0.0
        %2320 = vmatpush1.xpose.msra.mxu0 0.0
        %2321 = vmatprep.subr.mxu0 0.0
        %2322 = vmatpush1.xpose.msra.mxu0 0.0
        %2323 = vmatprep.subr.mxu0 0.0
        %2324 = vmatpush1.xpose.msra.mxu0 0.0
        %2325 = vmatprep.subr.mxu0 0.0
        %2326 = vmatpush1.xpose.msra.mxu0 0.0
        %2327 = vmatprep.subr.mxu0 0.0
        %2328 = vmatpush1.xpose.msra.mxu0 0.0
        %2329 = vmatprep.subr.mxu0 0.0
        %2330 = vmatpush1.xpose.msra.mxu0 0.0
        %2331 = vmatprep.subr.mxu0 0.0
        %2332 = vmatpush1.xpose.msra.mxu0 0.0
        %2333 = vmatprep.subr.mxu0 0.0
        %2334 = vmatpush1.xpose.msra.mxu0 0.0
        %2335 = vmatprep.subr.mxu0 0.0
        %2336 = vmatpush1.xpose.msra.mxu0 0.0
        %2337 = vmatprep.subr.mxu0 0.0
        %2338 = vmatpush1.xpose.msra.mxu0 0.0
        %2339 = vmatprep.subr.mxu0 0.0
        %2340 = vmatpush1.xpose.msra.mxu0 0.0
        %2341 = vmatprep.subr.mxu0 0.0
        %2342 = vmatpush1.xpose.msra.mxu0 0.0
        %2343 = vmatprep.subr.mxu0 0.0
        %2344 = vmatpush1.xpose.msra.mxu0 0.0
        %2345 = vmatprep.subr.mxu0 0.0
        %2346 = vmatpush1.xpose.msra.mxu0 0.0
        %2347 = vmatprep.subr.mxu0 0.0
        %2348 = vmatpush1.xpose.msra.mxu0 0.0
        %2349 = vmatprep.subr.mxu0 0.0
        %2350 = vmatpush1.xpose.msra.mxu0 0.0
        %2351 = vmatprep.subr.mxu0 0.0
        %2352 = vmatpush1.xpose.msra.mxu0 0.0
        %2353 = vmatprep.subr.mxu0 0.0
        %2354 = vmatpush1.xpose.msra.mxu0 0.0
        %2355 = vmatprep.subr.mxu0 0.0
        %2356 = vmatpush1.xpose.msra.mxu0 0.0
        %2357 = vmatprep.subr.mxu0 0.0
        %2358 = vmatpush1.xpose.msra.mxu0 0.0
        %2359 = vmatprep.subr.mxu0 0.0
        %2360 = vmatpush1.xpose.msra.mxu0 0.0
        %2361 = vmatprep.subr.mxu0 0.0
        %2362 = vmatpush1.xpose.msra.mxu0 0.0
        %2363 = vmatprep.mubr.f32.mxu0 0.0
        %2364 = vmatmul.mubr.f32.gmra.mrb[0].mxu0 %v2295
        %v2365 = vpop.f32.mrb[0].mxu0
        %v2366 = vadd.f32 0.0, %v2365
        %v2367 = vpop.f32.mrb[0].mxu0
        %2368 = vdwg.mxu0
        %v2369 = vsel %vm1007, 1, 0
        %vm2370 = vcmp.eq.s32.totalorder %v2369, 1
        %v2371 = vsel %vm2370, -10000.0, %v2144
        %v2372 = vsel %vm2370, -10000.0, %v2218
        %v2373 = vsel %vm2370, -10000.0, %v2292
        %v2374 = vsel %vm2370, -10000.0, %v2366
        %v2375 = vsel %vm1102, %v2371, -inf
        %2376 = vmax.xlane.f32.xlu0 %v2375
        %v2377 = vpop.xlane.xlu0 %2376
        %v2378 = vsel %vm1102, %v2372, -inf
        %2379 = vmax.xlane.f32.xlu0 %v2378
        %v2380 = vpop.xlane.xlu0 %2379
        %v2381 = vsel %vm1102, %v2373, -inf
        %2382 = vmax.xlane.f32.xlu0 %v2381
        %v2383 = vpop.xlane.xlu0 %2382
        %v2384 = vsel %vm1102, %v2374, -inf
        %2385 = vmax.xlane.f32.xlu0 %v2384
        %v2386 = vpop.xlane.xlu0 %2385
        %v2387 = vsub.f32 %v2371, %v2377
        %v2388 = vsub.f32 %v2372, %v2380
        %v2389 = vsub.f32 %v2373, %v2383
        %v2390 = vsub.f32 %v2374, %v2386
        %v2391 = vmul.f32 %v2387, 1.442695
        %v2392 = vpow.pop %v2391
        %v2393 = vmul.f32 %v2388, 1.442695
        %v2394 = vpow.pop %v2393
        %v2395 = vmul.f32 %v2389, 1.442695
        %v2396 = vpow.pop %v2395
        %v2397 = vmul.f32 %v2390, 1.442695
        %v2398 = vpow.pop %v2397
        %v2399 = vsel %vm1102, %v2392, 0.0
        %2400 = vadd.xlane.f32.xlu0 %v2399
        %v2401 = vpop.xlane.xlu0 %2400
        %v2402 = vsel %vm1102, %v2394, 0.0
        %2403 = vadd.xlane.f32.xlu0 %v2402
        %v2404 = vpop.xlane.xlu0 %2403
        %v2405 = vsel %vm1102, %v2396, 0.0
        %2406 = vadd.xlane.f32.xlu0 %v2405
        %v2407 = vpop.xlane.xlu0 %2406
        %v2408 = vsel %vm1102, %v2398, 0.0
        %2409 = vadd.xlane.f32.xlu0 %v2408
        %v2410 = vpop.xlane.xlu0 %2409
        %v2411 = vrcp.pop %v2401
        %v2412 = vrcp.pop %v2404
        %v2413 = vrcp.pop %v2407
        %v2414 = vrcp.pop %v2410
        %v2415 = vmul.f32 %v2392, %v2411
        %v2416 = vmul.f32 %v2394, %v2412
        %v2417 = vmul.f32 %v2396, %v2413
        %v2418 = vmul.f32 %v2398, %v2414
        %2419 = vrot.lane.b32.xlu0 %v2056, 96
        %v2420 = vpop.permute.xlu0 %2419
        %v2423 = vsel %vm1102, %v2415, 0
        %2425 = vmatprep.subr.mxu0 0.0
        %2426 = vmatpush1.msra.mxu0 %v2420
        %2427 = vmatprep.subr.mxu0 0.0
        %2428 = vmatpush1.msra.mxu0 0.0
        %2429 = vmatprep.subr.mxu0 0.0
        %2430 = vmatpush1.msra.mxu0 0.0
        %2431 = vmatprep.subr.mxu0 0.0
        %2432 = vmatpush1.msra.mxu0 0.0
        %2433 = vmatprep.subr.mxu0 0.0
        %2434 = vmatpush1.msra.mxu0 0.0
        %2435 = vmatprep.subr.mxu0 0.0
        %2436 = vmatpush1.msra.mxu0 0.0
        %2437 = vmatprep.subr.mxu0 0.0
        %2438 = vmatpush1.msra.mxu0 0.0
        %2439 = vmatprep.subr.mxu0 0.0
        %2440 = vmatpush1.msra.mxu0 0.0
        %2441 = vmatprep.subr.mxu0 0.0
        %2442 = vmatpush1.msra.mxu0 0.0
        %2443 = vmatprep.subr.mxu0 0.0
        %2444 = vmatpush1.msra.mxu0 0.0
        %2445 = vmatprep.subr.mxu0 0.0
        %2446 = vmatpush1.msra.mxu0 0.0
        %2447 = vmatprep.subr.mxu0 0.0
        %2448 = vmatpush1.msra.mxu0 0.0
        %2449 = vmatprep.subr.mxu0 0.0
        %2450 = vmatpush1.msra.mxu0 0.0
        %2451 = vmatprep.subr.mxu0 0.0
        %2452 = vmatpush1.msra.mxu0 0.0
        %2453 = vmatprep.subr.mxu0 0.0
        %2454 = vmatpush1.msra.mxu0 0.0
        %2455 = vmatprep.subr.mxu0 0.0
        %2456 = vmatpush1.msra.mxu0 0.0
        %2457 = vmatprep.subr.mxu0 0.0
        %2458 = vmatpush1.msra.mxu0 0.0
        %2459 = vmatprep.subr.mxu0 0.0
        %2460 = vmatpush1.msra.mxu0 0.0
        %2461 = vmatprep.subr.mxu0 0.0
        %2462 = vmatpush1.msra.mxu0 0.0
        %2463 = vmatprep.subr.mxu0 0.0
        %2464 = vmatpush1.msra.mxu0 0.0
        %2465 = vmatprep.subr.mxu0 0.0
        %2466 = vmatpush1.msra.mxu0 0.0
        %2467 = vmatprep.subr.mxu0 0.0
        %2468 = vmatpush1.msra.mxu0 0.0
        %2469 = vmatprep.subr.mxu0 0.0
        %2470 = vmatpush1.msra.mxu0 0.0
        %2471 = vmatprep.subr.mxu0 0.0
        %2472 = vmatpush1.msra.mxu0 0.0
        %2473 = vmatprep.subr.mxu0 0.0
        %2474 = vmatpush1.msra.mxu0 0.0
        %2475 = vmatprep.subr.mxu0 0.0
        %2476 = vmatpush1.msra.mxu0 0.0
        %2477 = vmatprep.subr.mxu0 0.0
        %2478 = vmatpush1.msra.mxu0 0.0
        %2479 = vmatprep.subr.mxu0 0.0
        %2480 = vmatpush1.msra.mxu0 0.0
        %2481 = vmatprep.subr.mxu0 0.0
        %2482 = vmatpush1.msra.mxu0 0.0
        %2483 = vmatprep.subr.mxu0 0.0
        %2484 = vmatpush1.msra.mxu0 0.0
        %2485 = vmatprep.subr.mxu0 0.0
        %2486 = vmatpush1.msra.mxu0 0.0
        %2487 = vmatprep.subr.mxu0 0.0
        %2488 = vmatpush1.msra.mxu0 0.0
        %2489 = vmatprep.mubr.f32.mxu0 0.0
        %2490 = vmatmul.mubr.f32.gmra.mrb[0].mxu0 %v2423
        %v2491 = vpop.f32.mrb[0].mxu0
        %v2492 = vadd.f32 0.0, %v2491
        %v2493 = vpop.f32.mrb[0].mxu0
        %2494 = vdwg.mxu0
        %2495 = vrot.lane.b32.xlu0 %v2068, 96
        %v2496 = vpop.permute.xlu0 %2495
        %v2499 = vsel %vm1102, %v2416, 0
        %2501 = vmatprep.subr.mxu0 0.0
        %2502 = vmatpush1.msra.mxu0 %v2496
        %2503 = vmatprep.subr.mxu0 0.0
        %2504 = vmatpush1.msra.mxu0 0.0
        %2505 = vmatprep.subr.mxu0 0.0
        %2506 = vmatpush1.msra.mxu0 0.0
        %2507 = vmatprep.subr.mxu0 0.0
        %2508 = vmatpush1.msra.mxu0 0.0
        %2509 = vmatprep.subr.mxu0 0.0
        %2510 = vmatpush1.msra.mxu0 0.0
        %2511 = vmatprep.subr.mxu0 0.0
        %2512 = vmatpush1.msra.mxu0 0.0
        %2513 = vmatprep.subr.mxu0 0.0
        %2514 = vmatpush1.msra.mxu0 0.0
        %2515 = vmatprep.subr.mxu0 0.0
        %2516 = vmatpush1.msra.mxu0 0.0
        %2517 = vmatprep.subr.mxu0 0.0
        %2518 = vmatpush1.msra.mxu0 0.0
        %2519 = vmatprep.subr.mxu0 0.0
        %2520 = vmatpush1.msra.mxu0 0.0
        %2521 = vmatprep.subr.mxu0 0.0
        %2522 = vmatpush1.msra.mxu0 0.0
        %2523 = vmatprep.subr.mxu0 0.0
        %2524 = vmatpush1.msra.mxu0 0.0
        %2525 = vmatprep.subr.mxu0 0.0
        %2526 = vmatpush1.msra.mxu0 0.0
        %2527 = vmatprep.subr.mxu0 0.0
        %2528 = vmatpush1.msra.mxu0 0.0
        %2529 = vmatprep.subr.mxu0 0.0
        %2530 = vmatpush1.msra.mxu0 0.0
        %2531 = vmatprep.subr.mxu0 0.0
        %2532 = vmatpush1.msra.mxu0 0.0
        %2533 = vmatprep.subr.mxu0 0.0
        %2534 = vmatpush1.msra.mxu0 0.0
        %2535 = vmatprep.subr.mxu0 0.0
        %2536 = vmatpush1.msra.mxu0 0.0
        %2537 = vmatprep.subr.mxu0 0.0
        %2538 = vmatpush1.msra.mxu0 0.0
        %2539 = vmatprep.subr.mxu0 0.0
        %2540 = vmatpush1.msra.mxu0 0.0
        %2541 = vmatprep.subr.mxu0 0.0
        %2542 = vmatpush1.msra.mxu0 0.0
        %2543 = vmatprep.subr.mxu0 0.0
        %2544 = vmatpush1.msra.mxu0 0.0
        %2545 = vmatprep.subr.mxu0 0.0
        %2546 = vmatpush1.msra.mxu0 0.0
        %2547 = vmatprep.subr.mxu0 0.0
        %2548 = vmatpush1.msra.mxu0 0.0
        %2549 = vmatprep.subr.mxu0 0.0
        %2550 = vmatpush1.msra.mxu0 0.0
        %2551 = vmatprep.subr.mxu0 0.0
        %2552 = vmatpush1.msra.mxu0 0.0
        %2553 = vmatprep.subr.mxu0 0.0
        %2554 = vmatpush1.msra.mxu0 0.0
        %2555 = vmatprep.subr.mxu0 0.0
        %2556 = vmatpush1.msra.mxu0 0.0
        %2557 = vmatprep.subr.mxu0 0.0
        %2558 = vmatpush1.msra.mxu0 0.0
        %2559 = vmatprep.subr.mxu0 0.0
        %2560 = vmatpush1.msra.mxu0 0.0
        %2561 = vmatprep.subr.mxu0 0.0
        %2562 = vmatpush1.msra.mxu0 0.0
        %2563 = vmatprep.subr.mxu0 0.0
        %2564 = vmatpush1.msra.mxu0 0.0
        %2565 = vmatprep.mubr.f32.mxu0 0.0
        %2566 = vmatmul.mubr.f32.gmra.mrb[0].mxu0 %v2499
        %v2567 = vpop.f32.mrb[0].mxu0
        %v2568 = vadd.f32 0.0, %v2567
        %v2569 = vpop.f32.mrb[0].mxu0
        %2570 = vdwg.mxu0
        %2571 = vrot.lane.b32.xlu0 %v2070, 96
        %v2572 = vpop.permute.xlu0 %2571
        %v2575 = vsel %vm1102, %v2417, 0
        %2577 = vmatprep.subr.mxu0 0.0
        %2578 = vmatpush1.msra.mxu0 %v2572
        %2579 = vmatprep.subr.mxu0 0.0
        %2580 = vmatpush1.msra.mxu0 0.0
        %2581 = vmatprep.subr.mxu0 0.0
        %2582 = vmatpush1.msra.mxu0 0.0
        %2583 = vmatprep.subr.mxu0 0.0
        %2584 = vmatpush1.msra.mxu0 0.0
        %2585 = vmatprep.subr.mxu0 0.0
        %2586 = vmatpush1.msra.mxu0 0.0
        %2587 = vmatprep.subr.mxu0 0.0
        %2588 = vmatpush1.msra.mxu0 0.0
        %2589 = vmatprep.subr.mxu0 0.0
        %2590 = vmatpush1.msra.mxu0 0.0
        %2591 = vmatprep.subr.mxu0 0.0
        %2592 = vmatpush1.msra.mxu0 0.0
        %2593 = vmatprep.subr.mxu0 0.0
        %2594 = vmatpush1.msra.mxu0 0.0
        %2595 = vmatprep.subr.mxu0 0.0
        %2596 = vmatpush1.msra.mxu0 0.0
        %2597 = vmatprep.subr.mxu0 0.0
        %2598 = vmatpush1.msra.mxu0 0.0
        %2599 = vmatprep.subr.mxu0 0.0
        %2600 = vmatpush1.msra.mxu0 0.0
        %2601 = vmatprep.subr.mxu0 0.0
        %2602 = vmatpush1.msra.mxu0 0.0
        %2603 = vmatprep.subr.mxu0 0.0
        %2604 = vmatpush1.msra.mxu0 0.0
        %2605 = vmatprep.subr.mxu0 0.0
        %2606 = vmatpush1.msra.mxu0 0.0
        %2607 = vmatprep.subr.mxu0 0.0
        %2608 = vmatpush1.msra.mxu0 0.0
        %2609 = vmatprep.subr.mxu0 0.0
        %2610 = vmatpush1.msra.mxu0 0.0
        %2611 = vmatprep.subr.mxu0 0.0
        %2612 = vmatpush1.msra.mxu0 0.0
        %2613 = vmatprep.subr.mxu0 0.0
        %2614 = vmatpush1.msra.mxu0 0.0
        %2615 = vmatprep.subr.mxu0 0.0
        %2616 = vmatpush1.msra.mxu0 0.0
        %2617 = vmatprep.subr.mxu0 0.0
        %2618 = vmatpush1.msra.mxu0 0.0
        %2619 = vmatprep.subr.mxu0 0.0
        %2620 = vmatpush1.msra.mxu0 0.0
        %2621 = vmatprep.subr.mxu0 0.0
        %2622 = vmatpush1.msra.mxu0 0.0
        %2623 = vmatprep.subr.mxu0 0.0
        %2624 = vmatpush1.msra.mxu0 0.0
        %2625 = vmatprep.subr.mxu0 0.0
        %2626 = vmatpush1.msra.mxu0 0.0
        %2627 = vmatprep.subr.mxu0 0.0
        %2628 = vmatpush1.msra.mxu0 0.0
        %2629 = vmatprep.subr.mxu0 0.0
        %2630 = vmatpush1.msra.mxu0 0.0
        %2631 = vmatprep.subr.mxu0 0.0
        %2632 = vmatpush1.msra.mxu0 0.0
        %2633 = vmatprep.subr.mxu0 0.0
        %2634 = vmatpush1.msra.mxu0 0.0
        %2635 = vmatprep.subr.mxu0 0.0
        %2636 = vmatpush1.msra.mxu0 0.0
        %2637 = vmatprep.subr.mxu0 0.0
        %2638 = vmatpush1.msra.mxu0 0.0
        %2639 = vmatprep.subr.mxu0 0.0
        %2640 = vmatpush1.msra.mxu0 0.0
        %2641 = vmatprep.mubr.f32.mxu0 0.0
        %2642 = vmatmul.mubr.f32.gmra.mrb[0].mxu0 %v2575
        %v2643 = vpop.f32.mrb[0].mxu0
        %v2644 = vadd.f32 0.0, %v2643
        %v2645 = vpop.f32.mrb[0].mxu0
        %2646 = vdwg.mxu0
        %2647 = vrot.lane.b32.xlu0 %v2072, 96
        %v2648 = vpop.permute.xlu0 %2647
        %v2651 = vsel %vm1102, %v2418, 0
        %2653 = vmatprep.subr.mxu0 0.0
        %2654 = vmatpush1.msra.mxu0 %v2648
        %2655 = vmatprep.subr.mxu0 0.0
        %2656 = vmatpush1.msra.mxu0 0.0
        %2657 = vmatprep.subr.mxu0 0.0
        %2658 = vmatpush1.msra.mxu0 0.0
        %2659 = vmatprep.subr.mxu0 0.0
        %2660 = vmatpush1.msra.mxu0 0.0
        %2661 = vmatprep.subr.mxu0 0.0
        %2662 = vmatpush1.msra.mxu0 0.0
        %2663 = vmatprep.subr.mxu0 0.0
        %2664 = vmatpush1.msra.mxu0 0.0
        %2665 = vmatprep.subr.mxu0 0.0
        %2666 = vmatpush1.msra.mxu0 0.0
        %2667 = vmatprep.subr.mxu0 0.0
        %2668 = vmatpush1.msra.mxu0 0.0
        %2669 = vmatprep.subr.mxu0 0.0
        %2670 = vmatpush1.msra.mxu0 0.0
        %2671 = vmatprep.subr.mxu0 0.0
        %2672 = vmatpush1.msra.mxu0 0.0
        %2673 = vmatprep.subr.mxu0 0.0
        %2674 = vmatpush1.msra.mxu0 0.0
        %2675 = vmatprep.subr.mxu0 0.0
        %2676 = vmatpush1.msra.mxu0 0.0
        %2677 = vmatprep.subr.mxu0 0.0
        %2678 = vmatpush1.msra.mxu0 0.0
        %2679 = vmatprep.subr.mxu0 0.0
        %2680 = vmatpush1.msra.mxu0 0.0
        %2681 = vmatprep.subr.mxu0 0.0
        %2682 = vmatpush1.msra.mxu0 0.0
        %2683 = vmatprep.subr.mxu0 0.0
        %2684 = vmatpush1.msra.mxu0 0.0
        %2685 = vmatprep.subr.mxu0 0.0
        %2686 = vmatpush1.msra.mxu0 0.0
        %2687 = vmatprep.subr.mxu0 0.0
        %2688 = vmatpush1.msra.mxu0 0.0
        %2689 = vmatprep.subr.mxu0 0.0
        %2690 = vmatpush1.msra.mxu0 0.0
        %2691 = vmatprep.subr.mxu0 0.0
        %2692 = vmatpush1.msra.mxu0 0.0
        %2693 = vmatprep.subr.mxu0 0.0
        %2694 = vmatpush1.msra.mxu0 0.0
        %2695 = vmatprep.subr.mxu0 0.0
        %2696 = vmatpush1.msra.mxu0 0.0
        %2697 = vmatprep.subr.mxu0 0.0
        %2698 = vmatpush1.msra.mxu0 0.0
        %2699 = vmatprep.subr.mxu0 0.0
        %2700 = vmatpush1.msra.mxu0 0.0
        %2701 = vmatprep.subr.mxu0 0.0
        %2702 = vmatpush1.msra.mxu0 0.0
        %2703 = vmatprep.subr.mxu0 0.0
        %2704 = vmatpush1.msra.mxu0 0.0
        %2705 = vmatprep.subr.mxu0 0.0
        %2706 = vmatpush1.msra.mxu0 0.0
        %2707 = vmatprep.subr.mxu0 0.0
        %2708 = vmatpush1.msra.mxu0 0.0
        %2709 = vmatprep.subr.mxu0 0.0
        %2710 = vmatpush1.msra.mxu0 0.0
        %2711 = vmatprep.subr.mxu0 0.0
        %2712 = vmatpush1.msra.mxu0 0.0
        %2713 = vmatprep.subr.mxu0 0.0
        %2714 = vmatpush1.msra.mxu0 0.0
        %2715 = vmatprep.subr.mxu0 0.0
        %2716 = vmatpush1.msra.mxu0 0.0
        %2717 = vmatprep.mubr.f32.mxu0 0.0
        %2718 = vmatmul.mubr.f32.gmra.mrb[0].mxu0 %v2651
        %v2719 = vpop.f32.mrb[0].mxu0
        %v2720 = vadd.f32 0.0, %v2719
        %v2721 = vpop.f32.mrb[0].mxu0
        %2722 = vdwg.mxu0
        %2724 = vrot.lane.b32.xlu0 %v2568, 8
        %v2725 = vpop.permute.xlu0 %2724
        %2728 = vrot.lane.b32.xlu0 %v2644, 16
        %v2729 = vpop.permute.xlu0 %2728
        %2732 = vrot.lane.b32.xlu0 %v2720, 24
        %v2733 = vpop.permute.xlu0 %2732
        %v2735 = vsel %vm1102, %v2492, %v2725
        %v2736 = vsel %vm1772, %v2735, %v2729
        %v2737 = vsel %vm1774, %v2736, %v2733
        %v2738 = vld [vmem:[#allocation16] sm:$0xff]
        %v2739 = vld [vmem:[#allocation16 + $0x8] sm:$0xff]
        %v2740 = vld [vmem:[#allocation16 + $0x10] sm:$0xff]
        %v2741 = vld [vmem:[#allocation16 + $0x18] sm:$0xff]
        %v2742 = vld [vmem:[#allocation17] sm:$0x1]
        %v2744 = vlaneseq
        %v2745 = vshrl.u32 %v2744, 7
        %v2746 = vsub.s32 0, %v2745
        %v2747 = vrot.slane %v2742, %v2746
        %v2750 = vsel %vm1019, %v2737, 0
        %2752 = vmatprep.subr.mxu0 0.0
        %2753 = vmatpush1.msra.mxu0 %v2738
        %2754 = vmatprep.subr.mxu0 0.0
        %2755 = vmatpush1.msra.mxu0 %v2739
        %2756 = vmatprep.subr.mxu0 0.0
        %2757 = vmatpush1.msra.mxu0 %v2740
        %2758 = vmatprep.subr.mxu0 0.0
        %2759 = vmatpush1.msra.mxu0 %v2741
        %2760 = vmatprep.subr.mxu0 0.0
        %2761 = vmatpush1.msra.mxu0 0.0
        %2762 = vmatprep.subr.mxu0 0.0
        %2763 = vmatpush1.msra.mxu0 0.0
        %2764 = vmatprep.subr.mxu0 0.0
        %2765 = vmatpush1.msra.mxu0 0.0
        %2766 = vmatprep.subr.mxu0 0.0
        %2767 = vmatpush1.msra.mxu0 0.0
        %2768 = vmatprep.subr.mxu0 0.0
        %2769 = vmatpush1.msra.mxu0 0.0
        %2770 = vmatprep.subr.mxu0 0.0
        %2771 = vmatpush1.msra.mxu0 0.0
        %2772 = vmatprep.subr.mxu0 0.0
        %2773 = vmatpush1.msra.mxu0 0.0
        %2774 = vmatprep.subr.mxu0 0.0
        %2775 = vmatpush1.msra.mxu0 0.0
        %2776 = vmatprep.subr.mxu0 0.0
        %2777 = vmatpush1.msra.mxu0 0.0
        %2778 = vmatprep.subr.mxu0 0.0
        %2779 = vmatpush1.msra.mxu0 0.0
        %2780 = vmatprep.subr.mxu0 0.0
        %2781 = vmatpush1.msra.mxu0 0.0
        %2782 = vmatprep.subr.mxu0 0.0
        %2783 = vmatpush1.msra.mxu0 0.0
        %2784 = vmatprep.subr.mxu0 0.0
        %2785 = vmatpush1.msra.mxu0 0.0
        %2786 = vmatprep.subr.mxu0 0.0
        %2787 = vmatpush1.msra.mxu0 0.0
        %2788 = vmatprep.subr.mxu0 0.0
        %2789 = vmatpush1.msra.mxu0 0.0
        %2790 = vmatprep.subr.mxu0 0.0
        %2791 = vmatpush1.msra.mxu0 0.0
        %2792 = vmatprep.subr.mxu0 0.0
        %2793 = vmatpush1.msra.mxu0 0.0
        %2794 = vmatprep.subr.mxu0 0.0
        %2795 = vmatpush1.msra.mxu0 0.0
        %2796 = vmatprep.subr.mxu0 0.0
        %2797 = vmatpush1.msra.mxu0 0.0
        %2798 = vmatprep.subr.mxu0 0.0
        %2799 = vmatpush1.msra.mxu0 0.0
        %2800 = vmatprep.subr.mxu0 0.0
        %2801 = vmatpush1.msra.mxu0 0.0
        %2802 = vmatprep.subr.mxu0 0.0
        %2803 = vmatpush1.msra.mxu0 0.0
        %2804 = vmatprep.subr.mxu0 0.0
        %2805 = vmatpush1.msra.mxu0 0.0
        %2806 = vmatprep.subr.mxu0 0.0
        %2807 = vmatpush1.msra.mxu0 0.0
        %2808 = vmatprep.subr.mxu0 0.0
        %2809 = vmatpush1.msra.mxu0 0.0
        %2810 = vmatprep.subr.mxu0 0.0
        %2811 = vmatpush1.msra.mxu0 0.0
        %2812 = vmatprep.subr.mxu0 0.0
        %2813 = vmatpush1.msra.mxu0 0.0
        %2814 = vmatprep.subr.mxu0 0.0
        %2815 = vmatpush1.msra.mxu0 0.0
        %2816 = vmatprep.mubr.f32.mxu0 0.0
        %2817 = vmatmul.mubr.f32.gmra.mrb[0].mxu0 %v2750
        %v2818 = vpop.f32.mrb[0].mxu0
        %v2819 = vadd.f32 %v2747, %v2818
        %v2820 = vpop.f32.mrb[0].mxu0
        %2821 = vdwg.mxu0
        %v2822 = vadd.f32 %v1890, %v2819
        %v2823 = vld [vmem:[#allocation22] sm:$0x1]
        %v2824 = vld [vmem:[#allocation23] sm:$0x1]
        %v2825 = vsel %vm1019, %v2822, 0.0
        %2826 = vadd.xlane.f32.xlu0 %v2825
        %v2827 = vpop.xlane.xlu0 %2826
        %v2828 = vmul.f32 %v2827, %v1866
        %v2829 = vsub.f32 %v2822, %v2828
        %v2830 = vmul.f32 %v2829, %v2829
        %v2831 = vsel %vm1019, %v2830, 0.0
        %2832 = vadd.xlane.f32.xlu0 %v2831
        %v2833 = vpop.xlane.xlu0 %2832
        %v2834 = vmul.f32 %v2833, %v1866
        %v2835 = vadd.f32 %v2834, 1e-05
        %v2836 = vrsqrt.pop %v2835
        %v2837 = vmul.f32 %v2829, %v2836
        %v2839 = vlaneseq
        %v2840 = vshrl.u32 %v2839, 7
        %v2841 = vsub.s32 0, %v2840
        %v2842 = vrot.slane %v2823, %v2841
        %v2844 = vmul.f32 %v2837, %v2842
        %v2846 = vlaneseq
        %v2847 = vshrl.u32 %v2846, 7
        %v2848 = vsub.s32 0, %v2847
        %v2849 = vrot.slane %v2824, %v2848
        %v2851 = vadd.f32 %v2844, %v2849
        %v2852 = vld [vmem:[#allocation25] sm:$0xff]
        %v2853 = vld [vmem:[#allocation25 + $0x8] sm:$0xff]
        %v2854 = vld [vmem:[#allocation25 + $0x10] sm:$0xff]
        %v2855 = vld [vmem:[#allocation25 + $0x18] sm:$0xff]
        %v2856 = vld [vmem:[%s21] sm:$0x1]
        %v2858 = vlaneseq
        %v2859 = vshrl.u32 %v2858, 7
        %v2860 = vsub.s32 0, %v2859
        %v2861 = vrot.slane %v2856, %v2860
        %v2864 = vsel %vm1019, %v2851, 0
        %2866 = vmatprep.subr.mxu0 0.0
        %2867 = vmatpush1.msra.mxu0 %v2852
        %2868 = vmatprep.subr.mxu0 0.0
        %2869 = vmatpush1.msra.mxu0 %v2853
        %2870 = vmatprep.subr.mxu0 0.0
        %2871 = vmatpush1.msra.mxu0 %v2854
        %2872 = vmatprep.subr.mxu0 0.0
        %2873 = vmatpush1.msra.mxu0 %v2855
        %2874 = vmatprep.subr.mxu0 0.0
        %2875 = vmatpush1.msra.mxu0 0.0
        %2876 = vmatprep.subr.mxu0 0.0
        %2877 = vmatpush1.msra.mxu0 0.0
        %2878 = vmatprep.subr.mxu0 0.0
        %2879 = vmatpush1.msra.mxu0 0.0
        %2880 = vmatprep.subr.mxu0 0.0
        %2881 = vmatpush1.msra.mxu0 0.0
        %2882 = vmatprep.subr.mxu0 0.0
        %2883 = vmatpush1.msra.mxu0 0.0
        %2884 = vmatprep.subr.mxu0 0.0
        %2885 = vmatpush1.msra.mxu0 0.0
        %2886 = vmatprep.subr.mxu0 0.0
        %2887 = vmatpush1.msra.mxu0 0.0
        %2888 = vmatprep.subr.mxu0 0.0
        %2889 = vmatpush1.msra.mxu0 0.0
        %2890 = vmatprep.subr.mxu0 0.0
        %2891 = vmatpush1.msra.mxu0 0.0
        %2892 = vmatprep.subr.mxu0 0.0
        %2893 = vmatpush1.msra.mxu0 0.0
        %2894 = vmatprep.subr.mxu0 0.0
        %2895 = vmatpush1.msra.mxu0 0.0
        %2896 = vmatprep.subr.mxu0 0.0
        %2897 = vmatpush1.msra.mxu0 0.0
        %2898 = vmatprep.subr.mxu0 0.0
        %2899 = vmatpush1.msra.mxu0 0.0
        %2900 = vmatprep.subr.mxu0 0.0
        %2901 = vmatpush1.msra.mxu0 0.0
        %2902 = vmatprep.subr.mxu0 0.0
        %2903 = vmatpush1.msra.mxu0 0.0
        %2904 = vmatprep.subr.mxu0 0.0
        %2905 = vmatpush1.msra.mxu0 0.0
        %2906 = vmatprep.subr.mxu0 0.0
        %2907 = vmatpush1.msra.mxu0 0.0
        %2908 = vmatprep.subr.mxu0 0.0
        %2909 = vmatpush1.msra.mxu0 0.0
        %2910 = vmatprep.subr.mxu0 0.0
        %2911 = vmatpush1.msra.mxu0 0.0
        %2912 = vmatprep.subr.mxu0 0.0
        %2913 = vmatpush1.msra.mxu0 0.0
        %2914 = vmatprep.subr.mxu0 0.0
        %2915 = vmatpush1.msra.mxu0 0.0
        %2916 = vmatprep.subr.mxu0 0.0
        %2917 = vmatpush1.msra.mxu0 0.0
        %2918 = vmatprep.subr.mxu0 0.0
        %2919 = vmatpush1.msra.mxu0 0.0
        %2920 = vmatprep.subr.mxu0 0.0
        %2921 = vmatpush1.msra.mxu0 0.0
        %2922 = vmatprep.subr.mxu0 0.0
        %2923 = vmatpush1.msra.mxu0 0.0
        %2924 = vmatprep.subr.mxu0 0.0
        %2925 = vmatpush1.msra.mxu0 0.0
        %2926 = vmatprep.subr.mxu0 0.0
        %2927 = vmatpush1.msra.mxu0 0.0
        %2928 = vmatprep.subr.mxu0 0.0
        %2929 = vmatpush1.msra.mxu0 0.0
        %2930 = vmatprep.mubr.f32.mxu0 0.0
        %2931 = vmatmul.mubr.f32.gmra.mrb[0].mxu0 %v2864
        %v2932 = vpop.f32.mrb[0].mxu0
        %v2933 = vadd.f32 %v2861, %v2932
        %v2934 = vpop.f32.mrb[0].mxu0
        %2935 = vdwg.mxu0
        %v2936 = vmax.f32 %v2933, 0.0
        %v2937 = vld [vmem:[%s22] sm:$0xff]
        %v2938 = vld [vmem:[%s22 + $0x8] sm:$0xff]
        %v2939 = vld [vmem:[%s22 + $0x10] sm:$0xff]
        %v2940 = vld [vmem:[%s22 + $0x18] sm:$0xff]
        %v2941 = vld [vmem:[%s22 + $0x20] sm:$0xff]
        %v2942 = vld [vmem:[%s22 + $0x28] sm:$0xff]
        %v2943 = vld [vmem:[%s22 + $0x30] sm:$0xff]
        %v2944 = vld [vmem:[%s22 + $0x38] sm:$0xff]
        %v2945 = vld [vmem:[%s23] sm:$0x1]
        %v2947 = vlaneseq
        %v2948 = vshrl.u32 %v2947, 7
        %v2949 = vsub.s32 0, %v2948
        %v2950 = vrot.slane %v2945, %v2949
        %vm2952 = vcmask 523264
        %v2954 = vsel %vm2952, %v2936, 0
        %2956 = vmatprep.subr.mxu0 0.0
        %2957 = vmatpush1.msra.mxu0 %v2937
        %2958 = vmatprep.subr.mxu0 0.0
        %2959 = vmatpush1.msra.mxu0 %v2938
        %2960 = vmatprep.subr.mxu0 0.0
        %2961 = vmatpush1.msra.mxu0 %v2939
        %2962 = vmatprep.subr.mxu0 0.0
        %2963 = vmatpush1.msra.mxu0 %v2940
        %2964 = vmatprep.subr.mxu0 0.0
        %2965 = vmatpush1.msra.mxu0 %v2941
        %2966 = vmatprep.subr.mxu0 0.0
        %2967 = vmatpush1.msra.mxu0 %v2942
        %2968 = vmatprep.subr.mxu0 0.0
        %2969 = vmatpush1.msra.mxu0 %v2943
        %2970 = vmatprep.subr.mxu0 0.0
        %2971 = vmatpush1.msra.mxu0 %v2944
        %2972 = vmatprep.subr.mxu0 0.0
        %2973 = vmatpush1.msra.mxu0 0.0
        %2974 = vmatprep.subr.mxu0 0.0
        %2975 = vmatpush1.msra.mxu0 0.0
        %2976 = vmatprep.subr.mxu0 0.0
        %2977 = vmatpush1.msra.mxu0 0.0
        %2978 = vmatprep.subr.mxu0 0.0
        %2979 = vmatpush1.msra.mxu0 0.0
        %2980 = vmatprep.subr.mxu0 0.0
        %2981 = vmatpush1.msra.mxu0 0.0
        %2982 = vmatprep.subr.mxu0 0.0
        %2983 = vmatpush1.msra.mxu0 0.0
        %2984 = vmatprep.subr.mxu0 0.0
        %2985 = vmatpush1.msra.mxu0 0.0
        %2986 = vmatprep.subr.mxu0 0.0
        %2987 = vmatpush1.msra.mxu0 0.0
        %2988 = vmatprep.subr.mxu0 0.0
        %2989 = vmatpush1.msra.mxu0 0.0
        %2990 = vmatprep.subr.mxu0 0.0
        %2991 = vmatpush1.msra.mxu0 0.0
        %2992 = vmatprep.subr.mxu0 0.0
        %2993 = vmatpush1.msra.mxu0 0.0
        %2994 = vmatprep.subr.mxu0 0.0
        %2995 = vmatpush1.msra.mxu0 0.0
        %2996 = vmatprep.subr.mxu0 0.0
        %2997 = vmatpush1.msra.mxu0 0.0
        %2998 = vmatprep.subr.mxu0 0.0
        %2999 = vmatpush1.msra.mxu0 0.0
        %3000 = vmatprep.subr.mxu0 0.0
        %3001 = vmatpush1.msra.mxu0 0.0
        %3002 = vmatprep.subr.mxu0 0.0
        %3003 = vmatpush1.msra.mxu0 0.0
        %3004 = vmatprep.subr.mxu0 0.0
        %3005 = vmatpush1.msra.mxu0 0.0
        %3006 = vmatprep.subr.mxu0 0.0
        %3007 = vmatpush1.msra.mxu0 0.0
        %3008 = vmatprep.subr.mxu0 0.0
        %3009 = vmatpush1.msra.mxu0 0.0
        %3010 = vmatprep.subr.mxu0 0.0
        %3011 = vmatpush1.msra.mxu0 0.0
        %3012 = vmatprep.subr.mxu0 0.0
        %3013 = vmatpush1.msra.mxu0 0.0
        %3014 = vmatprep.subr.mxu0 0.0
        %3015 = vmatpush1.msra.mxu0 0.0
        %3016 = vmatprep.subr.mxu0 0.0
        %3017 = vmatpush1.msra.mxu0 0.0
        %3018 = vmatprep.subr.mxu0 0.0
        %3019 = vmatpush1.msra.mxu0 0.0
        %3020 = vmatprep.mubr.f32.mxu0 0.0
        %3021 = vmatmul.mubr.f32.gmra.mrb[0].mxu0 %v2954
        %v3022 = vpop.f32.mrb[0].mxu0
        %v3023 = vadd.f32 %v2950, %v3022
        %v3024 = vpop.f32.mrb[0].mxu0
        %3025 = vdwg.mxu0
        %v3026 = vadd.f32 %v2851, %v3023
        %v3027 = vld [vmem:[%s18] sm:$0x1]
        %v3028 = vld [vmem:[%s19] sm:$0x1]
        %v3029 = vsel %vm1019, %v3026, 0.0
        %3030 = vadd.xlane.f32.xlu0 %v3029
        %v3031 = vpop.xlane.xlu0 %3030
        %v3032 = vmul.f32 %v3031, %v1866
        %v3033 = vsub.f32 %v3026, %v3032
        %v3034 = vmul.f32 %v3033, %v3033
        %v3035 = vsel %vm1019, %v3034, 0.0
        %3036 = vadd.xlane.f32.xlu0 %v3035
        %v3037 = vpop.xlane.xlu0 %3036
        %v3038 = vmul.f32 %v3037, %v1866
        %v3039 = vadd.f32 %v3038, 1e-05
        %v3040 = vrsqrt.pop %v3039
        %v3041 = vmul.f32 %v3033, %v3040
        %v3043 = vlaneseq
        %v3044 = vshrl.u32 %v3043, 7
        %v3045 = vsub.s32 0, %v3044
        %v3046 = vrot.slane %v3027, %v3045
        %v3048 = vmul.f32 %v3041, %v3046
        %v3050 = vlaneseq
        %v3051 = vshrl.u32 %v3050, 7
        %v3052 = vsub.s32 0, %v3051
        %v3053 = vrot.slane %v3028, %v3052
        %v3055 = vadd.f32 %v3048, %v3053
        %3056 = vst.msk [vmem:[%s1001] sm:$0xff] %vm1019, %v3055
        %s3057 = sand.u32 %s584, 1
        %s3058 = scalar_lea.sflag [#allocation4], %s3057
        %s3059 = sand.u32 %s584, 1
        %s3060 = smul.addr %s3059, 8
        %s3061 = scalar_lea.vmem [#allocation26], %s3060
        // Predicated region
        $region177: #{tpu_custom_call.1} parent=115 // pred_check
          %p3062 = pneg %p594
        $region178: #{tpu_custom_call.1} parent=115 // pred_check_branch
          %3064 = sbr.rel (%p3062) target = $region180
        $region179: #{tpu_custom_call.1} parent=115 // pred_region
          %s3066 = ssub.s32 128, 128
          %3067 = vsyncadd %s3058, %s3066
          %s3068 = smul.addr %s52, 128
          %s3069 = scalar_lea.hbm %s24, %s3068
          %s3071 = sshll.u32 %s3061, 4
          %s3072 = int_to_ptr.vmem [resolvable:$true] %s3071
          %3074 = dma.vmem_to_hbm [thread:$0]  %s3072, 128, %s3069, %s3058
        $region180: #{tpu_custom_call.1} parent=115 // pred_fallthru
          _
      $region116: #{tpu_custom_call.1} parent=5 // pred_fallthru
        _
      %p3075 = scmp.le.s32.totalorder 2, %s47
      // Predicated region
      $region181: #{tpu_custom_call.1} parent=5 // pred_check
        %p3076 = pneg %p3075
      $region182: #{tpu_custom_call.1} parent=5 // pred_check_branch
        %3078 = sbr.rel (%p3076) target = $region184
      $region183: #{tpu_custom_call.1} parent=5 // pred_region
        %s3079 = ssub.s32 %s47, 2
        // Predicated region
        $region185: #{tpu_custom_call.1} parent=183 // pred_check
          %p3080 = pneg %p600
        $region186: #{tpu_custom_call.1} parent=183 // pred_check_branch
          %3082 = sbr.rel (%p3080) target = $region188
        $region187: #{tpu_custom_call.1} parent=183 // pred_region
          %s3083 = sand.u32 %s585, 1
          %s3084 = scalar_lea.sflag [#allocation4], %s3083
          %s3085 = sand.u32 %s585, 1
          %s3086 = smul.addr %s3085, 8
          %s3087 = scalar_lea.vmem [#allocation26], %s3086
          %3088 = dma.done %s3084, 128
        $region188: #{tpu_custom_call.1} parent=183 // pred_fallthru
          _
      $region184: #{tpu_custom_call.1} parent=5 // pred_fallthru
        _
    $region6: #{tpu_custom_call.1} parent=1 // loop_footer
      %s51 = sadd.s32 1, %s47
    $region7: #{tpu_custom_call.1} parent=1 // loop_footer_branch
      %46 = sbr.rel target = $region3
    $region8: #{tpu_custom_call.1} parent=1 // loop_exit
      _
    %3089 = vsyncpa [#allocation3], 1
    %s3090 = scalar_lea.sflag [#allocation3], 1
    %3091 = vsyncpa %s3090, 1
    %3092 = vsyncpa [#allocation6], 1
    %s3093 = scalar_lea.sflag [#allocation6], 1
    %3094 = vsyncpa %s3093, 1
    %3095 = vsyncpa [#allocation9], 1
    %s3096 = scalar_lea.sflag [#allocation9], 1
    %3097 = vsyncpa %s3096, 1
    %3098 = vsyncpa [#allocation12], 1
    %3099 = vsyncpa [#allocation15], 1
    %3100 = vsyncpa [#allocation18], 1
    %3101 = vsyncpa [#allocation21], 1
    %3102 = vsyncpa [#allocation24], 1
    %3103 = vsyncpa [#allocation4], 1
    %s3104 = scalar_lea.sflag [#allocation4], 1
    %3105 = vsyncpa %s3104, 1

</llo_original>
